<compile_context>
chip_gen: v6e
topology: v6e:2x2x1
jax: 0.10.0
libtpu: 0.0.40
codegen_flags: <defaults>
</compile_context>

<pallas_src>
import functools

import jax
import jax.numpy as jnp
from jax.experimental import pallas as pl
from jax.experimental.pallas import tpu as pltpu


# ---------------------------------------------------------------------------
# Fused Pallas kernel: whole LeNet forward for one batch element
# ---------------------------------------------------------------------------
def _lenet_fused_kernel(x_ref,
                        w1_ref, b1_ref, a1m_ref, p1m_ref,
                        w2_ref, b2_ref, a2m_ref, p2m_ref,
                        w3_ref, b3_ref,
                        fc1w_ref, fc1b_ref, fc2w_ref, fc2b_ref,
                        o_ref):
    f32 = jnp.float32

    def conv_tanh(x2d, wtap_ref, b_ref):
        # x2d: (H, W*C) activation; wtap_ref: (KH, W*C, OW*OC) banded weights.
        # valid 5x5 conv == sum over KH row-taps of (row-slice @ banded weight)
        kh = wtap_ref.shape[0]
        oh = x2d.shape[0] - kh + 1
        n = wtap_ref.shape[2]
        acc = jnp.zeros((oh, n), f32)
        for di in range(kh):  # static unroll: 5 MXU matmuls per conv
            acc = acc + jnp.dot(x2d[di:di + oh, :], wtap_ref[di],
                                preferred_element_type=f32)
        return jnp.tanh(acc + b_ref[...])

    def pool_tanh(x2d, a_ref, p_ref):
        # tanh(AvgPool2x2): row-pool matrix @ X @ col-pool matrix (0.25 folded in)
        y = jnp.dot(a_ref[...], x2d, preferred_element_type=f32)
        y = jnp.dot(y, p_ref[...], preferred_element_type=f32)
        return jnp.tanh(y)

    x = x_ref[0].astype(f32)                     # (32, 32)   [C_in = 1]

    a1 = conv_tanh(x, w1_ref, b1_ref)            # (28, 28*6)
    p1 = pool_tanh(a1, a1m_ref, p1m_ref)         # (14, 14*6)
    a2 = conv_tanh(p1, w2_ref, b2_ref)           # (10, 10*16)
    p2 = pool_tanh(a2, a2m_ref, p2m_ref)         # (5,  5*16)
    a3 = conv_tanh(p2, w3_ref, b3_ref)           # (1, 120)   == flatten

    h = jnp.tanh(jnp.dot(a3, fc1w_ref[...], preferred_element_type=f32)
                 + fc1b_ref[...])                # (1, 84)

    z = jnp.dot(h, fc2w_ref[...], preferred_element_type=f32) + fc2b_ref[...]
    m = jnp.max(z, axis=-1, keepdims=True)       # stable log-softmax
    s = z - m
    lse = jnp.log(jnp.sum(jnp.exp(s), axis=-1, keepdims=True))
    o_ref[0] = s - lse                           # (1, num_classes)


# ---------------------------------------------------------------------------
# Wrapper-side (traced, constant-folded under jit) weight re-packing
# ---------------------------------------------------------------------------
def _banded_conv_weight(w, w_in):
    """(OC, C, KH, KW) conv weight -> (KH, W_in*C, OW*OC) banded matrices.

    Banded[di, j*C + c, jout*OC + oc] = w[oc, c, di, j - jout] if 0<=j-jout<KW else 0
    so that  conv_out[oi, jout*OC+oc] = sum_di x2d[oi+di, :] @ Banded[di].
    """
    oc, c, kh, kw = w.shape
    ow = w_in - kw + 1
    j = jnp.arange(w_in)[:, None]                # (W_in, 1)
    jo = jnp.arange(ow)[None, :]                 # (1, OW)
    dj = j - jo                                  # (W_in, OW)
    valid = (dj >= 0) & (dj < kw)
    dj_c = jnp.clip(dj, 0, kw - 1)
    wt = jnp.transpose(w, (2, 3, 1, 0))          # (KH, KW, C, OC)
    g = wt[:, dj_c, :, :]                        # (KH, W_in, OW, C, OC)
    g = jnp.where(valid[None, :, :, None, None], g, 0.0)
    g = jnp.transpose(g, (0, 1, 3, 2, 4))        # (KH, W_in, C, OW, OC)
    return g.reshape(kh, w_in * c, ow * oc).astype(jnp.float32)


def _pool_mats(h, w, c):
    """Row/col 2x2 average-pool matrices for the (H, W*C) layout."""
    oh, ow = h // 2, w // 2
    a = 0.5 * ((jnp.arange(h)[None, :] // 2)
               == jnp.arange(oh)[:, None]).astype(jnp.float32)    # (OH, H)
    sel = 0.5 * ((jnp.arange(w)[:, None] // 2)
                 == jnp.arange(ow)[None, :]).astype(jnp.float32)  # (W, OW)
    p = jnp.kron(sel, jnp.eye(c, dtype=jnp.float32))              # (W*C, OW*C)
    return a, p


# ---------------------------------------------------------------------------
# LeNet forward (single fused pallas_call, batch-parallel grid)
# ---------------------------------------------------------------------------
def lenet_forward(params, x):
    B = x.shape[0]
    x2d = x.reshape(B, 32, 32).astype(jnp.float32)   # C_in = 1 -> (H, W*C)=(32,32)

    w1 = _banded_conv_weight(params["conv1_w"], 32)              # (5, 32, 168)
    b1 = jnp.tile(params["conv1_b"], 28)[None, :]                # (1, 168)
    a1m, p1m = _pool_mats(28, 28, 6)                             # (14,28) (168,84)
    w2 = _banded_conv_weight(params["conv2_w"], 14)              # (5, 84, 160)
    b2 = jnp.tile(params["conv2_b"], 10)[None, :]                # (1, 160)
    a2m, p2m = _pool_mats(10, 10, 16)                            # (5,10) (160,80)
    w3 = _banded_conv_weight(params["conv3_w"], 5)               # (5, 80, 120)
    b3 = params["conv3_b"][None, :].astype(jnp.float32)          # (1, 120)
    fc1w = params["fc1_w"].T.astype(jnp.float32)                 # (120, 84)
    fc1b = params["fc1_b"][None, :].astype(jnp.float32)          # (1, 84)
    fc2w = params["fc2_w"].T.astype(jnp.float32)                 # (84, NC)
    fc2b = params["fc2_b"][None, :].astype(jnp.float32)          # (1, NC)
    num_classes = fc2w.shape[1]

    def full(shape):
        return pl.BlockSpec(shape, lambda b, n=len(shape): (0,) * n)

    out3 = pl.pallas_call(
        _lenet_fused_kernel,
        out_shape=jax.ShapeDtypeStruct((B, 1, num_classes), jnp.float32),
        grid=(B,),
        in_specs=[
            pl.BlockSpec((1, 32, 32), lambda b: (b, 0, 0)),
            full(w1.shape), full(b1.shape), full(a1m.shape), full(p1m.shape),
            full(w2.shape), full(b2.shape), full(a2m.shape), full(p2m.shape),
            full(w3.shape), full(b3.shape),
            full(fc1w.shape), full(fc1b.shape), full(fc2w.shape), full(fc2b.shape),
        ],
        out_specs=pl.BlockSpec((1, 1, num_classes), lambda b: (b, 0, 0)),
        compiler_params=pltpu.CompilerParams(
            dimension_semantics=("parallel",)),
    )(x2d, w1, b1, a1m, p1m, w2, b2, a2m, p2m, w3, b3, fc1w, fc1b, fc2w, fc2b)
    return out3.reshape(B, num_classes)


# ---------------------------------------------------------------------------
# Deterministic parameter init (PyTorch-style uniform(-1/sqrt(fan_in), ...))
# ---------------------------------------------------------------------------
def init_params(key, num_classes=10):
    def uniform(key, shape, fan_in):
        bound = 1.0 / jnp.sqrt(float(fan_in))
        return jax.random.uniform(
            key, shape, minval=-bound, maxval=bound, dtype=jnp.float32)

    keys = jax.random.split(key, 10)
    return {
        "conv1_w": uniform(keys[0], (6, 1, 5, 5), 1 * 5 * 5),
        "conv1_b": uniform(keys[1], (6,), 1 * 5 * 5),
        "conv2_w": uniform(keys[2], (16, 6, 5, 5), 6 * 5 * 5),
        "conv2_b": uniform(keys[3], (16,), 6 * 5 * 5),
        "conv3_w": uniform(keys[4], (120, 16, 5, 5), 16 * 5 * 5),
        "conv3_b": uniform(keys[5], (120,), 16 * 5 * 5),
        "fc1_w": uniform(keys[6], (84, 120), 120),
        "fc1_b": uniform(keys[7], (84,), 120),
        "fc2_w": uniform(keys[8], (num_classes, 84), 84),
        "fc2_b": uniform(keys[9], (num_classes,), 84),
    }


# ---------------------------------------------------------------------------
# Pure-JAX reference (same math, no Pallas) for a correctness check
# ---------------------------------------------------------------------------
def _ref_forward(params, x):
    def conv(x, w, b):
        y = jax.lax.conv_general_dilated(
            x, w, window_strides=(1, 1), padding="VALID",
            dimension_numbers=("NCHW", "OIHW", "NCHW"))
        return jnp.tanh(y + b[None, :, None, None])

    def pool(x):
        B, C, H, W = x.shape
        y = x.reshape(B, C, H // 2, 2, W // 2, 2).mean(axis=(3, 5))
        return jnp.tanh(y)

    x = conv(x, params["conv1_w"], params["conv1_b"])
    x = pool(x)
    x = conv(x, params["conv2_w"], params["conv2_b"])
    x = pool(x)
    x = conv(x, params["conv3_w"], params["conv3_b"])
    x = x.reshape(x.shape[0], -1)
    x = jnp.tanh(x @ params["fc1_w"].T + params["fc1_b"])
    z = x @ params["fc2_w"].T + params["fc2_b"]
    return jax.nn.log_softmax(z, axis=-1)


# ---------------------------------------------------------------------------
if __name__ == "__main__":
    key = jax.random.PRNGKey(0)
    k_param, k_x = jax.random.split(key)

    params = init_params(k_param, num_classes=10)
    # LeNet requires 32x32 single-channel input so conv3's output is 1x1.
    x = jax.random.normal(k_x, (2, 1, 32, 32), dtype=jnp.float32)

    fwd = jax.jit(functools.partial(lenet_forward, params))
    out = jax.block_until_ready(fwd(x))

    ref = jax.block_until_ready(_ref_forward(params, x))
    assert out.shape == (2, 10), out.shape
    max_err = float(jnp.max(jnp.abs(out - ref)))
    assert jnp.allclose(out, ref, rtol=1e-3, atol=1e-3), max_err

    print("KERNEL_OK")
</pallas_src>

<mosaic_0001>
module attributes {stable_mosaic.version = 11 : i64} {
  func.func @_lenet_fused_kernel(%arg0: i32, %arg1: memref<1x32x32xf32, #tpu.memory_space<vmem>>, %arg2: memref<5x32x168xf32, #tpu.memory_space<vmem>>, %arg3: memref<1x168xf32, #tpu.memory_space<vmem>>, %arg4: memref<14x28xf32, #tpu.memory_space<vmem>>, %arg5: memref<168x84xf32, #tpu.memory_space<vmem>>, %arg6: memref<5x84x160xf32, #tpu.memory_space<vmem>>, %arg7: memref<1x160xf32, #tpu.memory_space<vmem>>, %arg8: memref<5x10xf32, #tpu.memory_space<vmem>>, %arg9: memref<160x80xf32, #tpu.memory_space<vmem>>, %arg10: memref<5x80x120xf32, #tpu.memory_space<vmem>>, %arg11: memref<1x120xf32, #tpu.memory_space<vmem>>, %arg12: memref<120x84xf32, #tpu.memory_space<vmem>>, %arg13: memref<1x84xf32, #tpu.memory_space<vmem>>, %arg14: memref<84x10xf32, #tpu.memory_space<vmem>>, %arg15: memref<1x10xf32, #tpu.memory_space<vmem>>, %arg16: memref<1x1x10xf32, #tpu.memory_space<vmem>>) attributes {dimension_semantics = [#tpu.dimension_semantics<parallel>], iteration_bounds = array<i64: 2>, scalar_prefetch = 0 : i64, scratch_operands = 0 : i64, tpu.core_type = #tpu.core_type<tc>, window_params = [{transform_indices = @transform_0, window_bounds = array<i64: 1, 32, 32>}, {pipeline_mode = #tpu.pipeline_mode<synchronous>, transform_indices = @transform_1, window_bounds = array<i64: 5, 32, 168>}, {pipeline_mode = #tpu.pipeline_mode<synchronous>, transform_indices = @transform_2, window_bounds = array<i64: 1, 168>}, {pipeline_mode = #tpu.pipeline_mode<synchronous>, transform_indices = @transform_3, window_bounds = array<i64: 14, 28>}, {pipeline_mode = #tpu.pipeline_mode<synchronous>, transform_indices = @transform_4, window_bounds = array<i64: 168, 84>}, {pipeline_mode = #tpu.pipeline_mode<synchronous>, transform_indices = @transform_5, window_bounds = array<i64: 5, 84, 160>}, {pipeline_mode = #tpu.pipeline_mode<synchronous>, transform_indices = @transform_6, window_bounds = array<i64: 1, 160>}, {pipeline_mode = #tpu.pipeline_mode<synchronous>, transform_indices = @transform_7, window_bounds = array<i64: 5, 10>}, {pipeline_mode = #tpu.pipeline_mode<synchronous>, transform_indices = @transform_8, window_bounds = array<i64: 160, 80>}, {pipeline_mode = #tpu.pipeline_mode<synchronous>, transform_indices = @transform_9, window_bounds = array<i64: 5, 80, 120>}, {pipeline_mode = #tpu.pipeline_mode<synchronous>, transform_indices = @transform_10, window_bounds = array<i64: 1, 120>}, {pipeline_mode = #tpu.pipeline_mode<synchronous>, transform_indices = @transform_11, window_bounds = array<i64: 120, 84>}, {pipeline_mode = #tpu.pipeline_mode<synchronous>, transform_indices = @transform_12, window_bounds = array<i64: 1, 84>}, {pipeline_mode = #tpu.pipeline_mode<synchronous>, transform_indices = @transform_13, window_bounds = array<i64: 84, 10>}, {pipeline_mode = #tpu.pipeline_mode<synchronous>, transform_indices = @transform_14, window_bounds = array<i64: 1, 10>}, {transform_indices = @transform_15, window_bounds = array<i64: 1, 1, 10>}]} {
    %c0 = arith.constant 0 : index
    %c0_0 = arith.constant 0 : index
    %c0_1 = arith.constant 0 : index
    %0 = vector.load %arg1[%c0, %c0_0, %c0_1] : memref<1x32x32xf32, #tpu.memory_space<vmem>>, vector<1x32x32xf32>
    %1 = vector.shape_cast %0 : vector<1x32x32xf32> to vector<32x32xf32>
    %cst = arith.constant 0.000000e+00 : f32
    %2 = vector.broadcast %cst : f32 to vector<28x168xf32>
    %3 = vector.extract_strided_slice %1 {offsets = [0, 0], sizes = [28, 32], strides = [1, 1]} : vector<32x32xf32> to vector<28x32xf32>
    %c0_2 = arith.constant 0 : index
    %c0_3 = arith.constant 0 : index
    %c0_4 = arith.constant 0 : index
    %4 = vector.load %arg2[%c0_2, %c0_3, %c0_4] : memref<5x32x168xf32, #tpu.memory_space<vmem>>, vector<1x32x168xf32>
    %5 = vector.shape_cast %4 : vector<1x32x168xf32> to vector<32x168xf32>
    %cst_5 = arith.constant dense<0.000000e+00> : vector<28x168xf32>
    %6 = tpu.matmul %3, %5, %cst_5 {dimension_numbers = #tpu.dot_dimension_numbers<[1], [0], [0], [1], [0, 0, 1, 1], [], []>} : vector<28x32xf32>, vector<32x168xf32>, vector<28x168xf32> -> vector<28x168xf32>
    %7 = arith.addf %2, %6 : vector<28x168xf32>
    %8 = vector.extract_strided_slice %1 {offsets = [1, 0], sizes = [28, 32], strides = [1, 1]} : vector<32x32xf32> to vector<28x32xf32>
    %c1 = arith.constant 1 : index
    %c0_6 = arith.constant 0 : index
    %c0_7 = arith.constant 0 : index
    %9 = vector.load %arg2[%c1, %c0_6, %c0_7] : memref<5x32x168xf32, #tpu.memory_space<vmem>>, vector<1x32x168xf32>
    %10 = vector.shape_cast %9 : vector<1x32x168xf32> to vector<32x168xf32>
    %cst_8 = arith.constant dense<0.000000e+00> : vector<28x168xf32>
    %11 = tpu.matmul %8, %10, %cst_8 {dimension_numbers = #tpu.dot_dimension_numbers<[1], [0], [0], [1], [0, 0, 1, 1], [], []>} : vector<28x32xf32>, vector<32x168xf32>, vector<28x168xf32> -> vector<28x168xf32>
    %12 = arith.addf %7, %11 : vector<28x168xf32>
    %13 = vector.extract_strided_slice %1 {offsets = [2, 0], sizes = [28, 32], strides = [1, 1]} : vector<32x32xf32> to vector<28x32xf32>
    %c2 = arith.constant 2 : index
    %c0_9 = arith.constant 0 : index
    %c0_10 = arith.constant 0 : index
    %14 = vector.load %arg2[%c2, %c0_9, %c0_10] : memref<5x32x168xf32, #tpu.memory_space<vmem>>, vector<1x32x168xf32>
    %15 = vector.shape_cast %14 : vector<1x32x168xf32> to vector<32x168xf32>
    %cst_11 = arith.constant dense<0.000000e+00> : vector<28x168xf32>
    %16 = tpu.matmul %13, %15, %cst_11 {dimension_numbers = #tpu.dot_dimension_numbers<[1], [0], [0], [1], [0, 0, 1, 1], [], []>} : vector<28x32xf32>, vector<32x168xf32>, vector<28x168xf32> -> vector<28x168xf32>
    %17 = arith.addf %12, %16 : vector<28x168xf32>
    %18 = vector.extract_strided_slice %1 {offsets = [3, 0], sizes = [28, 32], strides = [1, 1]} : vector<32x32xf32> to vector<28x32xf32>
    %c3 = arith.constant 3 : index
    %c0_12 = arith.constant 0 : index
    %c0_13 = arith.constant 0 : index
    %19 = vector.load %arg2[%c3, %c0_12, %c0_13] : memref<5x32x168xf32, #tpu.memory_space<vmem>>, vector<1x32x168xf32>
    %20 = vector.shape_cast %19 : vector<1x32x168xf32> to vector<32x168xf32>
    %cst_14 = arith.constant dense<0.000000e+00> : vector<28x168xf32>
    %21 = tpu.matmul %18, %20, %cst_14 {dimension_numbers = #tpu.dot_dimension_numbers<[1], [0], [0], [1], [0, 0, 1, 1], [], []>} : vector<28x32xf32>, vector<32x168xf32>, vector<28x168xf32> -> vector<28x168xf32>
    %22 = arith.addf %17, %21 : vector<28x168xf32>
    %23 = vector.extract_strided_slice %1 {offsets = [4, 0], sizes = [28, 32], strides = [1, 1]} : vector<32x32xf32> to vector<28x32xf32>
    %c4 = arith.constant 4 : index
    %c0_15 = arith.constant 0 : index
    %c0_16 = arith.constant 0 : index
    %24 = vector.load %arg2[%c4, %c0_15, %c0_16] : memref<5x32x168xf32, #tpu.memory_space<vmem>>, vector<1x32x168xf32>
    %25 = vector.shape_cast %24 : vector<1x32x168xf32> to vector<32x168xf32>
    %cst_17 = arith.constant dense<0.000000e+00> : vector<28x168xf32>
    %26 = tpu.matmul %23, %25, %cst_17 {dimension_numbers = #tpu.dot_dimension_numbers<[1], [0], [0], [1], [0, 0, 1, 1], [], []>} : vector<28x32xf32>, vector<32x168xf32>, vector<28x168xf32> -> vector<28x168xf32>
    %27 = arith.addf %22, %26 : vector<28x168xf32>
    %c0_18 = arith.constant 0 : index
    %c0_19 = arith.constant 0 : index
    %28 = vector.load %arg3[%c0_18, %c0_19] : memref<1x168xf32, #tpu.memory_space<vmem>>, vector<1x168xf32>
    %29 = vector.broadcast %28 : vector<1x168xf32> to vector<28x168xf32>
    %30 = arith.addf %27, %29 : vector<28x168xf32>
    %31 = math.tanh %30 : vector<28x168xf32>
    %c0_20 = arith.constant 0 : index
    %c0_21 = arith.constant 0 : index
    %32 = vector.load %arg4[%c0_20, %c0_21] : memref<14x28xf32, #tpu.memory_space<vmem>>, vector<14x28xf32>
    %cst_22 = arith.constant dense<0.000000e+00> : vector<14x168xf32>
    %33 = tpu.matmul %32, %31, %cst_22 {dimension_numbers = #tpu.dot_dimension_numbers<[1], [0], [0], [1], [0, 0, 1, 1], [], []>} : vector<14x28xf32>, vector<28x168xf32>, vector<14x168xf32> -> vector<14x168xf32>
    %c0_23 = arith.constant 0 : index
    %c0_24 = arith.constant 0 : index
    %34 = vector.load %arg5[%c0_23, %c0_24] : memref<168x84xf32, #tpu.memory_space<vmem>>, vector<168x84xf32>
    %cst_25 = arith.constant dense<0.000000e+00> : vector<14x84xf32>
    %35 = tpu.matmul %33, %34, %cst_25 {dimension_numbers = #tpu.dot_dimension_numbers<[1], [0], [0], [1], [0, 0, 1, 1], [], []>} : vector<14x168xf32>, vector<168x84xf32>, vector<14x84xf32> -> vector<14x84xf32>
    %36 = math.tanh %35 : vector<14x84xf32>
    %cst_26 = arith.constant 0.000000e+00 : f32
    %37 = vector.broadcast %cst_26 : f32 to vector<10x160xf32>
    %38 = vector.extract_strided_slice %36 {offsets = [0, 0], sizes = [10, 84], strides = [1, 1]} : vector<14x84xf32> to vector<10x84xf32>
    %c0_27 = arith.constant 0 : index
    %c0_28 = arith.constant 0 : index
    %c0_29 = arith.constant 0 : index
    %39 = vector.load %arg6[%c0_27, %c0_28, %c0_29] : memref<5x84x160xf32, #tpu.memory_space<vmem>>, vector<1x84x160xf32>
    %40 = vector.shape_cast %39 : vector<1x84x160xf32> to vector<84x160xf32>
    %cst_30 = arith.constant dense<0.000000e+00> : vector<10x160xf32>
    %41 = tpu.matmul %38, %40, %cst_30 {dimension_numbers = #tpu.dot_dimension_numbers<[1], [0], [0], [1], [0, 0, 1, 1], [], []>} : vector<10x84xf32>, vector<84x160xf32>, vector<10x160xf32> -> vector<10x160xf32>
    %42 = arith.addf %37, %41 : vector<10x160xf32>
    %43 = vector.extract_strided_slice %36 {offsets = [1, 0], sizes = [10, 84], strides = [1, 1]} : vector<14x84xf32> to vector<10x84xf32>
    %c1_31 = arith.constant 1 : index
    %c0_32 = arith.constant 0 : index
    %c0_33 = arith.constant 0 : index
    %44 = vector.load %arg6[%c1_31, %c0_32, %c0_33] : memref<5x84x160xf32, #tpu.memory_space<vmem>>, vector<1x84x160xf32>
    %45 = vector.shape_cast %44 : vector<1x84x160xf32> to vector<84x160xf32>
    %cst_34 = arith.constant dense<0.000000e+00> : vector<10x160xf32>
    %46 = tpu.matmul %43, %45, %cst_34 {dimension_numbers = #tpu.dot_dimension_numbers<[1], [0], [0], [1], [0, 0, 1, 1], [], []>} : vector<10x84xf32>, vector<84x160xf32>, vector<10x160xf32> -> vector<10x160xf32>
    %47 = arith.addf %42, %46 : vector<10x160xf32>
    %48 = vector.extract_strided_slice %36 {offsets = [2, 0], sizes = [10, 84], strides = [1, 1]} : vector<14x84xf32> to vector<10x84xf32>
    %c2_35 = arith.constant 2 : index
    %c0_36 = arith.constant 0 : index
    %c0_37 = arith.constant 0 : index
    %49 = vector.load %arg6[%c2_35, %c0_36, %c0_37] : memref<5x84x160xf32, #tpu.memory_space<vmem>>, vector<1x84x160xf32>
    %50 = vector.shape_cast %49 : vector<1x84x160xf32> to vector<84x160xf32>
    %cst_38 = arith.constant dense<0.000000e+00> : vector<10x160xf32>
    %51 = tpu.matmul %48, %50, %cst_38 {dimension_numbers = #tpu.dot_dimension_numbers<[1], [0], [0], [1], [0, 0, 1, 1], [], []>} : vector<10x84xf32>, vector<84x160xf32>, vector<10x160xf32> -> vector<10x160xf32>
    %52 = arith.addf %47, %51 : vector<10x160xf32>
    %53 = vector.extract_strided_slice %36 {offsets = [3, 0], sizes = [10, 84], strides = [1, 1]} : vector<14x84xf32> to vector<10x84xf32>
    %c3_39 = arith.constant 3 : index
    %c0_40 = arith.constant 0 : index
    %c0_41 = arith.constant 0 : index
    %54 = vector.load %arg6[%c3_39, %c0_40, %c0_41] : memref<5x84x160xf32, #tpu.memory_space<vmem>>, vector<1x84x160xf32>
    %55 = vector.shape_cast %54 : vector<1x84x160xf32> to vector<84x160xf32>
    %cst_42 = arith.constant dense<0.000000e+00> : vector<10x160xf32>
    %56 = tpu.matmul %53, %55, %cst_42 {dimension_numbers = #tpu.dot_dimension_numbers<[1], [0], [0], [1], [0, 0, 1, 1], [], []>} : vector<10x84xf32>, vector<84x160xf32>, vector<10x160xf32> -> vector<10x160xf32>
    %57 = arith.addf %52, %56 : vector<10x160xf32>
    %58 = vector.extract_strided_slice %36 {offsets = [4, 0], sizes = [10, 84], strides = [1, 1]} : vector<14x84xf32> to vector<10x84xf32>
    %c4_43 = arith.constant 4 : index
    %c0_44 = arith.constant 0 : index
    %c0_45 = arith.constant 0 : index
    %59 = vector.load %arg6[%c4_43, %c0_44, %c0_45] : memref<5x84x160xf32, #tpu.memory_space<vmem>>, vector<1x84x160xf32>
    %60 = vector.shape_cast %59 : vector<1x84x160xf32> to vector<84x160xf32>
    %cst_46 = arith.constant dense<0.000000e+00> : vector<10x160xf32>
    %61 = tpu.matmul %58, %60, %cst_46 {dimension_numbers = #tpu.dot_dimension_numbers<[1], [0], [0], [1], [0, 0, 1, 1], [], []>} : vector<10x84xf32>, vector<84x160xf32>, vector<10x160xf32> -> vector<10x160xf32>
    %62 = arith.addf %57, %61 : vector<10x160xf32>
    %c0_47 = arith.constant 0 : index
    %c0_48 = arith.constant 0 : index
    %63 = vector.load %arg7[%c0_47, %c0_48] : memref<1x160xf32, #tpu.memory_space<vmem>>, vector<1x160xf32>
    %64 = vector.broadcast %63 : vector<1x160xf32> to vector<10x160xf32>
    %65 = arith.addf %62, %64 : vector<10x160xf32>
    %66 = math.tanh %65 : vector<10x160xf32>
    %c0_49 = arith.constant 0 : index
    %c0_50 = arith.constant 0 : index
    %67 = vector.load %arg8[%c0_49, %c0_50] : memref<5x10xf32, #tpu.memory_space<vmem>>, vector<5x10xf32>
    %cst_51 = arith.constant dense<0.000000e+00> : vector<5x160xf32>
    %68 = tpu.matmul %67, %66, %cst_51 {dimension_numbers = #tpu.dot_dimension_numbers<[1], [0], [0], [1], [0, 0, 1, 1], [], []>} : vector<5x10xf32>, vector<10x160xf32>, vector<5x160xf32> -> vector<5x160xf32>
    %c0_52 = arith.constant 0 : index
    %c0_53 = arith.constant 0 : index
    %69 = vector.load %arg9[%c0_52, %c0_53] : memref<160x80xf32, #tpu.memory_space<vmem>>, vector<160x80xf32>
    %cst_54 = arith.constant dense<0.000000e+00> : vector<5x80xf32>
    %70 = tpu.matmul %68, %69, %cst_54 {dimension_numbers = #tpu.dot_dimension_numbers<[1], [0], [0], [1], [0, 0, 1, 1], [], []>} : vector<5x160xf32>, vector<160x80xf32>, vector<5x80xf32> -> vector<5x80xf32>
    %71 = math.tanh %70 : vector<5x80xf32>
    %cst_55 = arith.constant 0.000000e+00 : f32
    %72 = vector.broadcast %cst_55 : f32 to vector<1x120xf32>
    %73 = vector.extract_strided_slice %71 {offsets = [0, 0], sizes = [1, 80], strides = [1, 1]} : vector<5x80xf32> to vector<1x80xf32>
    %c0_56 = arith.constant 0 : index
    %c0_57 = arith.constant 0 : index
    %c0_58 = arith.constant 0 : index
    %74 = vector.load %arg10[%c0_56, %c0_57, %c0_58] : memref<5x80x120xf32, #tpu.memory_space<vmem>>, vector<1x80x120xf32>
    %75 = vector.shape_cast %74 : vector<1x80x120xf32> to vector<80x120xf32>
    %cst_59 = arith.constant dense<0.000000e+00> : vector<1x120xf32>
    %76 = tpu.matmul %73, %75, %cst_59 {dimension_numbers = #tpu.dot_dimension_numbers<[1], [0], [0], [1], [0, 0, 1, 1], [], []>} : vector<1x80xf32>, vector<80x120xf32>, vector<1x120xf32> -> vector<1x120xf32>
    %77 = arith.addf %72, %76 : vector<1x120xf32>
    %78 = vector.extract_strided_slice %71 {offsets = [1, 0], sizes = [1, 80], strides = [1, 1]} : vector<5x80xf32> to vector<1x80xf32>
    %c1_60 = arith.constant 1 : index
    %c0_61 = arith.constant 0 : index
    %c0_62 = arith.constant 0 : index
    %79 = vector.load %arg10[%c1_60, %c0_61, %c0_62] : memref<5x80x120xf32, #tpu.memory_space<vmem>>, vector<1x80x120xf32>
    %80 = vector.shape_cast %79 : vector<1x80x120xf32> to vector<80x120xf32>
    %cst_63 = arith.constant dense<0.000000e+00> : vector<1x120xf32>
    %81 = tpu.matmul %78, %80, %cst_63 {dimension_numbers = #tpu.dot_dimension_numbers<[1], [0], [0], [1], [0, 0, 1, 1], [], []>} : vector<1x80xf32>, vector<80x120xf32>, vector<1x120xf32> -> vector<1x120xf32>
    %82 = arith.addf %77, %81 : vector<1x120xf32>
    %83 = vector.extract_strided_slice %71 {offsets = [2, 0], sizes = [1, 80], strides = [1, 1]} : vector<5x80xf32> to vector<1x80xf32>
    %c2_64 = arith.constant 2 : index
    %c0_65 = arith.constant 0 : index
    %c0_66 = arith.constant 0 : index
    %84 = vector.load %arg10[%c2_64, %c0_65, %c0_66] : memref<5x80x120xf32, #tpu.memory_space<vmem>>, vector<1x80x120xf32>
    %85 = vector.shape_cast %84 : vector<1x80x120xf32> to vector<80x120xf32>
    %cst_67 = arith.constant dense<0.000000e+00> : vector<1x120xf32>
    %86 = tpu.matmul %83, %85, %cst_67 {dimension_numbers = #tpu.dot_dimension_numbers<[1], [0], [0], [1], [0, 0, 1, 1], [], []>} : vector<1x80xf32>, vector<80x120xf32>, vector<1x120xf32> -> vector<1x120xf32>
    %87 = arith.addf %82, %86 : vector<1x120xf32>
    %88 = vector.extract_strided_slice %71 {offsets = [3, 0], sizes = [1, 80], strides = [1, 1]} : vector<5x80xf32> to vector<1x80xf32>
    %c3_68 = arith.constant 3 : index
    %c0_69 = arith.constant 0 : index
    %c0_70 = arith.constant 0 : index
    %89 = vector.load %arg10[%c3_68, %c0_69, %c0_70] : memref<5x80x120xf32, #tpu.memory_space<vmem>>, vector<1x80x120xf32>
    %90 = vector.shape_cast %89 : vector<1x80x120xf32> to vector<80x120xf32>
    %cst_71 = arith.constant dense<0.000000e+00> : vector<1x120xf32>
    %91 = tpu.matmul %88, %90, %cst_71 {dimension_numbers = #tpu.dot_dimension_numbers<[1], [0], [0], [1], [0, 0, 1, 1], [], []>} : vector<1x80xf32>, vector<80x120xf32>, vector<1x120xf32> -> vector<1x120xf32>
    %92 = arith.addf %87, %91 : vector<1x120xf32>
    %93 = vector.extract_strided_slice %71 {offsets = [4, 0], sizes = [1, 80], strides = [1, 1]} : vector<5x80xf32> to vector<1x80xf32>
    %c4_72 = arith.constant 4 : index
    %c0_73 = arith.constant 0 : index
    %c0_74 = arith.constant 0 : index
    %94 = vector.load %arg10[%c4_72, %c0_73, %c0_74] : memref<5x80x120xf32, #tpu.memory_space<vmem>>, vector<1x80x120xf32>
    %95 = vector.shape_cast %94 : vector<1x80x120xf32> to vector<80x120xf32>
    %cst_75 = arith.constant dense<0.000000e+00> : vector<1x120xf32>
    %96 = tpu.matmul %93, %95, %cst_75 {dimension_numbers = #tpu.dot_dimension_numbers<[1], [0], [0], [1], [0, 0, 1, 1], [], []>} : vector<1x80xf32>, vector<80x120xf32>, vector<1x120xf32> -> vector<1x120xf32>
    %97 = arith.addf %92, %96 : vector<1x120xf32>
    %c0_76 = arith.constant 0 : index
    %c0_77 = arith.constant 0 : index
    %98 = vector.load %arg11[%c0_76, %c0_77] : memref<1x120xf32, #tpu.memory_space<vmem>>, vector<1x120xf32>
    %99 = arith.addf %97, %98 : vector<1x120xf32>
    %100 = math.tanh %99 : vector<1x120xf32>
    %c0_78 = arith.constant 0 : index
    %c0_79 = arith.constant 0 : index
    %101 = vector.load %arg12[%c0_78, %c0_79] : memref<120x84xf32, #tpu.memory_space<vmem>>, vector<120x84xf32>
    %cst_80 = arith.constant dense<0.000000e+00> : vector<1x84xf32>
    %102 = tpu.matmul %100, %101, %cst_80 {dimension_numbers = #tpu.dot_dimension_numbers<[1], [0], [0], [1], [0, 0, 1, 1], [], []>} : vector<1x120xf32>, vector<120x84xf32>, vector<1x84xf32> -> vector<1x84xf32>
    %c0_81 = arith.constant 0 : index
    %c0_82 = arith.constant 0 : index
    %103 = vector.load %arg13[%c0_81, %c0_82] : memref<1x84xf32, #tpu.memory_space<vmem>>, vector<1x84xf32>
    %104 = arith.addf %102, %103 : vector<1x84xf32>
    %105 = math.tanh %104 : vector<1x84xf32>
    %c0_83 = arith.constant 0 : index
    %c0_84 = arith.constant 0 : index
    %106 = vector.load %arg14[%c0_83, %c0_84] : memref<84x10xf32, #tpu.memory_space<vmem>>, vector<84x10xf32>
    %cst_85 = arith.constant dense<0.000000e+00> : vector<1x10xf32>
    %107 = tpu.matmul %105, %106, %cst_85 {dimension_numbers = #tpu.dot_dimension_numbers<[1], [0], [0], [1], [0, 0, 1, 1], [], []>} : vector<1x84xf32>, vector<84x10xf32>, vector<1x10xf32> -> vector<1x10xf32>
    %c0_86 = arith.constant 0 : index
    %c0_87 = arith.constant 0 : index
    %108 = vector.load %arg15[%c0_86, %c0_87] : memref<1x10xf32, #tpu.memory_space<vmem>>, vector<1x10xf32>
    %109 = arith.addf %107, %108 : vector<1x10xf32>
    %cst_88 = arith.constant dense<0xFF800000> : vector<1xf32>
    %110 = vector.multi_reduction <maximumf>, %109, %cst_88 [1] : vector<1x10xf32> to vector<1xf32>
    %111 = vector.shape_cast %110 : vector<1xf32> to vector<1x1xf32>
    %112 = vector.broadcast %111 : vector<1x1xf32> to vector<1x10xf32>
    %113 = arith.subf %109, %112 : vector<1x10xf32>
    %114 = math.exp %113 : vector<1x10xf32>
    %cst_89 = arith.constant dense<0.000000e+00> : vector<1xf32>
    %115 = vector.multi_reduction <add>, %114, %cst_89 [1] : vector<1x10xf32> to vector<1xf32>
    %116 = vector.shape_cast %115 : vector<1xf32> to vector<1x1xf32>
    %117 = math.log %116 : vector<1x1xf32>
    %118 = vector.broadcast %117 : vector<1x1xf32> to vector<1x10xf32>
    %119 = arith.subf %113, %118 : vector<1x10xf32>
    %c0_90 = arith.constant 0 : index
    %c0_91 = arith.constant 0 : index
    %c0_92 = arith.constant 0 : index
    %120 = vector.load %arg16[%c0_90, %c0_91, %c0_92] : memref<1x1x10xf32, #tpu.memory_space<vmem>>, vector<1x1x10xf32>
    %121 = vector.shape_cast %120 : vector<1x1x10xf32> to vector<1x10xf32>
    %122 = vector.shape_cast %119 : vector<1x10xf32> to vector<1x1x10xf32>
    tpu.vector_store %arg16[%c0_90, %c0_91, %c0_92], %122 {strides = array<i32>} : memref<1x1x10xf32, #tpu.memory_space<vmem>>, vector<1x1x10xf32>,
    return
  }
  func.func @transform_0(%arg0: i32) -> (i32, i32, i32) {
    %c0_i32 = arith.constant 0 : i32
    %c0_i32_0 = arith.constant 0 : i32
    %c0_i32_1 = arith.constant 0 : i32
    return %arg0, %c0_i32, %c0_i32_0 : i32, i32, i32
  }
  func.func @transform_1(%arg0: i32) -> (i32, i32, i32) {
    %c0_i32 = arith.constant 0 : i32
    %c0_i32_0 = arith.constant 0 : i32
    %c0_i32_1 = arith.constant 0 : i32
    %c0_i32_2 = arith.constant 0 : i32
    return %c0_i32, %c0_i32_0, %c0_i32_1 : i32, i32, i32
  }
  func.func @transform_2(%arg0: i32) -> (i32, i32) {
    %c0_i32 = arith.constant 0 : i32
    %c0_i32_0 = arith.constant 0 : i32
    %c0_i32_1 = arith.constant 0 : i32
    return %c0_i32, %c0_i32_0 : i32, i32
  }
  func.func @transform_3(%arg0: i32) -> (i32, i32) {
    %c0_i32 = arith.constant 0 : i32
    %c0_i32_0 = arith.constant 0 : i32
    %c0_i32_1 = arith.constant 0 : i32
    return %c0_i32, %c0_i32_0 : i32, i32
  }
  func.func @transform_4(%arg0: i32) -> (i32, i32) {
    %c0_i32 = arith.constant 0 : i32
    %c0_i32_0 = arith.constant 0 : i32
    %c0_i32_1 = arith.constant 0 : i32
    return %c0_i32, %c0_i32_0 : i32, i32
  }
  func.func @transform_5(%arg0: i32) -> (i32, i32, i32) {
    %c0_i32 = arith.constant 0 : i32
    %c0_i32_0 = arith.constant 0 : i32
    %c0_i32_1 = arith.constant 0 : i32
    %c0_i32_2 = arith.constant 0 : i32
    return %c0_i32, %c0_i32_0, %c0_i32_1 : i32, i32, i32
  }
  func.func @transform_6(%arg0: i32) -> (i32, i32) {
    %c0_i32 = arith.constant 0 : i32
    %c0_i32_0 = arith.constant 0 : i32
    %c0_i32_1 = arith.constant 0 : i32
    return %c0_i32, %c0_i32_0 : i32, i32
  }
  func.func @transform_7(%arg0: i32) -> (i32, i32) {
    %c0_i32 = arith.constant 0 : i32
    %c0_i32_0 = arith.constant 0 : i32
    %c0_i32_1 = arith.constant 0 : i32
    return %c0_i32, %c0_i32_0 : i32, i32
  }
  func.func @transform_8(%arg0: i32) -> (i32, i32) {
    %c0_i32 = arith.constant 0 : i32
    %c0_i32_0 = arith.constant 0 : i32
    %c0_i32_1 = arith.constant 0 : i32
    return %c0_i32, %c0_i32_0 : i32, i32
  }
  func.func @transform_9(%arg0: i32) -> (i32, i32, i32) {
    %c0_i32 = arith.constant 0 : i32
    %c0_i32_0 = arith.constant 0 : i32
    %c0_i32_1 = arith.constant 0 : i32
    %c0_i32_2 = arith.constant 0 : i32
    return %c0_i32, %c0_i32_0, %c0_i32_1 : i32, i32, i32
  }
  func.func @transform_10(%arg0: i32) -> (i32, i32) {
    %c0_i32 = arith.constant 0 : i32
    %c0_i32_0 = arith.constant 0 : i32
    %c0_i32_1 = arith.constant 0 : i32
    return %c0_i32, %c0_i32_0 : i32, i32
  }
  func.func @transform_11(%arg0: i32) -> (i32, i32) {
    %c0_i32 = arith.constant 0 : i32
    %c0_i32_0 = arith.constant 0 : i32
    %c0_i32_1 = arith.constant 0 : i32
    return %c0_i32, %c0_i32_0 : i32, i32
  }
  func.func @transform_12(%arg0: i32) -> (i32, i32) {
    %c0_i32 = arith.constant 0 : i32
    %c0_i32_0 = arith.constant 0 : i32
    %c0_i32_1 = arith.constant 0 : i32
    return %c0_i32, %c0_i32_0 : i32, i32
  }
  func.func @transform_13(%arg0: i32) -> (i32, i32) {
    %c0_i32 = arith.constant 0 : i32
    %c0_i32_0 = arith.constant 0 : i32
    %c0_i32_1 = arith.constant 0 : i32
    return %c0_i32, %c0_i32_0 : i32, i32
  }
  func.func @transform_14(%arg0: i32) -> (i32, i32) {
    %c0_i32 = arith.constant 0 : i32
    %c0_i32_0 = arith.constant 0 : i32
    %c0_i32_1 = arith.constant 0 : i32
    return %c0_i32, %c0_i32_0 : i32, i32
  }
  func.func @transform_15(%arg0: i32) -> (i32, i32, i32) {
    %c0_i32 = arith.constant 0 : i32
    %c0_i32_0 = arith.constant 0 : i32
    %c0_i32_1 = arith.constant 0 : i32
    return %arg0, %c0_i32, %c0_i32_0 : i32, i32, i32
  }
}

</mosaic_0001>

<llo_original>
// kernel: tile.10
$region0: #{tile.10}
  #allocation0 [shape = 's32[1]{0}', space=sflag, size = 0x4, scoped, tag = 'scoped memory for tile.10']
  %s0 = inlined_call_operand.vmem [shape: f32[6], index: 0, kind: input, shape index: {}]
  %s1 = inlined_call_operand.vmem [shape: f32[28,6], index: 1, kind: output, shape index: {}]
  // Predicated region
  $region2: #{tile.10} parent=0 // pred_check
    _
  $region3: #{tile.10} parent=0 // pred_check_branch
    %3 = sbr.rel (0) target = $region5
  $region4: #{tile.10} parent=0 // pred_region
    _
  $region5: #{tile.10} parent=0 // pred_fallthru
    _
  %v4 = vld [vmem:[%s0] ss:$0 sm:$0xff]
  %5 = vst [vmem:[%s1] sm:$0xff] %v4
  %s6 = scalar_lea.vmem %s1, 8
  %7 = vst [vmem:[%s6] sm:$0xff] %v4
  %s8 = scalar_lea.vmem %s1, 16
  %9 = vst [vmem:[%s8] sm:$0xff] %v4
  %s10 = scalar_lea.vmem %s1, 24
  %11 = vst [vmem:[%s10] sm:$0xff] %v4

// kernel: tile.11
$region0: #{tile.11}
  %s0 = inlined_call_operand.vmem [shape: f32[28,6], index: 0, kind: input, shape index: {}]
  %s1 = inlined_call_operand.vmem [shape: f32[1,168], index: 1, kind: output, shape index: {}]
  $region1: #{tile.11} parent=0
    #allocation0 [shape = 'u8[8192]{0}', space=vmem, size = 0x2000, scoped, tag = 'scoped mem for output reshape']
    %v2 = vld [vmem:[%s0] sm:$0x1]
    %vm3 = vcmask 48128
    %4 = vst.msk [vmem:[#allocation0] sm:$0x1] %vm3, %v2
    %s5 = scalar_lea.vmem %s0, 21
    %v6 = vld [vmem:[%s5] sm:$0x1]
    %s7 = scalar_lea.vmem %s0, 21
    %v8 = vld [vmem:[%s7] sm:$0x1]
    %vm9 = vcmask 15360
    %v10 = vsel %vm9, %v8, %v6
    %11 = vrot.lane.b32.xlu0 %v10, 126
    %v12 = vpop.permute.xlu0 %11
    %vm13 = vcmask 31744
    %s14 = scalar_lea.vmem [#allocation0], 8
    %15 = vst.msk [vmem:[%s14] sm:$0x1] %vm13, %v12
    %vm16 = vcmask 1048560
    %17 = vst.msk [vmem:[#allocation0] sm:$0x1] %vm16, %v12
    %s18 = scalar_lea.vmem %s0, 20
    %v19 = vld [vmem:[%s18] sm:$0x1]
    %20 = vrot.lane.b32.xlu0 %v19, 120
    %v21 = vpop.permute.xlu0 %20
    %vm22 = vcmask 1032128
    %23 = vst.msk [vmem:[#allocation0] sm:$0x1] %vm22, %v21
    %s24 = scalar_lea.vmem %s0, 19
    %v25 = vld [vmem:[%s24] sm:$0x1]
    %26 = vrot.lane.b32.xlu0 %v25, 114
    %v27 = vpop.permute.xlu0 %26
    %vm28 = vcmask 982928
    %29 = vst.msk [vmem:[#allocation0] sm:$0x1] %vm28, %v27
    %s30 = scalar_lea.vmem %s0, 18
    %v31 = vld [vmem:[%s30] sm:$0x1]
    %32 = vrot.lane.b32.xlu0 %v31, 108
    %v33 = vpop.permute.xlu0 %32
    %vm34 = vcmask 933728
    %35 = vst.msk [vmem:[#allocation0] sm:$0x1] %vm34, %v33
    %s36 = scalar_lea.vmem %s0, 17
    %v37 = vld [vmem:[%s36] sm:$0x1]
    %38 = vrot.lane.b32.xlu0 %v37, 102
    %v39 = vpop.permute.xlu0 %38
    %vm40 = vcmask 884528
    %41 = vst.msk [vmem:[#allocation0] sm:$0x1] %vm40, %v39
    %s42 = scalar_lea.vmem %s0, 16
    %v43 = vld [vmem:[%s42] sm:$0x1]
    %44 = vrot.lane.b32.xlu0 %v43, 96
    %v45 = vpop.permute.xlu0 %44
    %vm46 = vcmask 835328
    %47 = vst.msk [vmem:[#allocation0] sm:$0x1] %vm46, %v45
    %s48 = scalar_lea.vmem %s0, 15
    %v49 = vld [vmem:[%s48] sm:$0x1]
    %50 = vrot.lane.b32.xlu0 %v49, 90
    %v51 = vpop.permute.xlu0 %50
    %vm52 = vcmask 786128
    %53 = vst.msk [vmem:[#allocation0] sm:$0x1] %vm52, %v51
    %s54 = scalar_lea.vmem %s0, 14
    %v55 = vld [vmem:[%s54] sm:$0x1]
    %56 = vrot.lane.b32.xlu0 %v55, 84
    %v57 = vpop.permute.xlu0 %56
    %vm58 = vcmask 736928
    %59 = vst.msk [vmem:[#allocation0] sm:$0x1] %vm58, %v57
    %s60 = scalar_lea.vmem %s0, 13
    %v61 = vld [vmem:[%s60] sm:$0x1]
    %62 = vrot.lane.b32.xlu0 %v61, 78
    %v63 = vpop.permute.xlu0 %62
    %vm64 = vcmask 687728
    %65 = vst.msk [vmem:[#allocation0] sm:$0x1] %vm64, %v63
    %s66 = scalar_lea.vmem %s0, 12
    %v67 = vld [vmem:[%s66] sm:$0x1]
    %68 = vrot.lane.b32.xlu0 %v67, 72
    %v69 = vpop.permute.xlu0 %68
    %vm70 = vcmask 638528
    %71 = vst.msk [vmem:[#allocation0] sm:$0x1] %vm70, %v69
    %s72 = scalar_lea.vmem %s0, 11
    %v73 = vld [vmem:[%s72] sm:$0x1]
    %74 = vrot.lane.b32.xlu0 %v73, 66
    %v75 = vpop.permute.xlu0 %74
    %vm76 = vcmask 589328
    %77 = vst.msk [vmem:[#allocation0] sm:$0x1] %vm76, %v75
    %s78 = scalar_lea.vmem %s0, 10
    %v79 = vld [vmem:[%s78] sm:$0x1]
    %80 = vrot.lane.b32.xlu0 %v79, 60
    %v81 = vpop.permute.xlu0 %80
    %vm82 = vcmask 540128
    %83 = vst.msk [vmem:[#allocation0] sm:$0x1] %vm82, %v81
    %s84 = scalar_lea.vmem %s0, 9
    %v85 = vld [vmem:[%s84] sm:$0x1]
    %86 = vrot.lane.b32.xlu0 %v85, 54
    %v87 = vpop.permute.xlu0 %86
    %vm88 = vcmask 490928
    %89 = vst.msk [vmem:[#allocation0] sm:$0x1] %vm88, %v87
    %s90 = scalar_lea.vmem %s0, 8
    %v91 = vld [vmem:[%s90] sm:$0x1]
    %92 = vrot.lane.b32.xlu0 %v91, 48
    %v93 = vpop.permute.xlu0 %92
    %vm94 = vcmask 441728
    %95 = vst.msk [vmem:[#allocation0] sm:$0x1] %vm94, %v93
    %s96 = scalar_lea.vmem %s0, 7
    %v97 = vld [vmem:[%s96] sm:$0x1]
    %98 = vrot.lane.b32.xlu0 %v97, 42
    %v99 = vpop.permute.xlu0 %98
    %vm100 = vcmask 392528
    %101 = vst.msk [vmem:[#allocation0] sm:$0x1] %vm100, %v99
    %s102 = scalar_lea.vmem %s0, 6
    %v103 = vld [vmem:[%s102] sm:$0x1]
    %104 = vrot.lane.b32.xlu0 %v103, 36
    %v105 = vpop.permute.xlu0 %104
    %vm106 = vcmask 343328
    %107 = vst.msk [vmem:[#allocation0] sm:$0x1] %vm106, %v105
    %s108 = scalar_lea.vmem %s0, 27
    %v109 = vld [vmem:[%s108] sm:$0x1]
    %110 = vrot.lane.b32.xlu0 %v109, 34
    %v111 = vpop.permute.xlu0 %110
    %vm112 = vcmask 326928
    %s113 = scalar_lea.vmem [#allocation0], 8
    %114 = vst.msk [vmem:[%s113] sm:$0x1] %vm112, %v111
    %s115 = scalar_lea.vmem %s0, 5
    %v116 = vld [vmem:[%s115] sm:$0x1]
    %117 = vrot.lane.b32.xlu0 %v116, 30
    %v118 = vpop.permute.xlu0 %117
    %vm119 = vcmask 294128
    %120 = vst.msk [vmem:[#allocation0] sm:$0x1] %vm119, %v118
    %s121 = scalar_lea.vmem %s0, 26
    %v122 = vld [vmem:[%s121] sm:$0x1]
    %123 = vrot.lane.b32.xlu0 %v122, 28
    %v124 = vpop.permute.xlu0 %123
    %vm125 = vcmask 277728
    %s126 = scalar_lea.vmem [#allocation0], 8
    %127 = vst.msk [vmem:[%s126] sm:$0x1] %vm125, %v124
    %s128 = scalar_lea.vmem %s0, 4
    %v129 = vld [vmem:[%s128] sm:$0x1]
    %130 = vrot.lane.b32.xlu0 %v129, 24
    %v131 = vpop.permute.xlu0 %130
    %vm132 = vcmask 244928
    %133 = vst.msk [vmem:[#allocation0] sm:$0x1] %vm132, %v131
    %s134 = scalar_lea.vmem %s0, 25
    %v135 = vld [vmem:[%s134] sm:$0x1]
    %136 = vrot.lane.b32.xlu0 %v135, 22
    %v137 = vpop.permute.xlu0 %136
    %vm138 = vcmask 228528
    %s139 = scalar_lea.vmem [#allocation0], 8
    %140 = vst.msk [vmem:[%s139] sm:$0x1] %vm138, %v137
    %s141 = scalar_lea.vmem %s0, 3
    %v142 = vld [vmem:[%s141] sm:$0x1]
    %143 = vrot.lane.b32.xlu0 %v142, 18
    %v144 = vpop.permute.xlu0 %143
    %vm145 = vcmask 195728
    %146 = vst.msk [vmem:[#allocation0] sm:$0x1] %vm145, %v144
    %s147 = scalar_lea.vmem %s0, 24
    %v148 = vld [vmem:[%s147] sm:$0x1]
    %149 = vrot.lane.b32.xlu0 %v148, 16
    %v150 = vpop.permute.xlu0 %149
    %vm151 = vcmask 179328
    %s152 = scalar_lea.vmem [#allocation0], 8
    %153 = vst.msk [vmem:[%s152] sm:$0x1] %vm151, %v150
    %s154 = scalar_lea.vmem %s0, 2
    %v155 = vld [vmem:[%s154] sm:$0x1]
    %156 = vrot.lane.b32.xlu0 %v155, 12
    %v157 = vpop.permute.xlu0 %156
    %vm158 = vcmask 146528
    %159 = vst.msk [vmem:[#allocation0] sm:$0x1] %vm158, %v157
    %s160 = scalar_lea.vmem %s0, 23
    %v161 = vld [vmem:[%s160] sm:$0x1]
    %162 = vrot.lane.b32.xlu0 %v161, 10
    %v163 = vpop.permute.xlu0 %162
    %vm164 = vcmask 130128
    %s165 = scalar_lea.vmem [#allocation0], 8
    %166 = vst.msk [vmem:[%s165] sm:$0x1] %vm164, %v163
    %s167 = scalar_lea.vmem %s0, 1
    %v168 = vld [vmem:[%s167] sm:$0x1]
    %169 = vrot.lane.b32.xlu0 %v168, 6
    %v170 = vpop.permute.xlu0 %169
    %vm171 = vcmask 97328
    %172 = vst.msk [vmem:[#allocation0] sm:$0x1] %vm171, %v170
    %s173 = scalar_lea.vmem %s0, 22
    %v174 = vld [vmem:[%s173] sm:$0x1]
    %175 = vrot.lane.b32.xlu0 %v174, 4
    %v176 = vpop.permute.xlu0 %175
    %vm177 = vcmask 80928
    %s178 = scalar_lea.vmem [#allocation0], 8
    %179 = vst.msk [vmem:[%s178] sm:$0x1] %vm177, %v176
    %s181 = sshll.u32 1, 1
    %s182 = ssub.s32 %s181, 1
    %v184 = vld [vmem:[#allocation0] sm:%s182]
    %s185 = sshll.u32 1, 1
    %s186 = ssub.s32 %s185, 1
    %187 = vst [vmem:[%s1] sm:%s186] %v184
    %s188 = scalar_lea.vmem [#allocation0], 8
    %v189 = vld [vmem:[%s188] sm:%s182]
    %s190 = sshll.u32 1, 1
    %s191 = ssub.s32 %s190, 1
    %s192 = scalar_lea.vmem %s1, 1
    %193 = vst [vmem:[%s192] sm:%s191] %v189

// kernel: tile.14
$region0: #{tile.14}
  #allocation0 [shape = 's32[1]{0}', space=sflag, size = 0x4, scoped, tag = 'scoped memory for tile.14']
  %s0 = inlined_call_operand.vmem [shape: f32[16], index: 0, kind: input, shape index: {}]
  %s1 = inlined_call_operand.vmem [shape: f32[10,16], index: 1, kind: output, shape index: {}]
  // Predicated region
  $region2: #{tile.14} parent=0 // pred_check
    _
  $region3: #{tile.14} parent=0 // pred_check_branch
    %3 = sbr.rel (0) target = $region5
  $region4: #{tile.14} parent=0 // pred_region
    _
  $region5: #{tile.14} parent=0 // pred_fallthru
    _
  %v4 = vld [vmem:[%s0] ss:$0 sm:$0xff]
  %5 = vst [vmem:[%s1] sm:$0xff] %v4
  %s6 = scalar_lea.vmem %s1, 8
  %7 = vst [vmem:[%s6] sm:$0xff] %v4

// kernel: tile.15
$region0: #{tile.15}
  %s0 = inlined_call_operand.vmem [shape: f32[10,16], index: 0, kind: input, shape index: {}]
  %s1 = inlined_call_operand.vmem [shape: f32[1,160], index: 1, kind: output, shape index: {}]
  $region1: #{tile.15} parent=0
    #allocation0 [shape = 'u8[8192]{0}', space=vmem, size = 0x2000, scoped, tag = 'scoped mem for output reshape']
    %s2 = smov 3
    %v3 = vld [vmem:[%s0] ss:$8 sm:%s2]
    %vm4 = vcmask 130048
    %5 = vst.msk [vmem:[#allocation0] ss:$8 sm:$0x3] %vm4, %v3
    %s6 = scalar_lea.vmem %s0, 7
    %v7 = vld [vmem:[%s6] sm:$0x1]
    %8 = vrot.lane.b32.xlu0 %v7, 112
    %v9 = vpop.permute.xlu0 %8
    %vm10 = vcmask 1048448
    %11 = vst.msk [vmem:[#allocation0] sm:$0x1] %vm10, %v9
    %s12 = scalar_lea.vmem %s0, 6
    %v13 = vld [vmem:[%s12] sm:$0x1]
    %14 = vrot.lane.b32.xlu0 %v13, 96
    %v15 = vpop.permute.xlu0 %14
    %vm16 = vcmask 917248
    %17 = vst.msk [vmem:[#allocation0] sm:$0x1] %vm16, %v15
    %s18 = scalar_lea.vmem %s0, 5
    %v19 = vld [vmem:[%s18] sm:$0x1]
    %20 = vrot.lane.b32.xlu0 %v19, 80
    %v21 = vpop.permute.xlu0 %20
    %vm22 = vcmask 786048
    %23 = vst.msk [vmem:[#allocation0] sm:$0x1] %vm22, %v21
    %s24 = scalar_lea.vmem %s0, 4
    %v25 = vld [vmem:[%s24] sm:$0x1]
    %26 = vrot.lane.b32.xlu0 %v25, 64
    %v27 = vpop.permute.xlu0 %26
    %vm28 = vcmask 654848
    %29 = vst.msk [vmem:[#allocation0] sm:$0x1] %vm28, %v27
    %s30 = scalar_lea.vmem %s0, 3
    %v31 = vld [vmem:[%s30] sm:$0x1]
    %32 = vrot.lane.b32.xlu0 %v31, 48
    %v33 = vpop.permute.xlu0 %32
    %vm34 = vcmask 523648
    %35 = vst.msk [vmem:[#allocation0] sm:$0x1] %vm34, %v33
    %s36 = scalar_lea.vmem %s0, 2
    %v37 = vld [vmem:[%s36] sm:$0x1]
    %38 = vrot.lane.b32.xlu0 %v37, 32
    %v39 = vpop.permute.xlu0 %38
    %vm40 = vcmask 392448
    %41 = vst.msk [vmem:[#allocation0] sm:$0x1] %vm40, %v39
    %s42 = scalar_lea.vmem %s0, 1
    %s43 = smov 3
    %v44 = vld [vmem:[%s42] ss:$8 sm:%s43]
    %45 = vrot.lane.b32.xlu0 %v44, 16
    %v46 = vpop.permute.xlu0 %45
    %vm47 = vcmask 261248
    %48 = vst.msk [vmem:[#allocation0] ss:$8 sm:$0x3] %vm47, %v46
    %s50 = sshll.u32 1, 1
    %s51 = ssub.s32 %s50, 1
    %v53 = vld [vmem:[#allocation0] sm:%s51]
    %s54 = sshll.u32 1, 1
    %s55 = ssub.s32 %s54, 1
    %56 = vst [vmem:[%s1] sm:%s55] %v53
    %s57 = scalar_lea.vmem [#allocation0], 8
    %v58 = vld [vmem:[%s57] sm:%s51]
    %s59 = sshll.u32 1, 1
    %s60 = ssub.s32 %s59, 1
    %s61 = scalar_lea.vmem %s1, 1
    %62 = vst [vmem:[%s61] sm:%s60] %v58

// kernel: lenet_forward.1
$region0: #{lenet_forward.1}
  #allocation0 [shape = 'u32[]', space=smem, size = 0x4, offset = 0x4, fixed_abs, tag = 'smem constant byte address 0x4 - core index']
  #allocation1 [shape = 'u32[144,128]{1,0:T(1,128)}', space=vmem, size = 0x12000, scoped, tag = 'internal scratch']
  %s0 = inlined_call_operand.vmem [shape: f32[2,32,32], index: 0, kind: input, shape index: {}]
  %s1 = inlined_call_operand.vmem [shape: f32[5,32,168], index: 1, kind: input, shape index: {}]
  %s2 = inlined_call_operand.vmem [shape: f32[1,168], index: 2, kind: input, shape index: {}]
  %s3 = inlined_call_operand.vmem [shape: f32[14,28], index: 3, kind: input, shape index: {}]
  %s4 = inlined_call_operand.vmem [shape: f32[168,84], index: 4, kind: input, shape index: {}]
  %s5 = inlined_call_operand.vmem [shape: f32[5,84,160], index: 5, kind: input, shape index: {}]
  %s6 = inlined_call_operand.vmem [shape: f32[1,160], index: 6, kind: input, shape index: {}]
  %s7 = inlined_call_operand.vmem [shape: f32[5,10], index: 7, kind: input, shape index: {}]
  %s8 = inlined_call_operand.vmem [shape: f32[160,80], index: 8, kind: input, shape index: {}]
  %s9 = inlined_call_operand.vmem [shape: f32[5,80,120], index: 9, kind: input, shape index: {}]
  %s10 = inlined_call_operand.vmem [shape: f32[1,120], index: 10, kind: input, shape index: {}]
  %s11 = inlined_call_operand.vmem [shape: f32[120,84], index: 11, kind: input, shape index: {}]
  %s12 = inlined_call_operand.vmem [shape: f32[1,84], index: 12, kind: input, shape index: {}]
  %s13 = inlined_call_operand.vmem [shape: f32[84,10], index: 13, kind: input, shape index: {}]
  %s14 = inlined_call_operand.vmem [shape: f32[1,10], index: 14, kind: input, shape index: {}]
  %s15 = inlined_call_operand.hbm [shape: f32[2,1,10], index: 15, kind: output, shape index: {}]
  %s16 = sld [smem:[#allocation0]]
  $region93: #{lenet_forward.1} parent=0
    _
  %s18 = ssub.s32 1, %s16
  %s19 = scalar_select 0, %s18, %s16
  $region1: #{lenet_forward.1} parent=0
    #allocation2 [shape = 'u8[1024]{0}', space=vmem, size = 0x400, scoped, tag = 'output window, operand 0']
    #allocation3 [shape = 's32[2]{0}', space=sflag, size = 0x8, scoped, tag = 'scoped memory for lenet_forward.1']
    %20 = vsyncpa [#allocation3], 0
    %s21 = scalar_lea.sflag [#allocation3], 1
    %22 = vsyncpa %s21, 0
    loop: start=0, step=1, limit=4
    $region2: #{lenet_forward.1} parent=1 // loop_pre_header
      _
    $region3: #{lenet_forward.1} parent=1 // loop_header
      %s24 = sphi 0, %s28
      %p25 = scmp.ge.s32.totalorder %s24, 4
      %s34 = sphi 0, %s36
      %s37 = sphi 0, %s34
      %s38 = sphi 0, %s37
      %s54 = sphi 0, %s38
      %s58 = sphi 0, %s58
      %s60 = sphi 0, %s58
      %s61 = sphi 0, %s60
      %s75 = sphi 0, %s61
      %s79 = sphi 0, %s79
      %s81 = sphi 0, %s79
      %s82 = sphi 0, %s81
      %s96 = sphi 0, %s82
      %s100 = sphi 0, %s100
      %s102 = sphi 0, %s100
      %s103 = sphi 0, %s102
      %s117 = sphi 0, %s103
      %s121 = sphi 0, %s121
      %s123 = sphi 0, %s121
      %s124 = sphi 0, %s123
      %s138 = sphi 0, %s124
      %s142 = sphi 0, %s142
      %s144 = sphi 0, %s142
      %s145 = sphi 0, %s144
      %s159 = sphi 0, %s145
      %s163 = sphi 0, %s163
      %s165 = sphi 0, %s163
      %s166 = sphi 0, %s165
      %s180 = sphi 0, %s166
      %s184 = sphi 0, %s184
      %s186 = sphi 0, %s184
      %s187 = sphi 0, %s186
      %s201 = sphi 0, %s187
      %s205 = sphi 0, %s205
      %s207 = sphi 0, %s205
      %s208 = sphi 0, %s207
      %s222 = sphi 0, %s208
      %s226 = sphi 0, %s226
      %s228 = sphi 0, %s226
      %s229 = sphi 0, %s228
      %s243 = sphi 0, %s229
      %s247 = sphi 0, %s247
      %s249 = sphi 0, %s247
      %s250 = sphi 0, %s249
      %s264 = sphi 0, %s250
      %s268 = sphi 0, %s268
      %s270 = sphi 0, %s268
      %s271 = sphi 0, %s270
      %s285 = sphi 0, %s271
      %s289 = sphi 0, %s289
      %s291 = sphi 0, %s289
      %s292 = sphi 0, %s291
      %s306 = sphi 0, %s292
      %s310 = sphi 0, %s310
      %s312 = sphi 0, %s310
      %s313 = sphi 0, %s312
      %s327 = sphi 0, %s313
      %s331 = sphi 0, %s331
      %s333 = sphi 0, %s331
      %s334 = sphi 0, %s333
      %s348 = sphi 0, %s334
      %s354 = sphi 0, %s356
      %s357 = sphi 0, %s354
      %s358 = sphi 0, %s357
      %s374 = sphi 0, %s358
    $region4: #{lenet_forward.1} parent=1 // loop_header_branch
      %27 = sbr.rel (%p25) target = $region8
    $region5: #{lenet_forward.1} parent=1 // loop_body
      %s29 = ssub.s32 %s24, 1
      %s30 = ssub.s32 %s24, 2
      %s31 = sadd.s32 %s24, 1
      %s32 = ssub.s32 %s24, %s31
      %p33 = scmp.eq.s32.totalorder %s32, 0
      %s35 = sadd.s32 %s34, 1
      %s36 = scalar_select %p33, %s34, %s35
      %p39 = pneg %p33
      %p40 = scmp.eq.s32.totalorder %s24, 1
      %p41 = por %p39, %p40
      %p42 = scmp.ne.s32.totalorder %s34, %s37
      %p43 = scmp.eq.s32.totalorder %s24, 0
      %p44 = por %p42, %p43
      %p45 = scmp.ne.s32.totalorder %s34, %s37
      %p46 = scmp.eq.s32.totalorder %s29, 1
      %p47 = por %p45, %p46
      %p48 = scmp.ne.s32.totalorder %s37, %s38
      %p49 = scmp.eq.s32.totalorder %s29, 0
      %p50 = por %p48, %p49
      %p51 = scmp.ne.s32.totalorder %s37, %s38
      %p52 = scmp.eq.s32.totalorder %s30, 1
      %p53 = por %p51, %p52
      %p55 = scmp.ne.s32.totalorder %s38, %s54
      %p56 = scmp.eq.s32.totalorder %s30, 0
      %p57 = por %p55, %p56
      %s59 = sadd.s32 %s58, 1
      %p62 = scmp.eq.s32.totalorder %s24, 1
      %p63 = scmp.ne.s32.totalorder %s58, %s60
      %p64 = scmp.eq.s32.totalorder %s24, 0
      %p65 = por %p63, %p64
      %p66 = scmp.ne.s32.totalorder %s58, %s60
      %p67 = scmp.eq.s32.totalorder %s29, 1
      %p68 = por %p66, %p67
      %p69 = scmp.ne.s32.totalorder %s60, %s61
      %p70 = scmp.eq.s32.totalorder %s29, 0
      %p71 = por %p69, %p70
      %p72 = scmp.ne.s32.totalorder %s60, %s61
      %p73 = scmp.eq.s32.totalorder %s30, 1
      %p74 = por %p72, %p73
      %p76 = scmp.ne.s32.totalorder %s61, %s75
      %p77 = scmp.eq.s32.totalorder %s30, 0
      %p78 = por %p76, %p77
      %s80 = sadd.s32 %s79, 1
      %p83 = scmp.eq.s32.totalorder %s24, 1
      %p84 = scmp.ne.s32.totalorder %s79, %s81
      %p85 = scmp.eq.s32.totalorder %s24, 0
      %p86 = por %p84, %p85
      %p87 = scmp.ne.s32.totalorder %s79, %s81
      %p88 = scmp.eq.s32.totalorder %s29, 1
      %p89 = por %p87, %p88
      %p90 = scmp.ne.s32.totalorder %s81, %s82
      %p91 = scmp.eq.s32.totalorder %s29, 0
      %p92 = por %p90, %p91
      %p93 = scmp.ne.s32.totalorder %s81, %s82
      %p94 = scmp.eq.s32.totalorder %s30, 1
      %p95 = por %p93, %p94
      %p97 = scmp.ne.s32.totalorder %s82, %s96
      %p98 = scmp.eq.s32.totalorder %s30, 0
      %p99 = por %p97, %p98
      %s101 = sadd.s32 %s100, 1
      %p104 = scmp.eq.s32.totalorder %s24, 1
      %p105 = scmp.ne.s32.totalorder %s100, %s102
      %p106 = scmp.eq.s32.totalorder %s24, 0
      %p107 = por %p105, %p106
      %p108 = scmp.ne.s32.totalorder %s100, %s102
      %p109 = scmp.eq.s32.totalorder %s29, 1
      %p110 = por %p108, %p109
      %p111 = scmp.ne.s32.totalorder %s102, %s103
      %p112 = scmp.eq.s32.totalorder %s29, 0
      %p113 = por %p111, %p112
      %p114 = scmp.ne.s32.totalorder %s102, %s103
      %p115 = scmp.eq.s32.totalorder %s30, 1
      %p116 = por %p114, %p115
      %p118 = scmp.ne.s32.totalorder %s103, %s117
      %p119 = scmp.eq.s32.totalorder %s30, 0
      %p120 = por %p118, %p119
      %s122 = sadd.s32 %s121, 1
      %p125 = scmp.eq.s32.totalorder %s24, 1
      %p126 = scmp.ne.s32.totalorder %s121, %s123
      %p127 = scmp.eq.s32.totalorder %s24, 0
      %p128 = por %p126, %p127
      %p129 = scmp.ne.s32.totalorder %s121, %s123
      %p130 = scmp.eq.s32.totalorder %s29, 1
      %p131 = por %p129, %p130
      %p132 = scmp.ne.s32.totalorder %s123, %s124
      %p133 = scmp.eq.s32.totalorder %s29, 0
      %p134 = por %p132, %p133
      %p135 = scmp.ne.s32.totalorder %s123, %s124
      %p136 = scmp.eq.s32.totalorder %s30, 1
      %p137 = por %p135, %p136
      %p139 = scmp.ne.s32.totalorder %s124, %s138
      %p140 = scmp.eq.s32.totalorder %s30, 0
      %p141 = por %p139, %p140
      %s143 = sadd.s32 %s142, 1
      %p146 = scmp.eq.s32.totalorder %s24, 1
      %p147 = scmp.ne.s32.totalorder %s142, %s144
      %p148 = scmp.eq.s32.totalorder %s24, 0
      %p149 = por %p147, %p148
      %p150 = scmp.ne.s32.totalorder %s142, %s144
      %p151 = scmp.eq.s32.totalorder %s29, 1
      %p152 = por %p150, %p151
      %p153 = scmp.ne.s32.totalorder %s144, %s145
      %p154 = scmp.eq.s32.totalorder %s29, 0
      %p155 = por %p153, %p154
      %p156 = scmp.ne.s32.totalorder %s144, %s145
      %p157 = scmp.eq.s32.totalorder %s30, 1
      %p158 = por %p156, %p157
      %p160 = scmp.ne.s32.totalorder %s145, %s159
      %p161 = scmp.eq.s32.totalorder %s30, 0
      %p162 = por %p160, %p161
      %s164 = sadd.s32 %s163, 1
      %p167 = scmp.eq.s32.totalorder %s24, 1
      %p168 = scmp.ne.s32.totalorder %s163, %s165
      %p169 = scmp.eq.s32.totalorder %s24, 0
      %p170 = por %p168, %p169
      %p171 = scmp.ne.s32.totalorder %s163, %s165
      %p172 = scmp.eq.s32.totalorder %s29, 1
      %p173 = por %p171, %p172
      %p174 = scmp.ne.s32.totalorder %s165, %s166
      %p175 = scmp.eq.s32.totalorder %s29, 0
      %p176 = por %p174, %p175
      %p177 = scmp.ne.s32.totalorder %s165, %s166
      %p178 = scmp.eq.s32.totalorder %s30, 1
      %p179 = por %p177, %p178
      %p181 = scmp.ne.s32.totalorder %s166, %s180
      %p182 = scmp.eq.s32.totalorder %s30, 0
      %p183 = por %p181, %p182
      %s185 = sadd.s32 %s184, 1
      %p188 = scmp.eq.s32.totalorder %s24, 1
      %p189 = scmp.ne.s32.totalorder %s184, %s186
      %p190 = scmp.eq.s32.totalorder %s24, 0
      %p191 = por %p189, %p190
      %p192 = scmp.ne.s32.totalorder %s184, %s186
      %p193 = scmp.eq.s32.totalorder %s29, 1
      %p194 = por %p192, %p193
      %p195 = scmp.ne.s32.totalorder %s186, %s187
      %p196 = scmp.eq.s32.totalorder %s29, 0
      %p197 = por %p195, %p196
      %p198 = scmp.ne.s32.totalorder %s186, %s187
      %p199 = scmp.eq.s32.totalorder %s30, 1
      %p200 = por %p198, %p199
      %p202 = scmp.ne.s32.totalorder %s187, %s201
      %p203 = scmp.eq.s32.totalorder %s30, 0
      %p204 = por %p202, %p203
      %s206 = sadd.s32 %s205, 1
      %p209 = scmp.eq.s32.totalorder %s24, 1
      %p210 = scmp.ne.s32.totalorder %s205, %s207
      %p211 = scmp.eq.s32.totalorder %s24, 0
      %p212 = por %p210, %p211
      %p213 = scmp.ne.s32.totalorder %s205, %s207
      %p214 = scmp.eq.s32.totalorder %s29, 1
      %p215 = por %p213, %p214
      %p216 = scmp.ne.s32.totalorder %s207, %s208
      %p217 = scmp.eq.s32.totalorder %s29, 0
      %p218 = por %p216, %p217
      %p219 = scmp.ne.s32.totalorder %s207, %s208
      %p220 = scmp.eq.s32.totalorder %s30, 1
      %p221 = por %p219, %p220
      %p223 = scmp.ne.s32.totalorder %s208, %s222
      %p224 = scmp.eq.s32.totalorder %s30, 0
      %p225 = por %p223, %p224
      %s227 = sadd.s32 %s226, 1
      %p230 = scmp.eq.s32.totalorder %s24, 1
      %p231 = scmp.ne.s32.totalorder %s226, %s228
      %p232 = scmp.eq.s32.totalorder %s24, 0
      %p233 = por %p231, %p232
      %p234 = scmp.ne.s32.totalorder %s226, %s228
      %p235 = scmp.eq.s32.totalorder %s29, 1
      %p236 = por %p234, %p235
      %p237 = scmp.ne.s32.totalorder %s228, %s229
      %p238 = scmp.eq.s32.totalorder %s29, 0
      %p239 = por %p237, %p238
      %p240 = scmp.ne.s32.totalorder %s228, %s229
      %p241 = scmp.eq.s32.totalorder %s30, 1
      %p242 = por %p240, %p241
      %p244 = scmp.ne.s32.totalorder %s229, %s243
      %p245 = scmp.eq.s32.totalorder %s30, 0
      %p246 = por %p244, %p245
      %s248 = sadd.s32 %s247, 1
      %p251 = scmp.eq.s32.totalorder %s24, 1
      %p252 = scmp.ne.s32.totalorder %s247, %s249
      %p253 = scmp.eq.s32.totalorder %s24, 0
      %p254 = por %p252, %p253
      %p255 = scmp.ne.s32.totalorder %s247, %s249
      %p256 = scmp.eq.s32.totalorder %s29, 1
      %p257 = por %p255, %p256
      %p258 = scmp.ne.s32.totalorder %s249, %s250
      %p259 = scmp.eq.s32.totalorder %s29, 0
      %p260 = por %p258, %p259
      %p261 = scmp.ne.s32.totalorder %s249, %s250
      %p262 = scmp.eq.s32.totalorder %s30, 1
      %p263 = por %p261, %p262
      %p265 = scmp.ne.s32.totalorder %s250, %s264
      %p266 = scmp.eq.s32.totalorder %s30, 0
      %p267 = por %p265, %p266
      %s269 = sadd.s32 %s268, 1
      %p272 = scmp.eq.s32.totalorder %s24, 1
      %p273 = scmp.ne.s32.totalorder %s268, %s270
      %p274 = scmp.eq.s32.totalorder %s24, 0
      %p275 = por %p273, %p274
      %p276 = scmp.ne.s32.totalorder %s268, %s270
      %p277 = scmp.eq.s32.totalorder %s29, 1
      %p278 = por %p276, %p277
      %p279 = scmp.ne.s32.totalorder %s270, %s271
      %p280 = scmp.eq.s32.totalorder %s29, 0
      %p281 = por %p279, %p280
      %p282 = scmp.ne.s32.totalorder %s270, %s271
      %p283 = scmp.eq.s32.totalorder %s30, 1
      %p284 = por %p282, %p283
      %p286 = scmp.ne.s32.totalorder %s271, %s285
      %p287 = scmp.eq.s32.totalorder %s30, 0
      %p288 = por %p286, %p287
      %s290 = sadd.s32 %s289, 1
      %p293 = scmp.eq.s32.totalorder %s24, 1
      %p294 = scmp.ne.s32.totalorder %s289, %s291
      %p295 = scmp.eq.s32.totalorder %s24, 0
      %p296 = por %p294, %p295
      %p297 = scmp.ne.s32.totalorder %s289, %s291
      %p298 = scmp.eq.s32.totalorder %s29, 1
      %p299 = por %p297, %p298
      %p300 = scmp.ne.s32.totalorder %s291, %s292
      %p301 = scmp.eq.s32.totalorder %s29, 0
      %p302 = por %p300, %p301
      %p303 = scmp.ne.s32.totalorder %s291, %s292
      %p304 = scmp.eq.s32.totalorder %s30, 1
      %p305 = por %p303, %p304
      %p307 = scmp.ne.s32.totalorder %s292, %s306
      %p308 = scmp.eq.s32.totalorder %s30, 0
      %p309 = por %p307, %p308
      %s311 = sadd.s32 %s310, 1
      %p314 = scmp.eq.s32.totalorder %s24, 1
      %p315 = scmp.ne.s32.totalorder %s310, %s312
      %p316 = scmp.eq.s32.totalorder %s24, 0
      %p317 = por %p315, %p316
      %p318 = scmp.ne.s32.totalorder %s310, %s312
      %p319 = scmp.eq.s32.totalorder %s29, 1
      %p320 = por %p318, %p319
      %p321 = scmp.ne.s32.totalorder %s312, %s313
      %p322 = scmp.eq.s32.totalorder %s29, 0
      %p323 = por %p321, %p322
      %p324 = scmp.ne.s32.totalorder %s312, %s313
      %p325 = scmp.eq.s32.totalorder %s30, 1
      %p326 = por %p324, %p325
      %p328 = scmp.ne.s32.totalorder %s313, %s327
      %p329 = scmp.eq.s32.totalorder %s30, 0
      %p330 = por %p328, %p329
      %s332 = sadd.s32 %s331, 1
      %p335 = scmp.eq.s32.totalorder %s24, 1
      %p336 = scmp.ne.s32.totalorder %s331, %s333
      %p337 = scmp.eq.s32.totalorder %s24, 0
      %p338 = por %p336, %p337
      %p339 = scmp.ne.s32.totalorder %s331, %s333
      %p340 = scmp.eq.s32.totalorder %s29, 1
      %p341 = por %p339, %p340
      %p342 = scmp.ne.s32.totalorder %s333, %s334
      %p343 = scmp.eq.s32.totalorder %s29, 0
      %p344 = por %p342, %p343
      %p345 = scmp.ne.s32.totalorder %s333, %s334
      %p346 = scmp.eq.s32.totalorder %s30, 1
      %p347 = por %p345, %p346
      %p349 = scmp.ne.s32.totalorder %s334, %s348
      %p350 = scmp.eq.s32.totalorder %s30, 0
      %p351 = por %p349, %p350
      %s352 = ssub.s32 %s24, %s31
      %p353 = scmp.eq.s32.totalorder %s352, 0
      %s355 = sadd.s32 %s354, 1
      %s356 = scalar_select %p353, %s354, %s355
      %p359 = pneg %p353
      %p360 = scmp.eq.s32.totalorder %s24, 1
      %p361 = por %p359, %p360
      %p362 = scmp.ne.s32.totalorder %s354, %s357
      %p363 = scmp.eq.s32.totalorder %s24, 0
      %p364 = por %p362, %p363
      %p365 = scmp.ne.s32.totalorder %s354, %s357
      %p366 = scmp.eq.s32.totalorder %s29, 1
      %p367 = por %p365, %p366
      %p368 = scmp.ne.s32.totalorder %s357, %s358
      %p369 = scmp.eq.s32.totalorder %s29, 0
      %p370 = por %p368, %p369
      %p371 = scmp.ne.s32.totalorder %s357, %s358
      %p372 = scmp.eq.s32.totalorder %s30, 1
      %p373 = por %p371, %p372
      %p375 = scmp.ne.s32.totalorder %s358, %s374
      %p376 = scmp.eq.s32.totalorder %s30, 0
      %p377 = por %p375, %p376
      %p378 = scmp.le.s32.totalorder 1, %s24
      %p379 = scmp.lt.s32.totalorder %s24, 3
      %p380 = pnand %p378, %p379
      %p381 = pneg %p380
      // Predicated region
      $region9: #{lenet_forward.1} parent=5 // pred_check
        _
      $region10: #{lenet_forward.1} parent=5 // pred_check_branch
        %383 = sbr.rel (%p380) target = $region12
      $region11: #{lenet_forward.1} parent=5 // pred_region
        %s384 = ssub.s32 %s24, 1
        // Predicated region
        $region13: #{lenet_forward.1} parent=11 // pred_check
          %p385 = pneg %p71
        $region14: #{lenet_forward.1} parent=11 // pred_check_branch
          %387 = sbr.rel (%p385) target = $region16
        $region15: #{lenet_forward.1} parent=11 // pred_region
          _
        $region16: #{lenet_forward.1} parent=11 // pred_fallthru
          _
        // Predicated region
        $region17: #{lenet_forward.1} parent=11 // pred_check
          %p388 = pneg %p92
        $region18: #{lenet_forward.1} parent=11 // pred_check_branch
          %390 = sbr.rel (%p388) target = $region20
        $region19: #{lenet_forward.1} parent=11 // pred_region
          _
        $region20: #{lenet_forward.1} parent=11 // pred_fallthru
          _
        // Predicated region
        $region21: #{lenet_forward.1} parent=11 // pred_check
          %p391 = pneg %p113
        $region22: #{lenet_forward.1} parent=11 // pred_check_branch
          %393 = sbr.rel (%p391) target = $region24
        $region23: #{lenet_forward.1} parent=11 // pred_region
          _
        $region24: #{lenet_forward.1} parent=11 // pred_fallthru
          _
        // Predicated region
        $region25: #{lenet_forward.1} parent=11 // pred_check
          %p394 = pneg %p134
        $region26: #{lenet_forward.1} parent=11 // pred_check_branch
          %396 = sbr.rel (%p394) target = $region28
        $region27: #{lenet_forward.1} parent=11 // pred_region
          _
        $region28: #{lenet_forward.1} parent=11 // pred_fallthru
          _
        // Predicated region
        $region29: #{lenet_forward.1} parent=11 // pred_check
          %p397 = pneg %p155
        $region30: #{lenet_forward.1} parent=11 // pred_check_branch
          %399 = sbr.rel (%p397) target = $region32
        $region31: #{lenet_forward.1} parent=11 // pred_region
          _
        $region32: #{lenet_forward.1} parent=11 // pred_fallthru
          _
        // Predicated region
        $region33: #{lenet_forward.1} parent=11 // pred_check
          %p400 = pneg %p176
        $region34: #{lenet_forward.1} parent=11 // pred_check_branch
          %402 = sbr.rel (%p400) target = $region36
        $region35: #{lenet_forward.1} parent=11 // pred_region
          _
        $region36: #{lenet_forward.1} parent=11 // pred_fallthru
          _
        // Predicated region
        $region37: #{lenet_forward.1} parent=11 // pred_check
          %p403 = pneg %p197
        $region38: #{lenet_forward.1} parent=11 // pred_check_branch
          %405 = sbr.rel (%p403) target = $region40
        $region39: #{lenet_forward.1} parent=11 // pred_region
          _
        $region40: #{lenet_forward.1} parent=11 // pred_fallthru
          _
        // Predicated region
        $region41: #{lenet_forward.1} parent=11 // pred_check
          %p406 = pneg %p218
        $region42: #{lenet_forward.1} parent=11 // pred_check_branch
          %408 = sbr.rel (%p406) target = $region44
        $region43: #{lenet_forward.1} parent=11 // pred_region
          _
        $region44: #{lenet_forward.1} parent=11 // pred_fallthru
          _
        // Predicated region
        $region45: #{lenet_forward.1} parent=11 // pred_check
          %p409 = pneg %p239
        $region46: #{lenet_forward.1} parent=11 // pred_check_branch
          %411 = sbr.rel (%p409) target = $region48
        $region47: #{lenet_forward.1} parent=11 // pred_region
          _
        $region48: #{lenet_forward.1} parent=11 // pred_fallthru
          _
        // Predicated region
        $region49: #{lenet_forward.1} parent=11 // pred_check
          %p412 = pneg %p260
        $region50: #{lenet_forward.1} parent=11 // pred_check_branch
          %414 = sbr.rel (%p412) target = $region52
        $region51: #{lenet_forward.1} parent=11 // pred_region
          _
        $region52: #{lenet_forward.1} parent=11 // pred_fallthru
          _
        // Predicated region
        $region53: #{lenet_forward.1} parent=11 // pred_check
          %p415 = pneg %p281
        $region54: #{lenet_forward.1} parent=11 // pred_check_branch
          %417 = sbr.rel (%p415) target = $region56
        $region55: #{lenet_forward.1} parent=11 // pred_region
          _
        $region56: #{lenet_forward.1} parent=11 // pred_fallthru
          _
        // Predicated region
        $region57: #{lenet_forward.1} parent=11 // pred_check
          %p418 = pneg %p302
        $region58: #{lenet_forward.1} parent=11 // pred_check_branch
          %420 = sbr.rel (%p418) target = $region60
        $region59: #{lenet_forward.1} parent=11 // pred_region
          _
        $region60: #{lenet_forward.1} parent=11 // pred_fallthru
          _
        // Predicated region
        $region61: #{lenet_forward.1} parent=11 // pred_check
          %p421 = pneg %p323
        $region62: #{lenet_forward.1} parent=11 // pred_check_branch
          %423 = sbr.rel (%p421) target = $region64
        $region63: #{lenet_forward.1} parent=11 // pred_region
          _
        $region64: #{lenet_forward.1} parent=11 // pred_fallthru
          _
        // Predicated region
        $region65: #{lenet_forward.1} parent=11 // pred_check
          %p424 = pneg %p344
        $region66: #{lenet_forward.1} parent=11 // pred_check_branch
          %426 = sbr.rel (%p424) target = $region68
        $region67: #{lenet_forward.1} parent=11 // pred_region
          _
        $region68: #{lenet_forward.1} parent=11 // pred_fallthru
          _
      $region12: #{lenet_forward.1} parent=5 // pred_fallthru
        _
      %p427 = scmp.lt.s32.totalorder %s24, 2
      // Predicated region
      $region69: #{lenet_forward.1} parent=5 // pred_check
        %p428 = pneg %p427
      $region70: #{lenet_forward.1} parent=5 // pred_check_branch
        %430 = sbr.rel (%p428) target = $region72
      $region71: #{lenet_forward.1} parent=5 // pred_region
        // Predicated region
        $region73: #{lenet_forward.1} parent=71 // pred_check
          %p431 = pneg %p44
        $region74: #{lenet_forward.1} parent=71 // pred_check_branch
          %433 = sbr.rel (%p431) target = $region76
        $region75: #{lenet_forward.1} parent=71 // pred_region
          %p434 = scmp.lt.s32.totalorder %s24, 1
          %s435 = scalar_select %p434, %s24, 1
          %s436 = smul.addr %s435, 4
          %s437 = smul.addr %s436, 8
          %s438 = scalar_lea.vmem %s0, %s437
        $region76: #{lenet_forward.1} parent=71 // pred_fallthru
          _
      $region72: #{lenet_forward.1} parent=5 // pred_fallthru
        _
      %p439 = scmp.le.s32.totalorder 1, %s24
      %p440 = scmp.lt.s32.totalorder %s24, 3
      %p441 = pnand %p439, %p440
      %p442 = pneg %p441
      // Predicated region
      $region77: #{lenet_forward.1} parent=5 // pred_check
        _
      $region78: #{lenet_forward.1} parent=5 // pred_check_branch
        %444 = sbr.rel (%p441) target = $region80
      $region79: #{lenet_forward.1} parent=5 // pred_region
        %s445 = ssub.s32 %s24, 1
        %p446 = scmp.lt.s32.totalorder %s29, 1
        %s447 = scalar_select %p446, %s29, 1
        %s448 = smul.addr %s447, 4
        %s449 = smul.addr %s448, 8
        %s450 = scalar_lea.vmem %s0, %s449
        %p451 = pneg %p50
        %p452 = pneg %p47
        %p453 = pneg %p71
        %p454 = pneg %p68
        %p455 = pneg %p92
        %p456 = pneg %p89
        %p457 = pneg %p113
        %p458 = pneg %p110
        %p459 = pneg %p134
        %p460 = pneg %p131
        %p461 = pneg %p155
        %p462 = pneg %p152
        %p463 = pneg %p176
        %p464 = pneg %p173
        %p465 = pneg %p197
        %p466 = pneg %p194
        %p467 = pneg %p218
        %p468 = pneg %p215
        %p469 = pneg %p239
        %p470 = pneg %p236
        %p471 = pneg %p260
        %p472 = pneg %p257
        %p473 = pneg %p281
        %p474 = pneg %p278
        %p475 = pneg %p302
        %p476 = pneg %p299
        %p477 = pneg %p323
        %p478 = pneg %p320
        %p479 = pneg %p344
        %p480 = pneg %p341
        %p481 = pneg %p370
        %p482 = pneg %p367
        %s483 = sand.u32 %s357, 1
        %s484 = scalar_lea.sflag [#allocation3], %s483
        %s485 = sand.u32 %s357, 1
        %s486 = scalar_lea.vmem [#allocation2], %s485
        %p487 = scmp.lt.s32.totalorder %s29, 1
        %s488 = scalar_select %p487, %s29, 1
        %s489 = smul.addr %s488, 4
        %s490 = smul.addr %s489, 8
        %s491 = scalar_lea.vmem %s0, %s490
        %v492 = vld [vmem:[%s491] sm:$0xff]
        %v493 = vld [vmem:[%s491 + $0x8] sm:$0xff]
        %v494 = vld [vmem:[%s491 + $0x10] sm:$0xff]
        %v495 = vld [vmem:[%s491 + $0x18] sm:$0xff]
        %v496 = vld [vmem:[%s1] sm:$0xff]
        %v497 = vld [vmem:[%s1 + $0x8] sm:$0xff]
        %v498 = vld [vmem:[%s1 + $0x10] sm:$0xff]
        %v499 = vld [vmem:[%s1 + $0x18] sm:$0xff]
        %v500 = vld [vmem:[%s1 + $0x20] sm:$0xff]
        %v501 = vld [vmem:[%s1 + $0x28] sm:$0xff]
        %v502 = vld [vmem:[%s1 + $0x30] sm:$0xff]
        %v503 = vld [vmem:[%s1 + $0x38] sm:$0xff]
        %s504 = scalar_lea.vmem %s1, 64
        %v505 = vld [vmem:[%s504] sm:$0xff]
        %v506 = vld [vmem:[%s504 + $0x8] sm:$0xff]
        %v507 = vld [vmem:[%s504 + $0x10] sm:$0xff]
        %v508 = vld [vmem:[%s504 + $0x18] sm:$0xff]
        %v509 = vld [vmem:[%s504 + $0x20] sm:$0xff]
        %v510 = vld [vmem:[%s504 + $0x28] sm:$0xff]
        %v511 = vld [vmem:[%s504 + $0x30] sm:$0xff]
        %v512 = vld [vmem:[%s504 + $0x38] sm:$0xff]
        %vm517 = vcmask 1046528
        %v518 = vrot.slane %v492, 1
        %v519 = vrot.slane %v493, 1
        %v520 = vsel %vm517, %v518, %v519
        %v521 = vrot.slane %v494, 1
        %v522 = vsel %vm517, %v519, %v521
        %v523 = vrot.slane %v495, 1
        %v524 = vsel %vm517, %v521, %v523
        %vm525 = vcmask 261120
        %v526 = vsel %vm525, %v520, 0
        %v528 = vsel %vm525, %v522, 0
        %v530 = vsel %vm525, %v524, 0
        %v532 = vsel %vm525, %v523, 0
        %534 = vmatprep.subr.mxu0 0.0
        %535 = vmatpush1.msra.mxu0 0.0
        %536 = vmatprep.subr.mxu0 0.0
        %537 = vmatpush1.msra.mxu0 0.0
        %538 = vmatprep.subr.mxu0 0.0
        %539 = vmatpush1.msra.mxu0 0.0
        %540 = vmatprep.subr.mxu0 0.0
        %541 = vmatpush1.msra.mxu0 0.0
        %542 = vmatprep.subr.mxu0 0.0
        %543 = vmatpush1.msra.mxu0 0.0
        %544 = vmatprep.subr.mxu0 0.0
        %545 = vmatpush1.msra.mxu0 0.0
        %546 = vmatprep.subr.mxu0 0.0
        %547 = vmatpush1.msra.mxu0 0.0
        %548 = vmatprep.subr.mxu0 0.0
        %549 = vmatpush1.msra.mxu0 0.0
        %550 = vmatprep.subr.mxu0 0.0
        %551 = vmatpush1.msra.mxu0 0.0
        %552 = vmatprep.subr.mxu0 0.0
        %553 = vmatpush1.msra.mxu0 0.0
        %554 = vmatprep.subr.mxu0 0.0
        %555 = vmatpush1.msra.mxu0 0.0
        %556 = vmatprep.subr.mxu0 0.0
        %557 = vmatpush1.msra.mxu0 0.0
        %558 = vmatprep.subr.mxu0 %v512
        %559 = vmatpush1.msra.mxu0 %v511
        %560 = vmatprep.subr.mxu0 %v510
        %561 = vmatpush1.msra.mxu0 %v509
        %562 = vmatprep.subr.mxu0 %v508
        %563 = vmatpush1.msra.mxu0 %v507
        %564 = vmatprep.subr.mxu0 %v506
        %565 = vmatpush1.msra.mxu0 %v505
        %566 = vmatprep.subr.mxu0 0.0
        %567 = vmatpush2.msra.mxu0 0.0
        %568 = vmatprep.subr.mxu0 0.0
        %569 = vmatpush2.msra.mxu0 0.0
        %570 = vmatprep.subr.mxu0 0.0
        %571 = vmatpush2.msra.mxu0 0.0
        %572 = vmatprep.subr.mxu0 0.0
        %573 = vmatpush2.msra.mxu0 0.0
        %574 = vmatprep.subr.mxu0 0.0
        %575 = vmatpush2.msra.mxu0 0.0
        %576 = vmatprep.subr.mxu0 0.0
        %577 = vmatpush2.msra.mxu0 0.0
        %578 = vmatprep.subr.mxu0 0.0
        %579 = vmatpush2.msra.mxu0 0.0
        %580 = vmatprep.subr.mxu0 0.0
        %581 = vmatpush2.msra.mxu0 0.0
        %582 = vmatprep.subr.mxu0 0.0
        %583 = vmatpush2.msra.mxu0 0.0
        %584 = vmatprep.subr.mxu0 0.0
        %585 = vmatpush2.msra.mxu0 0.0
        %586 = vmatprep.subr.mxu0 0.0
        %587 = vmatpush2.msra.mxu0 0.0
        %588 = vmatprep.subr.mxu0 0.0
        %589 = vmatpush2.msra.mxu0 0.0
        %590 = vmatprep.subr.mxu0 0.0
        %591 = vmatpush2.msra.mxu0 0.0
        %592 = vmatprep.subr.mxu0 0.0
        %593 = vmatpush2.msra.mxu0 0.0
        %594 = vmatprep.subr.mxu0 0.0
        %595 = vmatpush2.msra.mxu0 0.0
        %596 = vmatprep.subr.mxu0 0.0
        %597 = vmatpush2.msra.mxu0 0.0
        %598 = vmatprep.mubr.f32.mxu0 0.0
        %599 = vmatmul.mubr.f32.gmra.mxu0 %v526
        %v600 = vpop.f32.mrf.mxu0
        %v601 = vadd.f32 0.0, %v600
        %v602 = vpop.f32.mrf.mxu0
        %v603 = vadd.f32 0.0, %v602
        %604 = vmatprep.mubr.f32.mxu0 0.0
        %605 = vmatmul.mubr.f32.gmra.mxu0 %v528
        %v606 = vpop.f32.mrf.mxu0
        %v607 = vadd.f32 0.0, %v606
        %v608 = vpop.f32.mrf.mxu0
        %v609 = vadd.f32 0.0, %v608
        %610 = vmatprep.mubr.f32.mxu0 0.0
        %611 = vmatmul.mubr.f32.gmra.mxu0 %v530
        %v612 = vpop.f32.mrf.mxu0
        %v613 = vadd.f32 0.0, %v612
        %v614 = vpop.f32.mrf.mxu0
        %v615 = vadd.f32 0.0, %v614
        %616 = vmatprep.mubr.f32.mxu0 0.0
        %617 = vmatmul.mubr.f32.gmra.mxu0 %v532
        %v618 = vpop.f32.mrf.mxu0
        %v619 = vadd.f32 0.0, %v618
        %v620 = vpop.f32.mrf.mxu0
        %v621 = vadd.f32 0.0, %v620
        %622 = vdwg.mxu0
        %v623 = vsel %vm525, %v492, 0
        %v625 = vsel %vm525, %v493, 0
        %v627 = vsel %vm525, %v494, 0
        %v629 = vsel %vm525, %v495, 0
        %631 = vmatprep.subr.mxu0 0.0
        %632 = vmatpush1.msra.mxu0 0.0
        %633 = vmatprep.subr.mxu0 0.0
        %634 = vmatpush1.msra.mxu0 0.0
        %635 = vmatprep.subr.mxu0 0.0
        %636 = vmatpush1.msra.mxu0 0.0
        %637 = vmatprep.subr.mxu0 0.0
        %638 = vmatpush1.msra.mxu0 0.0
        %639 = vmatprep.subr.mxu0 0.0
        %640 = vmatpush1.msra.mxu0 0.0
        %641 = vmatprep.subr.mxu0 0.0
        %642 = vmatpush1.msra.mxu0 0.0
        %643 = vmatprep.subr.mxu0 0.0
        %644 = vmatpush1.msra.mxu0 0.0
        %645 = vmatprep.subr.mxu0 0.0
        %646 = vmatpush1.msra.mxu0 0.0
        %647 = vmatprep.subr.mxu0 0.0
        %648 = vmatpush1.msra.mxu0 0.0
        %649 = vmatprep.subr.mxu0 0.0
        %650 = vmatpush1.msra.mxu0 0.0
        %651 = vmatprep.subr.mxu0 0.0
        %652 = vmatpush1.msra.mxu0 0.0
        %653 = vmatprep.subr.mxu0 0.0
        %654 = vmatpush1.msra.mxu0 0.0
        %655 = vmatprep.subr.mxu0 %v503
        %656 = vmatpush1.msra.mxu0 %v502
        %657 = vmatprep.subr.mxu0 %v501
        %658 = vmatpush1.msra.mxu0 %v500
        %659 = vmatprep.subr.mxu0 %v499
        %660 = vmatpush1.msra.mxu0 %v498
        %661 = vmatprep.subr.mxu0 %v497
        %662 = vmatpush1.msra.mxu0 %v496
        %663 = vmatprep.subr.mxu0 0.0
        %664 = vmatpush2.msra.mxu0 0.0
        %665 = vmatprep.subr.mxu0 0.0
        %666 = vmatpush2.msra.mxu0 0.0
        %667 = vmatprep.subr.mxu0 0.0
        %668 = vmatpush2.msra.mxu0 0.0
        %669 = vmatprep.subr.mxu0 0.0
        %670 = vmatpush2.msra.mxu0 0.0
        %671 = vmatprep.subr.mxu0 0.0
        %672 = vmatpush2.msra.mxu0 0.0
        %673 = vmatprep.subr.mxu0 0.0
        %674 = vmatpush2.msra.mxu0 0.0
        %675 = vmatprep.subr.mxu0 0.0
        %676 = vmatpush2.msra.mxu0 0.0
        %677 = vmatprep.subr.mxu0 0.0
        %678 = vmatpush2.msra.mxu0 0.0
        %679 = vmatprep.subr.mxu0 0.0
        %680 = vmatpush2.msra.mxu0 0.0
        %681 = vmatprep.subr.mxu0 0.0
        %682 = vmatpush2.msra.mxu0 0.0
        %683 = vmatprep.subr.mxu0 0.0
        %684 = vmatpush2.msra.mxu0 0.0
        %685 = vmatprep.subr.mxu0 0.0
        %686 = vmatpush2.msra.mxu0 0.0
        %687 = vmatprep.subr.mxu0 0.0
        %688 = vmatpush2.msra.mxu0 0.0
        %689 = vmatprep.subr.mxu0 0.0
        %690 = vmatpush2.msra.mxu0 0.0
        %691 = vmatprep.subr.mxu0 0.0
        %692 = vmatpush2.msra.mxu0 0.0
        %693 = vmatprep.subr.mxu0 0.0
        %694 = vmatpush2.msra.mxu0 0.0
        %695 = vmatprep.mubr.f32.mxu0 0.0
        %696 = vmatmul.mubr.f32.gmra.mxu0 %v623
        %v697 = vpop.f32.mrf.mxu0
        %v698 = vadd.f32 %v601, %v697
        %v699 = vpop.f32.mrf.mxu0
        %v700 = vadd.f32 %v603, %v699
        %701 = vmatprep.mubr.f32.mxu0 0.0
        %702 = vmatmul.mubr.f32.gmra.mxu0 %v625
        %v703 = vpop.f32.mrf.mxu0
        %v704 = vadd.f32 %v607, %v703
        %v705 = vpop.f32.mrf.mxu0
        %v706 = vadd.f32 %v609, %v705
        %707 = vmatprep.mubr.f32.mxu0 0.0
        %708 = vmatmul.mubr.f32.gmra.mxu0 %v627
        %v709 = vpop.f32.mrf.mxu0
        %v710 = vadd.f32 %v613, %v709
        %v711 = vpop.f32.mrf.mxu0
        %v712 = vadd.f32 %v615, %v711
        %713 = vmatprep.mubr.f32.mxu0 0.0
        %714 = vmatmul.mubr.f32.gmra.mxu0 %v629
        %v715 = vpop.f32.mrf.mxu0
        %v716 = vadd.f32 %v619, %v715
        %v717 = vpop.f32.mrf.mxu0
        %v718 = vadd.f32 %v621, %v717
        %719 = vdwg.mxu0
        %s720 = scalar_lea.vmem %s1, 128
        %v721 = vld [vmem:[%s720] sm:$0xff]
        %v722 = vld [vmem:[%s720 + $0x8] sm:$0xff]
        %v723 = vld [vmem:[%s720 + $0x10] sm:$0xff]
        %v724 = vld [vmem:[%s720 + $0x18] sm:$0xff]
        %v725 = vld [vmem:[%s720 + $0x20] sm:$0xff]
        %v726 = vld [vmem:[%s720 + $0x28] sm:$0xff]
        %v727 = vld [vmem:[%s720 + $0x30] sm:$0xff]
        %v728 = vld [vmem:[%s720 + $0x38] sm:$0xff]
        %vm729 = vcmask 1045504
        %v730 = vrot.slane %v492, 2
        %v731 = vrot.slane %v493, 2
        %v732 = vsel %vm729, %v730, %v731
        %v733 = vrot.slane %v494, 2
        %v734 = vsel %vm729, %v731, %v733
        %v735 = vrot.slane %v495, 2
        %v736 = vsel %vm729, %v733, %v735
        %v737 = vsel %vm525, %v732, 0
        %v739 = vsel %vm525, %v734, 0
        %v741 = vsel %vm525, %v736, 0
        %v743 = vsel %vm525, %v735, 0
        %745 = vmatprep.subr.mxu0 0.0
        %746 = vmatpush1.msra.mxu0 0.0
        %747 = vmatprep.subr.mxu0 0.0
        %748 = vmatpush1.msra.mxu0 0.0
        %749 = vmatprep.subr.mxu0 0.0
        %750 = vmatpush1.msra.mxu0 0.0
        %751 = vmatprep.subr.mxu0 0.0
        %752 = vmatpush1.msra.mxu0 0.0
        %753 = vmatprep.subr.mxu0 0.0
        %754 = vmatpush1.msra.mxu0 0.0
        %755 = vmatprep.subr.mxu0 0.0
        %756 = vmatpush1.msra.mxu0 0.0
        %757 = vmatprep.subr.mxu0 0.0
        %758 = vmatpush1.msra.mxu0 0.0
        %759 = vmatprep.subr.mxu0 0.0
        %760 = vmatpush1.msra.mxu0 0.0
        %761 = vmatprep.subr.mxu0 0.0
        %762 = vmatpush1.msra.mxu0 0.0
        %763 = vmatprep.subr.mxu0 0.0
        %764 = vmatpush1.msra.mxu0 0.0
        %765 = vmatprep.subr.mxu0 0.0
        %766 = vmatpush1.msra.mxu0 0.0
        %767 = vmatprep.subr.mxu0 0.0
        %768 = vmatpush1.msra.mxu0 0.0
        %769 = vmatprep.subr.mxu0 %v728
        %770 = vmatpush1.msra.mxu0 %v727
        %771 = vmatprep.subr.mxu0 %v726
        %772 = vmatpush1.msra.mxu0 %v725
        %773 = vmatprep.subr.mxu0 %v724
        %774 = vmatpush1.msra.mxu0 %v723
        %775 = vmatprep.subr.mxu0 %v722
        %776 = vmatpush1.msra.mxu0 %v721
        %777 = vmatprep.subr.mxu0 0.0
        %778 = vmatpush2.msra.mxu0 0.0
        %779 = vmatprep.subr.mxu0 0.0
        %780 = vmatpush2.msra.mxu0 0.0
        %781 = vmatprep.subr.mxu0 0.0
        %782 = vmatpush2.msra.mxu0 0.0
        %783 = vmatprep.subr.mxu0 0.0
        %784 = vmatpush2.msra.mxu0 0.0
        %785 = vmatprep.subr.mxu0 0.0
        %786 = vmatpush2.msra.mxu0 0.0
        %787 = vmatprep.subr.mxu0 0.0
        %788 = vmatpush2.msra.mxu0 0.0
        %789 = vmatprep.subr.mxu0 0.0
        %790 = vmatpush2.msra.mxu0 0.0
        %791 = vmatprep.subr.mxu0 0.0
        %792 = vmatpush2.msra.mxu0 0.0
        %793 = vmatprep.subr.mxu0 0.0
        %794 = vmatpush2.msra.mxu0 0.0
        %795 = vmatprep.subr.mxu0 0.0
        %796 = vmatpush2.msra.mxu0 0.0
        %797 = vmatprep.subr.mxu0 0.0
        %798 = vmatpush2.msra.mxu0 0.0
        %799 = vmatprep.subr.mxu0 0.0
        %800 = vmatpush2.msra.mxu0 0.0
        %801 = vmatprep.subr.mxu0 0.0
        %802 = vmatpush2.msra.mxu0 0.0
        %803 = vmatprep.subr.mxu0 0.0
        %804 = vmatpush2.msra.mxu0 0.0
        %805 = vmatprep.subr.mxu0 0.0
        %806 = vmatpush2.msra.mxu0 0.0
        %807 = vmatprep.subr.mxu0 0.0
        %808 = vmatpush2.msra.mxu0 0.0
        %809 = vmatprep.mubr.f32.mxu0 0.0
        %810 = vmatmul.mubr.f32.gmra.mxu0 %v737
        %v811 = vpop.f32.mrf.mxu0
        %v812 = vadd.f32 0.0, %v811
        %v813 = vpop.f32.mrf.mxu0
        %v814 = vadd.f32 0.0, %v813
        %815 = vmatprep.mubr.f32.mxu0 0.0
        %816 = vmatmul.mubr.f32.gmra.mxu0 %v739
        %v817 = vpop.f32.mrf.mxu0
        %v818 = vadd.f32 0.0, %v817
        %v819 = vpop.f32.mrf.mxu0
        %v820 = vadd.f32 0.0, %v819
        %821 = vmatprep.mubr.f32.mxu0 0.0
        %822 = vmatmul.mubr.f32.gmra.mxu0 %v741
        %v823 = vpop.f32.mrf.mxu0
        %v824 = vadd.f32 0.0, %v823
        %v825 = vpop.f32.mrf.mxu0
        %v826 = vadd.f32 0.0, %v825
        %827 = vmatprep.mubr.f32.mxu0 0.0
        %828 = vmatmul.mubr.f32.gmra.mxu0 %v743
        %v829 = vpop.f32.mrf.mxu0
        %v830 = vadd.f32 0.0, %v829
        %v831 = vpop.f32.mrf.mxu0
        %v832 = vadd.f32 0.0, %v831
        %833 = vdwg.mxu0
        %v834 = vadd.f32 %v698, %v812
        %v835 = vadd.f32 %v700, %v814
        %v836 = vadd.f32 %v704, %v818
        %v837 = vadd.f32 %v706, %v820
        %v838 = vadd.f32 %v710, %v824
        %v839 = vadd.f32 %v712, %v826
        %v840 = vadd.f32 %v716, %v830
        %v841 = vadd.f32 %v718, %v832
        %s842 = scalar_lea.vmem %s1, 192
        %v843 = vld [vmem:[%s842] sm:$0xff]
        %v844 = vld [vmem:[%s842 + $0x8] sm:$0xff]
        %v845 = vld [vmem:[%s842 + $0x10] sm:$0xff]
        %v846 = vld [vmem:[%s842 + $0x18] sm:$0xff]
        %v847 = vld [vmem:[%s842 + $0x20] sm:$0xff]
        %v848 = vld [vmem:[%s842 + $0x28] sm:$0xff]
        %v849 = vld [vmem:[%s842 + $0x30] sm:$0xff]
        %v850 = vld [vmem:[%s842 + $0x38] sm:$0xff]
        %vm851 = vcmask 1044480
        %v852 = vrot.slane %v492, 3
        %v853 = vrot.slane %v493, 3
        %v854 = vsel %vm851, %v852, %v853
        %v855 = vrot.slane %v494, 3
        %v856 = vsel %vm851, %v853, %v855
        %v857 = vrot.slane %v495, 3
        %v858 = vsel %vm851, %v855, %v857
        %v859 = vsel %vm525, %v854, 0
        %v861 = vsel %vm525, %v856, 0
        %v863 = vsel %vm525, %v858, 0
        %v865 = vsel %vm525, %v857, 0
        %867 = vmatprep.subr.mxu0 0.0
        %868 = vmatpush1.msra.mxu0 0.0
        %869 = vmatprep.subr.mxu0 0.0
        %870 = vmatpush1.msra.mxu0 0.0
        %871 = vmatprep.subr.mxu0 0.0
        %872 = vmatpush1.msra.mxu0 0.0
        %873 = vmatprep.subr.mxu0 0.0
        %874 = vmatpush1.msra.mxu0 0.0
        %875 = vmatprep.subr.mxu0 0.0
        %876 = vmatpush1.msra.mxu0 0.0
        %877 = vmatprep.subr.mxu0 0.0
        %878 = vmatpush1.msra.mxu0 0.0
        %879 = vmatprep.subr.mxu0 0.0
        %880 = vmatpush1.msra.mxu0 0.0
        %881 = vmatprep.subr.mxu0 0.0
        %882 = vmatpush1.msra.mxu0 0.0
        %883 = vmatprep.subr.mxu0 0.0
        %884 = vmatpush1.msra.mxu0 0.0
        %885 = vmatprep.subr.mxu0 0.0
        %886 = vmatpush1.msra.mxu0 0.0
        %887 = vmatprep.subr.mxu0 0.0
        %888 = vmatpush1.msra.mxu0 0.0
        %889 = vmatprep.subr.mxu0 0.0
        %890 = vmatpush1.msra.mxu0 0.0
        %891 = vmatprep.subr.mxu0 %v850
        %892 = vmatpush1.msra.mxu0 %v849
        %893 = vmatprep.subr.mxu0 %v848
        %894 = vmatpush1.msra.mxu0 %v847
        %895 = vmatprep.subr.mxu0 %v846
        %896 = vmatpush1.msra.mxu0 %v845
        %897 = vmatprep.subr.mxu0 %v844
        %898 = vmatpush1.msra.mxu0 %v843
        %899 = vmatprep.subr.mxu0 0.0
        %900 = vmatpush2.msra.mxu0 0.0
        %901 = vmatprep.subr.mxu0 0.0
        %902 = vmatpush2.msra.mxu0 0.0
        %903 = vmatprep.subr.mxu0 0.0
        %904 = vmatpush2.msra.mxu0 0.0
        %905 = vmatprep.subr.mxu0 0.0
        %906 = vmatpush2.msra.mxu0 0.0
        %907 = vmatprep.subr.mxu0 0.0
        %908 = vmatpush2.msra.mxu0 0.0
        %909 = vmatprep.subr.mxu0 0.0
        %910 = vmatpush2.msra.mxu0 0.0
        %911 = vmatprep.subr.mxu0 0.0
        %912 = vmatpush2.msra.mxu0 0.0
        %913 = vmatprep.subr.mxu0 0.0
        %914 = vmatpush2.msra.mxu0 0.0
        %915 = vmatprep.subr.mxu0 0.0
        %916 = vmatpush2.msra.mxu0 0.0
        %917 = vmatprep.subr.mxu0 0.0
        %918 = vmatpush2.msra.mxu0 0.0
        %919 = vmatprep.subr.mxu0 0.0
        %920 = vmatpush2.msra.mxu0 0.0
        %921 = vmatprep.subr.mxu0 0.0
        %922 = vmatpush2.msra.mxu0 0.0
        %923 = vmatprep.subr.mxu0 0.0
        %924 = vmatpush2.msra.mxu0 0.0
        %925 = vmatprep.subr.mxu0 0.0
        %926 = vmatpush2.msra.mxu0 0.0
        %927 = vmatprep.subr.mxu0 0.0
        %928 = vmatpush2.msra.mxu0 0.0
        %929 = vmatprep.subr.mxu0 0.0
        %930 = vmatpush2.msra.mxu0 0.0
        %931 = vmatprep.mubr.f32.mxu0 0.0
        %932 = vmatmul.mubr.f32.gmra.mxu0 %v859
        %v933 = vpop.f32.mrf.mxu0
        %v934 = vadd.f32 0.0, %v933
        %v935 = vpop.f32.mrf.mxu0
        %v936 = vadd.f32 0.0, %v935
        %937 = vmatprep.mubr.f32.mxu0 0.0
        %938 = vmatmul.mubr.f32.gmra.mxu0 %v861
        %v939 = vpop.f32.mrf.mxu0
        %v940 = vadd.f32 0.0, %v939
        %v941 = vpop.f32.mrf.mxu0
        %v942 = vadd.f32 0.0, %v941
        %943 = vmatprep.mubr.f32.mxu0 0.0
        %944 = vmatmul.mubr.f32.gmra.mxu0 %v863
        %v945 = vpop.f32.mrf.mxu0
        %v946 = vadd.f32 0.0, %v945
        %v947 = vpop.f32.mrf.mxu0
        %v948 = vadd.f32 0.0, %v947
        %949 = vmatprep.mubr.f32.mxu0 0.0
        %950 = vmatmul.mubr.f32.gmra.mxu0 %v865
        %v951 = vpop.f32.mrf.mxu0
        %v952 = vadd.f32 0.0, %v951
        %v953 = vpop.f32.mrf.mxu0
        %v954 = vadd.f32 0.0, %v953
        %955 = vdwg.mxu0
        %v956 = vadd.f32 %v834, %v934
        %v957 = vadd.f32 %v835, %v936
        %v958 = vadd.f32 %v836, %v940
        %v959 = vadd.f32 %v837, %v942
        %v960 = vadd.f32 %v838, %v946
        %v961 = vadd.f32 %v839, %v948
        %v962 = vadd.f32 %v840, %v952
        %v963 = vadd.f32 %v841, %v954
        %s964 = scalar_lea.vmem %s1, 256
        %v965 = vld [vmem:[%s964] sm:$0xff]
        %v966 = vld [vmem:[%s964 + $0x8] sm:$0xff]
        %v967 = vld [vmem:[%s964 + $0x10] sm:$0xff]
        %v968 = vld [vmem:[%s964 + $0x18] sm:$0xff]
        %v969 = vld [vmem:[%s964 + $0x20] sm:$0xff]
        %v970 = vld [vmem:[%s964 + $0x28] sm:$0xff]
        %v971 = vld [vmem:[%s964 + $0x30] sm:$0xff]
        %v972 = vld [vmem:[%s964 + $0x38] sm:$0xff]
        %vm973 = vcmask 1043456
        %v974 = vrot.slane %v492, 4
        %v975 = vrot.slane %v493, 4
        %v976 = vsel %vm973, %v974, %v975
        %v977 = vrot.slane %v494, 4
        %v978 = vsel %vm973, %v975, %v977
        %v979 = vrot.slane %v495, 4
        %v980 = vsel %vm973, %v977, %v979
        %v981 = vsel %vm525, %v976, 0
        %v983 = vsel %vm525, %v978, 0
        %v985 = vsel %vm525, %v980, 0
        %v987 = vsel %vm525, %v979, 0
        %989 = vmatprep.subr.mxu0 0.0
        %990 = vmatpush1.msra.mxu0 0.0
        %991 = vmatprep.subr.mxu0 0.0
        %992 = vmatpush1.msra.mxu0 0.0
        %993 = vmatprep.subr.mxu0 0.0
        %994 = vmatpush1.msra.mxu0 0.0
        %995 = vmatprep.subr.mxu0 0.0
        %996 = vmatpush1.msra.mxu0 0.0
        %997 = vmatprep.subr.mxu0 0.0
        %998 = vmatpush1.msra.mxu0 0.0
        %999 = vmatprep.subr.mxu0 0.0
        %1000 = vmatpush1.msra.mxu0 0.0
        %1001 = vmatprep.subr.mxu0 0.0
        %1002 = vmatpush1.msra.mxu0 0.0
        %1003 = vmatprep.subr.mxu0 0.0
        %1004 = vmatpush1.msra.mxu0 0.0
        %1005 = vmatprep.subr.mxu0 0.0
        %1006 = vmatpush1.msra.mxu0 0.0
        %1007 = vmatprep.subr.mxu0 0.0
        %1008 = vmatpush1.msra.mxu0 0.0
        %1009 = vmatprep.subr.mxu0 0.0
        %1010 = vmatpush1.msra.mxu0 0.0
        %1011 = vmatprep.subr.mxu0 0.0
        %1012 = vmatpush1.msra.mxu0 0.0
        %1013 = vmatprep.subr.mxu0 %v972
        %1014 = vmatpush1.msra.mxu0 %v971
        %1015 = vmatprep.subr.mxu0 %v970
        %1016 = vmatpush1.msra.mxu0 %v969
        %1017 = vmatprep.subr.mxu0 %v968
        %1018 = vmatpush1.msra.mxu0 %v967
        %1019 = vmatprep.subr.mxu0 %v966
        %1020 = vmatpush1.msra.mxu0 %v965
        %1021 = vmatprep.subr.mxu0 0.0
        %1022 = vmatpush2.msra.mxu0 0.0
        %1023 = vmatprep.subr.mxu0 0.0
        %1024 = vmatpush2.msra.mxu0 0.0
        %1025 = vmatprep.subr.mxu0 0.0
        %1026 = vmatpush2.msra.mxu0 0.0
        %1027 = vmatprep.subr.mxu0 0.0
        %1028 = vmatpush2.msra.mxu0 0.0
        %1029 = vmatprep.subr.mxu0 0.0
        %1030 = vmatpush2.msra.mxu0 0.0
        %1031 = vmatprep.subr.mxu0 0.0
        %1032 = vmatpush2.msra.mxu0 0.0
        %1033 = vmatprep.subr.mxu0 0.0
        %1034 = vmatpush2.msra.mxu0 0.0
        %1035 = vmatprep.subr.mxu0 0.0
        %1036 = vmatpush2.msra.mxu0 0.0
        %1037 = vmatprep.subr.mxu0 0.0
        %1038 = vmatpush2.msra.mxu0 0.0
        %1039 = vmatprep.subr.mxu0 0.0
        %1040 = vmatpush2.msra.mxu0 0.0
        %1041 = vmatprep.subr.mxu0 0.0
        %1042 = vmatpush2.msra.mxu0 0.0
        %1043 = vmatprep.subr.mxu0 0.0
        %1044 = vmatpush2.msra.mxu0 0.0
        %1045 = vmatprep.subr.mxu0 0.0
        %1046 = vmatpush2.msra.mxu0 0.0
        %1047 = vmatprep.subr.mxu0 0.0
        %1048 = vmatpush2.msra.mxu0 0.0
        %1049 = vmatprep.subr.mxu0 0.0
        %1050 = vmatpush2.msra.mxu0 0.0
        %1051 = vmatprep.subr.mxu0 0.0
        %1052 = vmatpush2.msra.mxu0 0.0
        %1053 = vmatprep.mubr.f32.mxu0 0.0
        %1054 = vmatmul.mubr.f32.gmra.mxu0 %v981
        %v1055 = vpop.f32.mrf.mxu0
        %v1056 = vadd.f32 0.0, %v1055
        %v1057 = vpop.f32.mrf.mxu0
        %v1058 = vadd.f32 0.0, %v1057
        %1059 = vmatprep.mubr.f32.mxu0 0.0
        %1060 = vmatmul.mubr.f32.gmra.mxu0 %v983
        %v1061 = vpop.f32.mrf.mxu0
        %v1062 = vadd.f32 0.0, %v1061
        %v1063 = vpop.f32.mrf.mxu0
        %v1064 = vadd.f32 0.0, %v1063
        %1065 = vmatprep.mubr.f32.mxu0 0.0
        %1066 = vmatmul.mubr.f32.gmra.mxu0 %v985
        %v1067 = vpop.f32.mrf.mxu0
        %v1068 = vadd.f32 0.0, %v1067
        %v1069 = vpop.f32.mrf.mxu0
        %v1070 = vadd.f32 0.0, %v1069
        %1071 = vmatprep.mubr.f32.mxu0 0.0
        %1072 = vmatmul.mubr.f32.gmra.mxu0 %v987
        %v1073 = vpop.f32.mrf.mxu0
        %v1074 = vadd.f32 0.0, %v1073
        %v1075 = vpop.f32.mrf.mxu0
        %v1076 = vadd.f32 0.0, %v1075
        %1077 = vdwg.mxu0
        %v1078 = vadd.f32 %v956, %v1056
        %v1079 = vadd.f32 %v957, %v1058
        %v1080 = vadd.f32 %v958, %v1062
        %v1081 = vadd.f32 %v959, %v1064
        %v1082 = vadd.f32 %v960, %v1068
        %v1083 = vadd.f32 %v961, %v1070
        %v1084 = vadd.f32 %v962, %v1074
        %v1085 = vadd.f32 %v963, %v1076
        %v1086 = vld [vmem:[%s2] sm:$0x3]
        %v1088 = vlaneseq
        %v1089 = vshrl.u32 %v1088, 7
        %v1090 = vsub.s32 0, %v1089
        %v1091 = vrot.slane %v1086, %v1090
        %v1092 = vlaneseq
        %v1093 = vshrl.u32 %v1092, 7
        %v1094 = vsub.s32 1, %v1093
        %v1095 = vrot.slane %v1086, %v1094
        %v1098 = vadd.f32 %v1078, %v1091
        %v1099 = vadd.f32 %v1079, %v1095
        %v1100 = vadd.f32 %v1080, %v1091
        %v1101 = vadd.f32 %v1081, %v1095
        %v1102 = vadd.f32 %v1082, %v1091
        %v1103 = vadd.f32 %v1083, %v1095
        %v1104 = vadd.f32 %v1084, %v1091
        %v1105 = vadd.f32 %v1085, %v1095
        %v1106 = vtanh.pop %v1098
        %v1107 = vtanh.pop %v1099
        %v1108 = vtanh.pop %v1100
        %v1109 = vtanh.pop %v1101
        %v1110 = vtanh.pop %v1102
        %v1111 = vtanh.pop %v1103
        %v1112 = vtanh.pop %v1104
        %v1113 = vtanh.pop %v1105
        %v1114 = vld [vmem:[%s3] sm:$0xff]
        %v1115 = vld [vmem:[%s3 + $0x8] sm:$0x3f]
        %vm1116 = vcmask 228352
        %v1118 = vsel %vm1116, %v1114, 0
        %v1121 = vsel %vm1116, %v1115, 0
        %v1124 = vsel %vm973, %v1112, 0
        %v1127 = vsel %vm973, %v1113, 0
        %1129 = vmatprep.subr.mxu0 0.0
        %1130 = vmatpush1.msra.mxu0 0.0
        %1131 = vmatprep.subr.mxu0 0.0
        %1132 = vmatpush1.msra.mxu0 0.0
        %1133 = vmatprep.subr.mxu0 0.0
        %1134 = vmatpush1.msra.mxu0 0.0
        %1135 = vmatprep.subr.mxu0 0.0
        %1136 = vmatpush1.msra.mxu0 0.0
        %1137 = vmatprep.subr.mxu0 0.0
        %1138 = vmatpush1.msra.mxu0 0.0
        %1139 = vmatprep.subr.mxu0 0.0
        %1140 = vmatpush1.msra.mxu0 0.0
        %1141 = vmatprep.subr.mxu0 0.0
        %1142 = vmatpush1.msra.mxu0 0.0
        %1143 = vmatprep.subr.mxu0 0.0
        %1144 = vmatpush1.msra.mxu0 0.0
        %1145 = vmatprep.subr.mxu0 0.0
        %1146 = vmatpush1.msra.mxu0 0.0
        %1147 = vmatprep.subr.mxu0 0.0
        %1148 = vmatpush1.msra.mxu0 0.0
        %1149 = vmatprep.subr.mxu0 0.0
        %1150 = vmatpush1.msra.mxu0 0.0
        %1151 = vmatprep.subr.mxu0 0.0
        %1152 = vmatpush1.msra.mxu0 0.0
        %1153 = vmatprep.subr.mxu0 %v1127
        %1154 = vmatpush1.msra.mxu0 %v1124
        %1155 = vmatprep.subr.mxu0 %v1111
        %1156 = vmatpush1.msra.mxu0 %v1110
        %1157 = vmatprep.subr.mxu0 %v1109
        %1158 = vmatpush1.msra.mxu0 %v1108
        %1159 = vmatprep.subr.mxu0 %v1107
        %1160 = vmatpush1.msra.mxu0 %v1106
        %1161 = vmatprep.subr.mxu0 0.0
        %1162 = vmatpush2.msra.mxu0 0.0
        %1163 = vmatprep.subr.mxu0 0.0
        %1164 = vmatpush2.msra.mxu0 0.0
        %1165 = vmatprep.subr.mxu0 0.0
        %1166 = vmatpush2.msra.mxu0 0.0
        %1167 = vmatprep.subr.mxu0 0.0
        %1168 = vmatpush2.msra.mxu0 0.0
        %1169 = vmatprep.subr.mxu0 0.0
        %1170 = vmatpush2.msra.mxu0 0.0
        %1171 = vmatprep.subr.mxu0 0.0
        %1172 = vmatpush2.msra.mxu0 0.0
        %1173 = vmatprep.subr.mxu0 0.0
        %1174 = vmatpush2.msra.mxu0 0.0
        %1175 = vmatprep.subr.mxu0 0.0
        %1176 = vmatpush2.msra.mxu0 0.0
        %1177 = vmatprep.subr.mxu0 0.0
        %1178 = vmatpush2.msra.mxu0 0.0
        %1179 = vmatprep.subr.mxu0 0.0
        %1180 = vmatpush2.msra.mxu0 0.0
        %1181 = vmatprep.subr.mxu0 0.0
        %1182 = vmatpush2.msra.mxu0 0.0
        %1183 = vmatprep.subr.mxu0 0.0
        %1184 = vmatpush2.msra.mxu0 0.0
        %1185 = vmatprep.subr.mxu0 0.0
        %1186 = vmatpush2.msra.mxu0 0.0
        %1187 = vmatprep.subr.mxu0 0.0
        %1188 = vmatpush2.msra.mxu0 0.0
        %1189 = vmatprep.subr.mxu0 0.0
        %1190 = vmatpush2.msra.mxu0 0.0
        %1191 = vmatprep.subr.mxu0 0.0
        %1192 = vmatpush2.msra.mxu0 0.0
        %1193 = vmatprep.mubr.f32.mxu0 0.0
        %1194 = vmatmul.mubr.f32.gmra.mxu0 %v1118
        %v1195 = vpop.f32.mrf.mxu0
        %v1196 = vadd.f32 0.0, %v1195
        %v1197 = vpop.f32.mrf.mxu0
        %v1198 = vadd.f32 0.0, %v1197
        %1199 = vmatprep.mubr.f32.mxu0 0.0
        %1200 = vmatmul.mubr.f32.gmra.mxu0 %v1121
        %v1201 = vpop.f32.mrf.mxu0
        %v1202 = vadd.f32 0.0, %v1201
        %v1203 = vpop.f32.mrf.mxu0
        %v1204 = vadd.f32 0.0, %v1203
        %1205 = vdwg.mxu0
        %v1206 = vld [vmem:[%s4] sm:$0xff]
        %v1207 = vld [vmem:[%s4 + $0x8] sm:$0xff]
        %v1208 = vld [vmem:[%s4 + $0x10] sm:$0xff]
        %v1209 = vld [vmem:[%s4 + $0x18] sm:$0xff]
        %v1210 = vld [vmem:[%s4 + $0x20] sm:$0xff]
        %v1211 = vld [vmem:[%s4 + $0x28] sm:$0xff]
        %v1212 = vld [vmem:[%s4 + $0x30] sm:$0xff]
        %v1213 = vld [vmem:[%s4 + $0x38] sm:$0xff]
        %v1214 = vld [vmem:[%s4 + $0x40] sm:$0xff]
        %v1215 = vld [vmem:[%s4 + $0x48] sm:$0xff]
        %v1216 = vld [vmem:[%s4 + $0x50] sm:$0xff]
        %v1217 = vld [vmem:[%s4 + $0x58] sm:$0xff]
        %v1218 = vld [vmem:[%s4 + $0x60] sm:$0xff]
        %v1219 = vld [vmem:[%s4 + $0x68] sm:$0xff]
        %v1220 = vld [vmem:[%s4 + $0x70] sm:$0xff]
        %v1221 = vld [vmem:[%s4 + $0x78] sm:$0xff]
        %v1222 = vld [vmem:[%s4 + $0x80] sm:$0xff]
        %v1223 = vld [vmem:[%s4 + $0x88] sm:$0xff]
        %v1224 = vld [vmem:[%s4 + $0x90] sm:$0xff]
        %v1225 = vld [vmem:[%s4 + $0x98] sm:$0xff]
        %v1226 = vld [vmem:[%s4 + $0xa0] sm:$0xff]
        %vm1227 = vcmask 326656
        %v1229 = vsel %vm1227, %v1198, 0
        %v1232 = vsel %vm1227, %v1204, 0
        %1234 = vmatprep.subr.mxu0 0.0
        %1235 = vmatpush1.msra.mxu0 %v1221
        %1236 = vmatprep.subr.mxu0 0.0
        %1237 = vmatpush1.msra.mxu0 %v1220
        %1238 = vmatprep.subr.mxu0 0.0
        %1239 = vmatpush1.msra.mxu0 %v1219
        %1240 = vmatprep.subr.mxu0 0.0
        %1241 = vmatpush1.msra.mxu0 %v1218
        %1242 = vmatprep.subr.mxu0 0.0
        %1243 = vmatpush1.msra.mxu0 %v1217
        %1244 = vmatprep.subr.mxu0 0.0
        %1245 = vmatpush1.msra.mxu0 %v1216
        %1246 = vmatprep.subr.mxu0 0.0
        %1247 = vmatpush1.msra.mxu0 %v1215
        %1248 = vmatprep.subr.mxu0 0.0
        %1249 = vmatpush1.msra.mxu0 %v1214
        %1250 = vmatprep.subr.mxu0 0.0
        %1251 = vmatpush1.msra.mxu0 %v1213
        %1252 = vmatprep.subr.mxu0 0.0
        %1253 = vmatpush1.msra.mxu0 %v1212
        %1254 = vmatprep.subr.mxu0 0.0
        %1255 = vmatpush1.msra.mxu0 %v1211
        %1256 = vmatprep.subr.mxu0 0.0
        %1257 = vmatpush1.msra.mxu0 %v1210
        %1258 = vmatprep.subr.mxu0 0.0
        %1259 = vmatpush1.msra.mxu0 %v1209
        %1260 = vmatprep.subr.mxu0 0.0
        %1261 = vmatpush1.msra.mxu0 %v1208
        %1262 = vmatprep.subr.mxu0 0.0
        %1263 = vmatpush1.msra.mxu0 %v1207
        %1264 = vmatprep.subr.mxu0 0.0
        %1265 = vmatpush1.msra.mxu0 %v1206
        %1266 = vmatprep.subr.mxu0 0.0
        %1267 = vmatpush2.msra.mxu0 0.0
        %1268 = vmatprep.subr.mxu0 0.0
        %1269 = vmatpush2.msra.mxu0 0.0
        %1270 = vmatprep.subr.mxu0 0.0
        %1271 = vmatpush2.msra.mxu0 0.0
        %1272 = vmatprep.subr.mxu0 0.0
        %1273 = vmatpush2.msra.mxu0 0.0
        %1274 = vmatprep.subr.mxu0 0.0
        %1275 = vmatpush2.msra.mxu0 0.0
        %1276 = vmatprep.subr.mxu0 0.0
        %1277 = vmatpush2.msra.mxu0 0.0
        %1278 = vmatprep.subr.mxu0 0.0
        %1279 = vmatpush2.msra.mxu0 0.0
        %1280 = vmatprep.subr.mxu0 0.0
        %1281 = vmatpush2.msra.mxu0 0.0
        %1282 = vmatprep.subr.mxu0 0.0
        %1283 = vmatpush2.msra.mxu0 0.0
        %1284 = vmatprep.subr.mxu0 0.0
        %1285 = vmatpush2.msra.mxu0 0.0
        %1286 = vmatprep.subr.mxu0 0.0
        %1287 = vmatpush2.msra.mxu0 0.0
        %1288 = vmatprep.subr.mxu0 0.0
        %1289 = vmatpush2.msra.mxu0 %v1226
        %1290 = vmatprep.subr.mxu0 0.0
        %1291 = vmatpush2.msra.mxu0 %v1225
        %1292 = vmatprep.subr.mxu0 0.0
        %1293 = vmatpush2.msra.mxu0 %v1224
        %1294 = vmatprep.subr.mxu0 0.0
        %1295 = vmatpush2.msra.mxu0 %v1223
        %1296 = vmatprep.subr.mxu0 0.0
        %1297 = vmatpush2.msra.mxu0 %v1222
        %1298 = vmatprep.mubr.f32.mxu0 %v1229
        %1299 = vmatmul.mubr.f32.gmra.mxu0 %v1196
        %v1300 = vpop.f32.mrf.mxu0
        %v1301 = vadd.f32 0.0, %v1300
        %v1302 = vpop.f32.mrf.mxu0
        %1303 = vmatprep.mubr.f32.mxu0 %v1232
        %1304 = vmatmul.mubr.f32.gmra.mxu0 %v1202
        %v1305 = vpop.f32.mrf.mxu0
        %v1306 = vadd.f32 0.0, %v1305
        %v1307 = vpop.f32.mrf.mxu0
        %1308 = vdwg.mxu0
        %v1309 = vtanh.pop %v1301
        %v1310 = vtanh.pop %v1306
        %v1311 = vld [vmem:[%s5] sm:$0xff]
        %v1312 = vld [vmem:[%s5 + $0x8] sm:$0xff]
        %v1313 = vld [vmem:[%s5 + $0x10] sm:$0xff]
        %v1314 = vld [vmem:[%s5 + $0x18] sm:$0xff]
        %v1315 = vld [vmem:[%s5 + $0x20] sm:$0xff]
        %v1316 = vld [vmem:[%s5 + $0x28] sm:$0xff]
        %v1317 = vld [vmem:[%s5 + $0x30] sm:$0xff]
        %v1318 = vld [vmem:[%s5 + $0x38] sm:$0xff]
        %v1319 = vld [vmem:[%s5 + $0x40] sm:$0xff]
        %v1320 = vld [vmem:[%s5 + $0x48] sm:$0xff]
        %v1321 = vld [vmem:[%s5 + $0x50] sm:$0xff]
        %v1322 = vld [vmem:[%s5 + $0x58] sm:$0xff]
        %v1323 = vld [vmem:[%s5 + $0x60] sm:$0xff]
        %v1324 = vld [vmem:[%s5 + $0x68] sm:$0xff]
        %v1325 = vld [vmem:[%s5 + $0x70] sm:$0xff]
        %v1326 = vld [vmem:[%s5 + $0x78] sm:$0xff]
        %v1327 = vld [vmem:[%s5 + $0x80] sm:$0xff]
        %v1328 = vld [vmem:[%s5 + $0x88] sm:$0xff]
        %v1329 = vld [vmem:[%s5 + $0x90] sm:$0xff]
        %v1330 = vld [vmem:[%s5 + $0x98] sm:$0xff]
        %v1331 = vld [vmem:[%s5 + $0xa0] sm:$0xf]
        %v1332 = vld [vmem:[%s5 + $0xa8] sm:$0xf]
        %s1333 = scalar_lea.vmem %s5, 176
        %v1334 = vld [vmem:[%s1333] sm:$0xff]
        %v1335 = vld [vmem:[%s1333 + $0x8] sm:$0xff]
        %v1336 = vld [vmem:[%s1333 + $0x10] sm:$0xff]
        %v1337 = vld [vmem:[%s1333 + $0x18] sm:$0xff]
        %v1338 = vld [vmem:[%s1333 + $0x20] sm:$0xff]
        %v1339 = vld [vmem:[%s1333 + $0x28] sm:$0xff]
        %v1340 = vld [vmem:[%s1333 + $0x30] sm:$0xff]
        %v1341 = vld [vmem:[%s1333 + $0x38] sm:$0xff]
        %v1342 = vld [vmem:[%s1333 + $0x40] sm:$0xff]
        %v1343 = vld [vmem:[%s1333 + $0x48] sm:$0xff]
        %v1344 = vld [vmem:[%s1333 + $0x50] sm:$0xff]
        %v1345 = vld [vmem:[%s1333 + $0x58] sm:$0xff]
        %v1346 = vld [vmem:[%s1333 + $0x60] sm:$0xff]
        %v1347 = vld [vmem:[%s1333 + $0x68] sm:$0xff]
        %v1348 = vld [vmem:[%s1333 + $0x70] sm:$0xff]
        %v1349 = vld [vmem:[%s1333 + $0x78] sm:$0xff]
        %v1350 = vld [vmem:[%s1333 + $0x80] sm:$0xff]
        %v1351 = vld [vmem:[%s1333 + $0x88] sm:$0xff]
        %v1352 = vld [vmem:[%s1333 + $0x90] sm:$0xff]
        %v1353 = vld [vmem:[%s1333 + $0x98] sm:$0xff]
        %v1354 = vld [vmem:[%s1333 + $0xa0] sm:$0xf]
        %v1355 = vld [vmem:[%s1333 + $0xa8] sm:$0xf]
        %v1358 = vrot.slane %v1309, 1
        %v1359 = vrot.slane %v1310, 1
        %v1360 = vsel %vm517, %v1358, %v1359
        %vm1361 = vcmask 687104
        %v1362 = vsel %vm1361, %v1360, 0
        %v1364 = vsel %vm1361, %v1359, 0
        %v1367 = vsel %vm973, %v1354, 0
        %v1370 = vsel %vm973, %v1355, 0
        %1372 = vmatprep.subr.mxu0 0.0
        %1373 = vmatpush1.msra.mxu0 0.0
        %1374 = vmatprep.subr.mxu0 0.0
        %1375 = vmatpush1.msra.mxu0 0.0
        %1376 = vmatprep.subr.mxu0 0.0
        %1377 = vmatpush1.msra.mxu0 0.0
        %1378 = vmatprep.subr.mxu0 0.0
        %1379 = vmatpush1.msra.mxu0 0.0
        %1380 = vmatprep.subr.mxu0 0.0
        %1381 = vmatpush1.msra.mxu0 0.0
        %1382 = vmatprep.subr.mxu0 %v1370
        %1383 = vmatpush1.msra.mxu0 %v1367
        %1384 = vmatprep.subr.mxu0 %v1353
        %1385 = vmatpush1.msra.mxu0 %v1352
        %1386 = vmatprep.subr.mxu0 %v1351
        %1387 = vmatpush1.msra.mxu0 %v1350
        %1388 = vmatprep.subr.mxu0 %v1349
        %1389 = vmatpush1.msra.mxu0 %v1348
        %1390 = vmatprep.subr.mxu0 %v1347
        %1391 = vmatpush1.msra.mxu0 %v1346
        %1392 = vmatprep.subr.mxu0 %v1345
        %1393 = vmatpush1.msra.mxu0 %v1344
        %1394 = vmatprep.subr.mxu0 %v1343
        %1395 = vmatpush1.msra.mxu0 %v1342
        %1396 = vmatprep.subr.mxu0 %v1341
        %1397 = vmatpush1.msra.mxu0 %v1340
        %1398 = vmatprep.subr.mxu0 %v1339
        %1399 = vmatpush1.msra.mxu0 %v1338
        %1400 = vmatprep.subr.mxu0 %v1337
        %1401 = vmatpush1.msra.mxu0 %v1336
        %1402 = vmatprep.subr.mxu0 %v1335
        %1403 = vmatpush1.msra.mxu0 %v1334
        %1404 = vmatprep.subr.mxu0 0.0
        %1405 = vmatpush2.msra.mxu0 0.0
        %1406 = vmatprep.subr.mxu0 0.0
        %1407 = vmatpush2.msra.mxu0 0.0
        %1408 = vmatprep.subr.mxu0 0.0
        %1409 = vmatpush2.msra.mxu0 0.0
        %1410 = vmatprep.subr.mxu0 0.0
        %1411 = vmatpush2.msra.mxu0 0.0
        %1412 = vmatprep.subr.mxu0 0.0
        %1413 = vmatpush2.msra.mxu0 0.0
        %1414 = vmatprep.subr.mxu0 0.0
        %1415 = vmatpush2.msra.mxu0 0.0
        %1416 = vmatprep.subr.mxu0 0.0
        %1417 = vmatpush2.msra.mxu0 0.0
        %1418 = vmatprep.subr.mxu0 0.0
        %1419 = vmatpush2.msra.mxu0 0.0
        %1420 = vmatprep.subr.mxu0 0.0
        %1421 = vmatpush2.msra.mxu0 0.0
        %1422 = vmatprep.subr.mxu0 0.0
        %1423 = vmatpush2.msra.mxu0 0.0
        %1424 = vmatprep.subr.mxu0 0.0
        %1425 = vmatpush2.msra.mxu0 0.0
        %1426 = vmatprep.subr.mxu0 0.0
        %1427 = vmatpush2.msra.mxu0 0.0
        %1428 = vmatprep.subr.mxu0 0.0
        %1429 = vmatpush2.msra.mxu0 0.0
        %1430 = vmatprep.subr.mxu0 0.0
        %1431 = vmatpush2.msra.mxu0 0.0
        %1432 = vmatprep.subr.mxu0 0.0
        %1433 = vmatpush2.msra.mxu0 0.0
        %1434 = vmatprep.subr.mxu0 0.0
        %1435 = vmatpush2.msra.mxu0 0.0
        %1436 = vmatprep.mubr.f32.mxu0 0.0
        %1437 = vmatmul.mubr.f32.gmra.mxu0 %v1362
        %v1438 = vpop.f32.mrf.mxu0
        %v1439 = vadd.f32 0.0, %v1438
        %v1440 = vpop.f32.mrf.mxu0
        %v1441 = vadd.f32 0.0, %v1440
        %1442 = vmatprep.mubr.f32.mxu0 0.0
        %1443 = vmatmul.mubr.f32.gmra.mxu0 %v1364
        %v1444 = vpop.f32.mrf.mxu0
        %v1445 = vadd.f32 0.0, %v1444
        %v1446 = vpop.f32.mrf.mxu0
        %v1447 = vadd.f32 0.0, %v1446
        %1448 = vdwg.mxu0
        %v1449 = vsel %vm1361, %v1309, 0
        %v1451 = vsel %vm1361, %v1310, 0
        %v1454 = vsel %vm973, %v1331, 0
        %v1457 = vsel %vm973, %v1332, 0
        %1459 = vmatprep.subr.mxu0 0.0
        %1460 = vmatpush1.msra.mxu0 0.0
        %1461 = vmatprep.subr.mxu0 0.0
        %1462 = vmatpush1.msra.mxu0 0.0
        %1463 = vmatprep.subr.mxu0 0.0
        %1464 = vmatpush1.msra.mxu0 0.0
        %1465 = vmatprep.subr.mxu0 0.0
        %1466 = vmatpush1.msra.mxu0 0.0
        %1467 = vmatprep.subr.mxu0 0.0
        %1468 = vmatpush1.msra.mxu0 0.0
        %1469 = vmatprep.subr.mxu0 %v1457
        %1470 = vmatpush1.msra.mxu0 %v1454
        %1471 = vmatprep.subr.mxu0 %v1330
        %1472 = vmatpush1.msra.mxu0 %v1329
        %1473 = vmatprep.subr.mxu0 %v1328
        %1474 = vmatpush1.msra.mxu0 %v1327
        %1475 = vmatprep.subr.mxu0 %v1326
        %1476 = vmatpush1.msra.mxu0 %v1325
        %1477 = vmatprep.subr.mxu0 %v1324
        %1478 = vmatpush1.msra.mxu0 %v1323
        %1479 = vmatprep.subr.mxu0 %v1322
        %1480 = vmatpush1.msra.mxu0 %v1321
        %1481 = vmatprep.subr.mxu0 %v1320
        %1482 = vmatpush1.msra.mxu0 %v1319
        %1483 = vmatprep.subr.mxu0 %v1318
        %1484 = vmatpush1.msra.mxu0 %v1317
        %1485 = vmatprep.subr.mxu0 %v1316
        %1486 = vmatpush1.msra.mxu0 %v1315
        %1487 = vmatprep.subr.mxu0 %v1314
        %1488 = vmatpush1.msra.mxu0 %v1313
        %1489 = vmatprep.subr.mxu0 %v1312
        %1490 = vmatpush1.msra.mxu0 %v1311
        %1491 = vmatprep.subr.mxu0 0.0
        %1492 = vmatpush2.msra.mxu0 0.0
        %1493 = vmatprep.subr.mxu0 0.0
        %1494 = vmatpush2.msra.mxu0 0.0
        %1495 = vmatprep.subr.mxu0 0.0
        %1496 = vmatpush2.msra.mxu0 0.0
        %1497 = vmatprep.subr.mxu0 0.0
        %1498 = vmatpush2.msra.mxu0 0.0
        %1499 = vmatprep.subr.mxu0 0.0
        %1500 = vmatpush2.msra.mxu0 0.0
        %1501 = vmatprep.subr.mxu0 0.0
        %1502 = vmatpush2.msra.mxu0 0.0
        %1503 = vmatprep.subr.mxu0 0.0
        %1504 = vmatpush2.msra.mxu0 0.0
        %1505 = vmatprep.subr.mxu0 0.0
        %1506 = vmatpush2.msra.mxu0 0.0
        %1507 = vmatprep.subr.mxu0 0.0
        %1508 = vmatpush2.msra.mxu0 0.0
        %1509 = vmatprep.subr.mxu0 0.0
        %1510 = vmatpush2.msra.mxu0 0.0
        %1511 = vmatprep.subr.mxu0 0.0
        %1512 = vmatpush2.msra.mxu0 0.0
        %1513 = vmatprep.subr.mxu0 0.0
        %1514 = vmatpush2.msra.mxu0 0.0
        %1515 = vmatprep.subr.mxu0 0.0
        %1516 = vmatpush2.msra.mxu0 0.0
        %1517 = vmatprep.subr.mxu0 0.0
        %1518 = vmatpush2.msra.mxu0 0.0
        %1519 = vmatprep.subr.mxu0 0.0
        %1520 = vmatpush2.msra.mxu0 0.0
        %1521 = vmatprep.subr.mxu0 0.0
        %1522 = vmatpush2.msra.mxu0 0.0
        %1523 = vmatprep.mubr.f32.mxu0 0.0
        %1524 = vmatmul.mubr.f32.gmra.mxu0 %v1449
        %v1525 = vpop.f32.mrf.mxu0
        %v1526 = vadd.f32 %v1439, %v1525
        %v1527 = vpop.f32.mrf.mxu0
        %v1528 = vadd.f32 %v1441, %v1527
        %1529 = vmatprep.mubr.f32.mxu0 0.0
        %1530 = vmatmul.mubr.f32.gmra.mxu0 %v1451
        %v1531 = vpop.f32.mrf.mxu0
        %v1532 = vadd.f32 %v1445, %v1531
        %v1533 = vpop.f32.mrf.mxu0
        %v1534 = vadd.f32 %v1447, %v1533
        %1535 = vdwg.mxu0
        %s1536 = scalar_lea.vmem %s5, 352
        %v1537 = vld [vmem:[%s1536] sm:$0xff]
        %v1538 = vld [vmem:[%s1536 + $0x8] sm:$0xff]
        %v1539 = vld [vmem:[%s1536 + $0x10] sm:$0xff]
        %v1540 = vld [vmem:[%s1536 + $0x18] sm:$0xff]
        %v1541 = vld [vmem:[%s1536 + $0x20] sm:$0xff]
        %v1542 = vld [vmem:[%s1536 + $0x28] sm:$0xff]
        %v1543 = vld [vmem:[%s1536 + $0x30] sm:$0xff]
        %v1544 = vld [vmem:[%s1536 + $0x38] sm:$0xff]
        %v1545 = vld [vmem:[%s1536 + $0x40] sm:$0xff]
        %v1546 = vld [vmem:[%s1536 + $0x48] sm:$0xff]
        %v1547 = vld [vmem:[%s1536 + $0x50] sm:$0xff]
        %v1548 = vld [vmem:[%s1536 + $0x58] sm:$0xff]
        %v1549 = vld [vmem:[%s1536 + $0x60] sm:$0xff]
        %v1550 = vld [vmem:[%s1536 + $0x68] sm:$0xff]
        %v1551 = vld [vmem:[%s1536 + $0x70] sm:$0xff]
        %v1552 = vld [vmem:[%s1536 + $0x78] sm:$0xff]
        %v1553 = vld [vmem:[%s1536 + $0x80] sm:$0xff]
        %v1554 = vld [vmem:[%s1536 + $0x88] sm:$0xff]
        %v1555 = vld [vmem:[%s1536 + $0x90] sm:$0xff]
        %v1556 = vld [vmem:[%s1536 + $0x98] sm:$0xff]
        %v1557 = vld [vmem:[%s1536 + $0xa0] sm:$0xf]
        %v1558 = vld [vmem:[%s1536 + $0xa8] sm:$0xf]
        %v1559 = vrot.slane %v1309, 2
        %v1560 = vrot.slane %v1310, 2
        %v1561 = vsel %vm729, %v1559, %v1560
        %v1562 = vsel %vm1361, %v1561, 0
        %v1564 = vsel %vm1361, %v1560, 0
        %v1567 = vsel %vm973, %v1557, 0
        %v1570 = vsel %vm973, %v1558, 0
        %1572 = vmatprep.subr.mxu0 0.0
        %1573 = vmatpush1.msra.mxu0 0.0
        %1574 = vmatprep.subr.mxu0 0.0
        %1575 = vmatpush1.msra.mxu0 0.0
        %1576 = vmatprep.subr.mxu0 0.0
        %1577 = vmatpush1.msra.mxu0 0.0
        %1578 = vmatprep.subr.mxu0 0.0
        %1579 = vmatpush1.msra.mxu0 0.0
        %1580 = vmatprep.subr.mxu0 0.0
        %1581 = vmatpush1.msra.mxu0 0.0
        %1582 = vmatprep.subr.mxu0 %v1570
        %1583 = vmatpush1.msra.mxu0 %v1567
        %1584 = vmatprep.subr.mxu0 %v1556
        %1585 = vmatpush1.msra.mxu0 %v1555
        %1586 = vmatprep.subr.mxu0 %v1554
        %1587 = vmatpush1.msra.mxu0 %v1553
        %1588 = vmatprep.subr.mxu0 %v1552
        %1589 = vmatpush1.msra.mxu0 %v1551
        %1590 = vmatprep.subr.mxu0 %v1550
        %1591 = vmatpush1.msra.mxu0 %v1549
        %1592 = vmatprep.subr.mxu0 %v1548
        %1593 = vmatpush1.msra.mxu0 %v1547
        %1594 = vmatprep.subr.mxu0 %v1546
        %1595 = vmatpush1.msra.mxu0 %v1545
        %1596 = vmatprep.subr.mxu0 %v1544
        %1597 = vmatpush1.msra.mxu0 %v1543
        %1598 = vmatprep.subr.mxu0 %v1542
        %1599 = vmatpush1.msra.mxu0 %v1541
        %1600 = vmatprep.subr.mxu0 %v1540
        %1601 = vmatpush1.msra.mxu0 %v1539
        %1602 = vmatprep.subr.mxu0 %v1538
        %1603 = vmatpush1.msra.mxu0 %v1537
        %1604 = vmatprep.subr.mxu0 0.0
        %1605 = vmatpush2.msra.mxu0 0.0
        %1606 = vmatprep.subr.mxu0 0.0
        %1607 = vmatpush2.msra.mxu0 0.0
        %1608 = vmatprep.subr.mxu0 0.0
        %1609 = vmatpush2.msra.mxu0 0.0
        %1610 = vmatprep.subr.mxu0 0.0
        %1611 = vmatpush2.msra.mxu0 0.0
        %1612 = vmatprep.subr.mxu0 0.0
        %1613 = vmatpush2.msra.mxu0 0.0
        %1614 = vmatprep.subr.mxu0 0.0
        %1615 = vmatpush2.msra.mxu0 0.0
        %1616 = vmatprep.subr.mxu0 0.0
        %1617 = vmatpush2.msra.mxu0 0.0
        %1618 = vmatprep.subr.mxu0 0.0
        %1619 = vmatpush2.msra.mxu0 0.0
        %1620 = vmatprep.subr.mxu0 0.0
        %1621 = vmatpush2.msra.mxu0 0.0
        %1622 = vmatprep.subr.mxu0 0.0
        %1623 = vmatpush2.msra.mxu0 0.0
        %1624 = vmatprep.subr.mxu0 0.0
        %1625 = vmatpush2.msra.mxu0 0.0
        %1626 = vmatprep.subr.mxu0 0.0
        %1627 = vmatpush2.msra.mxu0 0.0
        %1628 = vmatprep.subr.mxu0 0.0
        %1629 = vmatpush2.msra.mxu0 0.0
        %1630 = vmatprep.subr.mxu0 0.0
        %1631 = vmatpush2.msra.mxu0 0.0
        %1632 = vmatprep.subr.mxu0 0.0
        %1633 = vmatpush2.msra.mxu0 0.0
        %1634 = vmatprep.subr.mxu0 0.0
        %1635 = vmatpush2.msra.mxu0 0.0
        %1636 = vmatprep.mubr.f32.mxu0 0.0
        %1637 = vmatmul.mubr.f32.gmra.mxu0 %v1562
        %v1638 = vpop.f32.mrf.mxu0
        %v1639 = vadd.f32 0.0, %v1638
        %v1640 = vpop.f32.mrf.mxu0
        %v1641 = vadd.f32 0.0, %v1640
        %1642 = vmatprep.mubr.f32.mxu0 0.0
        %1643 = vmatmul.mubr.f32.gmra.mxu0 %v1564
        %v1644 = vpop.f32.mrf.mxu0
        %v1645 = vadd.f32 0.0, %v1644
        %v1646 = vpop.f32.mrf.mxu0
        %v1647 = vadd.f32 0.0, %v1646
        %1648 = vdwg.mxu0
        %v1649 = vadd.f32 %v1526, %v1639
        %v1650 = vadd.f32 %v1528, %v1641
        %v1651 = vadd.f32 %v1532, %v1645
        %v1652 = vadd.f32 %v1534, %v1647
        %s1653 = scalar_lea.vmem %s5, 528
        %v1654 = vld [vmem:[%s1653] sm:$0xff]
        %v1655 = vld [vmem:[%s1653 + $0x8] sm:$0xff]
        %v1656 = vld [vmem:[%s1653 + $0x10] sm:$0xff]
        %v1657 = vld [vmem:[%s1653 + $0x18] sm:$0xff]
        %v1658 = vld [vmem:[%s1653 + $0x20] sm:$0xff]
        %v1659 = vld [vmem:[%s1653 + $0x28] sm:$0xff]
        %v1660 = vld [vmem:[%s1653 + $0x30] sm:$0xff]
        %v1661 = vld [vmem:[%s1653 + $0x38] sm:$0xff]
        %v1662 = vld [vmem:[%s1653 + $0x40] sm:$0xff]
        %v1663 = vld [vmem:[%s1653 + $0x48] sm:$0xff]
        %v1664 = vld [vmem:[%s1653 + $0x50] sm:$0xff]
        %v1665 = vld [vmem:[%s1653 + $0x58] sm:$0xff]
        %v1666 = vld [vmem:[%s1653 + $0x60] sm:$0xff]
        %v1667 = vld [vmem:[%s1653 + $0x68] sm:$0xff]
        %v1668 = vld [vmem:[%s1653 + $0x70] sm:$0xff]
        %v1669 = vld [vmem:[%s1653 + $0x78] sm:$0xff]
        %v1670 = vld [vmem:[%s1653 + $0x80] sm:$0xff]
        %v1671 = vld [vmem:[%s1653 + $0x88] sm:$0xff]
        %v1672 = vld [vmem:[%s1653 + $0x90] sm:$0xff]
        %v1673 = vld [vmem:[%s1653 + $0x98] sm:$0xff]
        %v1674 = vld [vmem:[%s1653 + $0xa0] sm:$0xf]
        %v1675 = vld [vmem:[%s1653 + $0xa8] sm:$0xf]
        %v1676 = vrot.slane %v1309, 3
        %v1677 = vrot.slane %v1310, 3
        %v1678 = vsel %vm851, %v1676, %v1677
        %v1679 = vsel %vm1361, %v1678, 0
        %v1681 = vsel %vm1361, %v1677, 0
        %v1684 = vsel %vm973, %v1674, 0
        %v1687 = vsel %vm973, %v1675, 0
        %1689 = vmatprep.subr.mxu0 0.0
        %1690 = vmatpush1.msra.mxu0 0.0
        %1691 = vmatprep.subr.mxu0 0.0
        %1692 = vmatpush1.msra.mxu0 0.0
        %1693 = vmatprep.subr.mxu0 0.0
        %1694 = vmatpush1.msra.mxu0 0.0
        %1695 = vmatprep.subr.mxu0 0.0
        %1696 = vmatpush1.msra.mxu0 0.0
        %1697 = vmatprep.subr.mxu0 0.0
        %1698 = vmatpush1.msra.mxu0 0.0
        %1699 = vmatprep.subr.mxu0 %v1687
        %1700 = vmatpush1.msra.mxu0 %v1684
        %1701 = vmatprep.subr.mxu0 %v1673
        %1702 = vmatpush1.msra.mxu0 %v1672
        %1703 = vmatprep.subr.mxu0 %v1671
        %1704 = vmatpush1.msra.mxu0 %v1670
        %1705 = vmatprep.subr.mxu0 %v1669
        %1706 = vmatpush1.msra.mxu0 %v1668
        %1707 = vmatprep.subr.mxu0 %v1667
        %1708 = vmatpush1.msra.mxu0 %v1666
        %1709 = vmatprep.subr.mxu0 %v1665
        %1710 = vmatpush1.msra.mxu0 %v1664
        %1711 = vmatprep.subr.mxu0 %v1663
        %1712 = vmatpush1.msra.mxu0 %v1662
        %1713 = vmatprep.subr.mxu0 %v1661
        %1714 = vmatpush1.msra.mxu0 %v1660
        %1715 = vmatprep.subr.mxu0 %v1659
        %1716 = vmatpush1.msra.mxu0 %v1658
        %1717 = vmatprep.subr.mxu0 %v1657
        %1718 = vmatpush1.msra.mxu0 %v1656
        %1719 = vmatprep.subr.mxu0 %v1655
        %1720 = vmatpush1.msra.mxu0 %v1654
        %1721 = vmatprep.subr.mxu0 0.0
        %1722 = vmatpush2.msra.mxu0 0.0
        %1723 = vmatprep.subr.mxu0 0.0
        %1724 = vmatpush2.msra.mxu0 0.0
        %1725 = vmatprep.subr.mxu0 0.0
        %1726 = vmatpush2.msra.mxu0 0.0
        %1727 = vmatprep.subr.mxu0 0.0
        %1728 = vmatpush2.msra.mxu0 0.0
        %1729 = vmatprep.subr.mxu0 0.0
        %1730 = vmatpush2.msra.mxu0 0.0
        %1731 = vmatprep.subr.mxu0 0.0
        %1732 = vmatpush2.msra.mxu0 0.0
        %1733 = vmatprep.subr.mxu0 0.0
        %1734 = vmatpush2.msra.mxu0 0.0
        %1735 = vmatprep.subr.mxu0 0.0
        %1736 = vmatpush2.msra.mxu0 0.0
        %1737 = vmatprep.subr.mxu0 0.0
        %1738 = vmatpush2.msra.mxu0 0.0
        %1739 = vmatprep.subr.mxu0 0.0
        %1740 = vmatpush2.msra.mxu0 0.0
        %1741 = vmatprep.subr.mxu0 0.0
        %1742 = vmatpush2.msra.mxu0 0.0
        %1743 = vmatprep.subr.mxu0 0.0
        %1744 = vmatpush2.msra.mxu0 0.0
        %1745 = vmatprep.subr.mxu0 0.0
        %1746 = vmatpush2.msra.mxu0 0.0
        %1747 = vmatprep.subr.mxu0 0.0
        %1748 = vmatpush2.msra.mxu0 0.0
        %1749 = vmatprep.subr.mxu0 0.0
        %1750 = vmatpush2.msra.mxu0 0.0
        %1751 = vmatprep.subr.mxu0 0.0
        %1752 = vmatpush2.msra.mxu0 0.0
        %1753 = vmatprep.mubr.f32.mxu0 0.0
        %1754 = vmatmul.mubr.f32.gmra.mxu0 %v1679
        %v1755 = vpop.f32.mrf.mxu0
        %v1756 = vadd.f32 0.0, %v1755
        %v1757 = vpop.f32.mrf.mxu0
        %v1758 = vadd.f32 0.0, %v1757
        %1759 = vmatprep.mubr.f32.mxu0 0.0
        %1760 = vmatmul.mubr.f32.gmra.mxu0 %v1681
        %v1761 = vpop.f32.mrf.mxu0
        %v1762 = vadd.f32 0.0, %v1761
        %v1763 = vpop.f32.mrf.mxu0
        %v1764 = vadd.f32 0.0, %v1763
        %1765 = vdwg.mxu0
        %v1766 = vadd.f32 %v1649, %v1756
        %v1767 = vadd.f32 %v1650, %v1758
        %v1768 = vadd.f32 %v1651, %v1762
        %v1769 = vadd.f32 %v1652, %v1764
        %s1770 = scalar_lea.vmem %s5, 704
        %v1771 = vld [vmem:[%s1770] sm:$0xff]
        %v1772 = vld [vmem:[%s1770 + $0x8] sm:$0xff]
        %v1773 = vld [vmem:[%s1770 + $0x10] sm:$0xff]
        %v1774 = vld [vmem:[%s1770 + $0x18] sm:$0xff]
        %v1775 = vld [vmem:[%s1770 + $0x20] sm:$0xff]
        %v1776 = vld [vmem:[%s1770 + $0x28] sm:$0xff]
        %v1777 = vld [vmem:[%s1770 + $0x30] sm:$0xff]
        %v1778 = vld [vmem:[%s1770 + $0x38] sm:$0xff]
        %v1779 = vld [vmem:[%s1770 + $0x40] sm:$0xff]
        %v1780 = vld [vmem:[%s1770 + $0x48] sm:$0xff]
        %v1781 = vld [vmem:[%s1770 + $0x50] sm:$0xff]
        %v1782 = vld [vmem:[%s1770 + $0x58] sm:$0xff]
        %v1783 = vld [vmem:[%s1770 + $0x60] sm:$0xff]
        %v1784 = vld [vmem:[%s1770 + $0x68] sm:$0xff]
        %v1785 = vld [vmem:[%s1770 + $0x70] sm:$0xff]
        %v1786 = vld [vmem:[%s1770 + $0x78] sm:$0xff]
        %v1787 = vld [vmem:[%s1770 + $0x80] sm:$0xff]
        %v1788 = vld [vmem:[%s1770 + $0x88] sm:$0xff]
        %v1789 = vld [vmem:[%s1770 + $0x90] sm:$0xff]
        %v1790 = vld [vmem:[%s1770 + $0x98] sm:$0xff]
        %v1791 = vld [vmem:[%s1770 + $0xa0] sm:$0xf]
        %v1792 = vld [vmem:[%s1770 + $0xa8] sm:$0xf]
        %v1793 = vrot.slane %v1309, 4
        %v1794 = vrot.slane %v1310, 4
        %v1795 = vsel %vm973, %v1793, %v1794
        %v1796 = vsel %vm1361, %v1795, 0
        %v1798 = vsel %vm1361, %v1794, 0
        %v1801 = vsel %vm973, %v1791, 0
        %v1804 = vsel %vm973, %v1792, 0
        %1806 = vmatprep.subr.mxu0 0.0
        %1807 = vmatpush1.msra.mxu0 0.0
        %1808 = vmatprep.subr.mxu0 0.0
        %1809 = vmatpush1.msra.mxu0 0.0
        %1810 = vmatprep.subr.mxu0 0.0
        %1811 = vmatpush1.msra.mxu0 0.0
        %1812 = vmatprep.subr.mxu0 0.0
        %1813 = vmatpush1.msra.mxu0 0.0
        %1814 = vmatprep.subr.mxu0 0.0
        %1815 = vmatpush1.msra.mxu0 0.0
        %1816 = vmatprep.subr.mxu0 %v1804
        %1817 = vmatpush1.msra.mxu0 %v1801
        %1818 = vmatprep.subr.mxu0 %v1790
        %1819 = vmatpush1.msra.mxu0 %v1789
        %1820 = vmatprep.subr.mxu0 %v1788
        %1821 = vmatpush1.msra.mxu0 %v1787
        %1822 = vmatprep.subr.mxu0 %v1786
        %1823 = vmatpush1.msra.mxu0 %v1785
        %1824 = vmatprep.subr.mxu0 %v1784
        %1825 = vmatpush1.msra.mxu0 %v1783
        %1826 = vmatprep.subr.mxu0 %v1782
        %1827 = vmatpush1.msra.mxu0 %v1781
        %1828 = vmatprep.subr.mxu0 %v1780
        %1829 = vmatpush1.msra.mxu0 %v1779
        %1830 = vmatprep.subr.mxu0 %v1778
        %1831 = vmatpush1.msra.mxu0 %v1777
        %1832 = vmatprep.subr.mxu0 %v1776
        %1833 = vmatpush1.msra.mxu0 %v1775
        %1834 = vmatprep.subr.mxu0 %v1774
        %1835 = vmatpush1.msra.mxu0 %v1773
        %1836 = vmatprep.subr.mxu0 %v1772
        %1837 = vmatpush1.msra.mxu0 %v1771
        %1838 = vmatprep.subr.mxu0 0.0
        %1839 = vmatpush2.msra.mxu0 0.0
        %1840 = vmatprep.subr.mxu0 0.0
        %1841 = vmatpush2.msra.mxu0 0.0
        %1842 = vmatprep.subr.mxu0 0.0
        %1843 = vmatpush2.msra.mxu0 0.0
        %1844 = vmatprep.subr.mxu0 0.0
        %1845 = vmatpush2.msra.mxu0 0.0
        %1846 = vmatprep.subr.mxu0 0.0
        %1847 = vmatpush2.msra.mxu0 0.0
        %1848 = vmatprep.subr.mxu0 0.0
        %1849 = vmatpush2.msra.mxu0 0.0
        %1850 = vmatprep.subr.mxu0 0.0
        %1851 = vmatpush2.msra.mxu0 0.0
        %1852 = vmatprep.subr.mxu0 0.0
        %1853 = vmatpush2.msra.mxu0 0.0
        %1854 = vmatprep.subr.mxu0 0.0
        %1855 = vmatpush2.msra.mxu0 0.0
        %1856 = vmatprep.subr.mxu0 0.0
        %1857 = vmatpush2.msra.mxu0 0.0
        %1858 = vmatprep.subr.mxu0 0.0
        %1859 = vmatpush2.msra.mxu0 0.0
        %1860 = vmatprep.subr.mxu0 0.0
        %1861 = vmatpush2.msra.mxu0 0.0
        %1862 = vmatprep.subr.mxu0 0.0
        %1863 = vmatpush2.msra.mxu0 0.0
        %1864 = vmatprep.subr.mxu0 0.0
        %1865 = vmatpush2.msra.mxu0 0.0
        %1866 = vmatprep.subr.mxu0 0.0
        %1867 = vmatpush2.msra.mxu0 0.0
        %1868 = vmatprep.subr.mxu0 0.0
        %1869 = vmatpush2.msra.mxu0 0.0
        %1870 = vmatprep.mubr.f32.mxu0 0.0
        %1871 = vmatmul.mubr.f32.gmra.mxu0 %v1796
        %v1872 = vpop.f32.mrf.mxu0
        %v1873 = vadd.f32 0.0, %v1872
        %v1874 = vpop.f32.mrf.mxu0
        %v1875 = vadd.f32 0.0, %v1874
        %1876 = vmatprep.mubr.f32.mxu0 0.0
        %1877 = vmatmul.mubr.f32.gmra.mxu0 %v1798
        %v1878 = vpop.f32.mrf.mxu0
        %v1879 = vadd.f32 0.0, %v1878
        %v1880 = vpop.f32.mrf.mxu0
        %v1881 = vadd.f32 0.0, %v1880
        %1882 = vdwg.mxu0
        %v1883 = vadd.f32 %v1766, %v1873
        %v1884 = vadd.f32 %v1767, %v1875
        %v1885 = vadd.f32 %v1768, %v1879
        %v1886 = vadd.f32 %v1769, %v1881
        %v1887 = vld [vmem:[%s6] sm:$0x3]
        %v1889 = vlaneseq
        %v1890 = vshrl.u32 %v1889, 7
        %v1891 = vsub.s32 0, %v1890
        %v1892 = vrot.slane %v1887, %v1891
        %v1893 = vlaneseq
        %v1894 = vshrl.u32 %v1893, 7
        %v1895 = vsub.s32 1, %v1894
        %v1896 = vrot.slane %v1887, %v1895
        %v1899 = vadd.f32 %v1883, %v1892
        %v1900 = vadd.f32 %v1884, %v1896
        %v1901 = vadd.f32 %v1885, %v1892
        %v1902 = vadd.f32 %v1886, %v1896
        %v1903 = vtanh.pop %v1899
        %v1904 = vtanh.pop %v1900
        %v1905 = vtanh.pop %v1901
        %v1906 = vtanh.pop %v1902
        %v1907 = vld [vmem:[%s7] sm:$0x1f]
        %vm1908 = vcmask 80896
        %v1910 = vsel %vm1908, %v1907, 0
        %vm1912 = vcmask 1041408
        %v1914 = vsel %vm1912, %v1905, 0
        %v1917 = vsel %vm1912, %v1906, 0
        %1919 = vmatprep.subr.mxu0 0.0
        %1920 = vmatpush1.msra.mxu0 0.0
        %1921 = vmatprep.subr.mxu0 0.0
        %1922 = vmatpush1.msra.mxu0 0.0
        %1923 = vmatprep.subr.mxu0 0.0
        %1924 = vmatpush1.msra.mxu0 0.0
        %1925 = vmatprep.subr.mxu0 0.0
        %1926 = vmatpush1.msra.mxu0 0.0
        %1927 = vmatprep.subr.mxu0 0.0
        %1928 = vmatpush1.msra.mxu0 0.0
        %1929 = vmatprep.subr.mxu0 0.0
        %1930 = vmatpush1.msra.mxu0 0.0
        %1931 = vmatprep.subr.mxu0 0.0
        %1932 = vmatpush1.msra.mxu0 0.0
        %1933 = vmatprep.subr.mxu0 0.0
        %1934 = vmatpush1.msra.mxu0 0.0
        %1935 = vmatprep.subr.mxu0 0.0
        %1936 = vmatpush1.msra.mxu0 0.0
        %1937 = vmatprep.subr.mxu0 0.0
        %1938 = vmatpush1.msra.mxu0 0.0
        %1939 = vmatprep.subr.mxu0 0.0
        %1940 = vmatpush1.msra.mxu0 0.0
        %1941 = vmatprep.subr.mxu0 0.0
        %1942 = vmatpush1.msra.mxu0 0.0
        %1943 = vmatprep.subr.mxu0 0.0
        %1944 = vmatpush1.msra.mxu0 0.0
        %1945 = vmatprep.subr.mxu0 0.0
        %1946 = vmatpush1.msra.mxu0 0.0
        %1947 = vmatprep.subr.mxu0 %v1917
        %1948 = vmatpush1.msra.mxu0 %v1914
        %1949 = vmatprep.subr.mxu0 %v1904
        %1950 = vmatpush1.msra.mxu0 %v1903
        %1951 = vmatprep.subr.mxu0 0.0
        %1952 = vmatpush2.msra.mxu0 0.0
        %1953 = vmatprep.subr.mxu0 0.0
        %1954 = vmatpush2.msra.mxu0 0.0
        %1955 = vmatprep.subr.mxu0 0.0
        %1956 = vmatpush2.msra.mxu0 0.0
        %1957 = vmatprep.subr.mxu0 0.0
        %1958 = vmatpush2.msra.mxu0 0.0
        %1959 = vmatprep.subr.mxu0 0.0
        %1960 = vmatpush2.msra.mxu0 0.0
        %1961 = vmatprep.subr.mxu0 0.0
        %1962 = vmatpush2.msra.mxu0 0.0
        %1963 = vmatprep.subr.mxu0 0.0
        %1964 = vmatpush2.msra.mxu0 0.0
        %1965 = vmatprep.subr.mxu0 0.0
        %1966 = vmatpush2.msra.mxu0 0.0
        %1967 = vmatprep.subr.mxu0 0.0
        %1968 = vmatpush2.msra.mxu0 0.0
        %1969 = vmatprep.subr.mxu0 0.0
        %1970 = vmatpush2.msra.mxu0 0.0
        %1971 = vmatprep.subr.mxu0 0.0
        %1972 = vmatpush2.msra.mxu0 0.0
        %1973 = vmatprep.subr.mxu0 0.0
        %1974 = vmatpush2.msra.mxu0 0.0
        %1975 = vmatprep.subr.mxu0 0.0
        %1976 = vmatpush2.msra.mxu0 0.0
        %1977 = vmatprep.subr.mxu0 0.0
        %1978 = vmatpush2.msra.mxu0 0.0
        %1979 = vmatprep.subr.mxu0 0.0
        %1980 = vmatpush2.msra.mxu0 0.0
        %1981 = vmatprep.subr.mxu0 0.0
        %1982 = vmatpush2.msra.mxu0 0.0
        %1983 = vmatprep.mubr.f32.mxu0 0.0
        %1984 = vmatmul.mubr.f32.gmra.mxu0 %v1910
        %v1985 = vpop.f32.mrf.mxu0
        %v1986 = vadd.f32 0.0, %v1985
        %v1987 = vpop.f32.mrf.mxu0
        %v1988 = vadd.f32 0.0, %v1987
        %1989 = vdwg.mxu0
        %v1990 = vld [vmem:[%s8] sm:$0xff]
        %v1991 = vld [vmem:[%s8 + $0x8] sm:$0xff]
        %v1992 = vld [vmem:[%s8 + $0x10] sm:$0xff]
        %v1993 = vld [vmem:[%s8 + $0x18] sm:$0xff]
        %v1994 = vld [vmem:[%s8 + $0x20] sm:$0xff]
        %v1995 = vld [vmem:[%s8 + $0x28] sm:$0xff]
        %v1996 = vld [vmem:[%s8 + $0x30] sm:$0xff]
        %v1997 = vld [vmem:[%s8 + $0x38] sm:$0xff]
        %v1998 = vld [vmem:[%s8 + $0x40] sm:$0xff]
        %v1999 = vld [vmem:[%s8 + $0x48] sm:$0xff]
        %v2000 = vld [vmem:[%s8 + $0x50] sm:$0xff]
        %v2001 = vld [vmem:[%s8 + $0x58] sm:$0xff]
        %v2002 = vld [vmem:[%s8 + $0x60] sm:$0xff]
        %v2003 = vld [vmem:[%s8 + $0x68] sm:$0xff]
        %v2004 = vld [vmem:[%s8 + $0x70] sm:$0xff]
        %v2005 = vld [vmem:[%s8 + $0x78] sm:$0xff]
        %v2006 = vld [vmem:[%s8 + $0x80] sm:$0xff]
        %v2007 = vld [vmem:[%s8 + $0x88] sm:$0xff]
        %v2008 = vld [vmem:[%s8 + $0x90] sm:$0xff]
        %v2009 = vld [vmem:[%s8 + $0x98] sm:$0xff]
        %v2011 = vsel %vm525, %v1988, 0
        %2013 = vmatprep.subr.mxu0 0.0
        %2014 = vmatpush1.msra.mxu0 %v2005
        %2015 = vmatprep.subr.mxu0 0.0
        %2016 = vmatpush1.msra.mxu0 %v2004
        %2017 = vmatprep.subr.mxu0 0.0
        %2018 = vmatpush1.msra.mxu0 %v2003
        %2019 = vmatprep.subr.mxu0 0.0
        %2020 = vmatpush1.msra.mxu0 %v2002
        %2021 = vmatprep.subr.mxu0 0.0
        %2022 = vmatpush1.msra.mxu0 %v2001
        %2023 = vmatprep.subr.mxu0 0.0
        %2024 = vmatpush1.msra.mxu0 %v2000
        %2025 = vmatprep.subr.mxu0 0.0
        %2026 = vmatpush1.msra.mxu0 %v1999
        %2027 = vmatprep.subr.mxu0 0.0
        %2028 = vmatpush1.msra.mxu0 %v1998
        %2029 = vmatprep.subr.mxu0 0.0
        %2030 = vmatpush1.msra.mxu0 %v1997
        %2031 = vmatprep.subr.mxu0 0.0
        %2032 = vmatpush1.msra.mxu0 %v1996
        %2033 = vmatprep.subr.mxu0 0.0
        %2034 = vmatpush1.msra.mxu0 %v1995
        %2035 = vmatprep.subr.mxu0 0.0
        %2036 = vmatpush1.msra.mxu0 %v1994
        %2037 = vmatprep.subr.mxu0 0.0
        %2038 = vmatpush1.msra.mxu0 %v1993
        %2039 = vmatprep.subr.mxu0 0.0
        %2040 = vmatpush1.msra.mxu0 %v1992
        %2041 = vmatprep.subr.mxu0 0.0
        %2042 = vmatpush1.msra.mxu0 %v1991
        %2043 = vmatprep.subr.mxu0 0.0
        %2044 = vmatpush1.msra.mxu0 %v1990
        %2045 = vmatprep.subr.mxu0 0.0
        %2046 = vmatpush2.msra.mxu0 0.0
        %2047 = vmatprep.subr.mxu0 0.0
        %2048 = vmatpush2.msra.mxu0 0.0
        %2049 = vmatprep.subr.mxu0 0.0
        %2050 = vmatpush2.msra.mxu0 0.0
        %2051 = vmatprep.subr.mxu0 0.0
        %2052 = vmatpush2.msra.mxu0 0.0
        %2053 = vmatprep.subr.mxu0 0.0
        %2054 = vmatpush2.msra.mxu0 0.0
        %2055 = vmatprep.subr.mxu0 0.0
        %2056 = vmatpush2.msra.mxu0 0.0
        %2057 = vmatprep.subr.mxu0 0.0
        %2058 = vmatpush2.msra.mxu0 0.0
        %2059 = vmatprep.subr.mxu0 0.0
        %2060 = vmatpush2.msra.mxu0 0.0
        %2061 = vmatprep.subr.mxu0 0.0
        %2062 = vmatpush2.msra.mxu0 0.0
        %2063 = vmatprep.subr.mxu0 0.0
        %2064 = vmatpush2.msra.mxu0 0.0
        %2065 = vmatprep.subr.mxu0 0.0
        %2066 = vmatpush2.msra.mxu0 0.0
        %2067 = vmatprep.subr.mxu0 0.0
        %2068 = vmatpush2.msra.mxu0 0.0
        %2069 = vmatprep.subr.mxu0 0.0
        %2070 = vmatpush2.msra.mxu0 %v2009
        %2071 = vmatprep.subr.mxu0 0.0
        %2072 = vmatpush2.msra.mxu0 %v2008
        %2073 = vmatprep.subr.mxu0 0.0
        %2074 = vmatpush2.msra.mxu0 %v2007
        %2075 = vmatprep.subr.mxu0 0.0
        %2076 = vmatpush2.msra.mxu0 %v2006
        %2077 = vmatprep.mubr.f32.mxu0 %v2011
        %2078 = vmatmul.mubr.f32.gmra.mxu0 %v1986
        %v2079 = vpop.f32.mrf.mxu0
        %v2080 = vadd.f32 0.0, %v2079
        %v2081 = vpop.f32.mrf.mxu0
        %2082 = vdwg.mxu0
        %v2083 = vtanh.pop %v2080
        %v2084 = vld [vmem:[%s9] sm:$0xff]
        %v2085 = vld [vmem:[%s9 + $0x8] sm:$0xff]
        %v2086 = vld [vmem:[%s9 + $0x10] sm:$0xff]
        %v2087 = vld [vmem:[%s9 + $0x18] sm:$0xff]
        %v2088 = vld [vmem:[%s9 + $0x20] sm:$0xff]
        %v2089 = vld [vmem:[%s9 + $0x28] sm:$0xff]
        %v2090 = vld [vmem:[%s9 + $0x30] sm:$0xff]
        %v2091 = vld [vmem:[%s9 + $0x38] sm:$0xff]
        %v2092 = vld [vmem:[%s9 + $0x40] sm:$0xff]
        %v2093 = vld [vmem:[%s9 + $0x48] sm:$0xff]
        %s2094 = scalar_lea.vmem %s9, 80
        %v2095 = vld [vmem:[%s2094] sm:$0xff]
        %v2096 = vld [vmem:[%s2094 + $0x8] sm:$0xff]
        %v2097 = vld [vmem:[%s2094 + $0x10] sm:$0xff]
        %v2098 = vld [vmem:[%s2094 + $0x18] sm:$0xff]
        %v2099 = vld [vmem:[%s2094 + $0x20] sm:$0xff]
        %v2100 = vld [vmem:[%s2094 + $0x28] sm:$0xff]
        %v2101 = vld [vmem:[%s2094 + $0x30] sm:$0xff]
        %v2102 = vld [vmem:[%s2094 + $0x38] sm:$0xff]
        %v2103 = vld [vmem:[%s2094 + $0x40] sm:$0xff]
        %v2104 = vld [vmem:[%s2094 + $0x48] sm:$0xff]
        %v2106 = vrot.slane %v2083, 1
        %vm2107 = vcmask 654336
        %v2108 = vsel %vm2107, %v2106, 0
        %2110 = vmatprep.subr.mxu0 0.0
        %2111 = vmatpush1.msra.mxu0 0.0
        %2112 = vmatprep.subr.mxu0 0.0
        %2113 = vmatpush1.msra.mxu0 0.0
        %2114 = vmatprep.subr.mxu0 0.0
        %2115 = vmatpush1.msra.mxu0 0.0
        %2116 = vmatprep.subr.mxu0 0.0
        %2117 = vmatpush1.msra.mxu0 0.0
        %2118 = vmatprep.subr.mxu0 0.0
        %2119 = vmatpush1.msra.mxu0 0.0
        %2120 = vmatprep.subr.mxu0 0.0
        %2121 = vmatpush1.msra.mxu0 0.0
        %2122 = vmatprep.subr.mxu0 0.0
        %2123 = vmatpush1.msra.mxu0 %v2104
        %2124 = vmatprep.subr.mxu0 0.0
        %2125 = vmatpush1.msra.mxu0 %v2103
        %2126 = vmatprep.subr.mxu0 0.0
        %2127 = vmatpush1.msra.mxu0 %v2102
        %2128 = vmatprep.subr.mxu0 0.0
        %2129 = vmatpush1.msra.mxu0 %v2101
        %2130 = vmatprep.subr.mxu0 0.0
        %2131 = vmatpush1.msra.mxu0 %v2100
        %2132 = vmatprep.subr.mxu0 0.0
        %2133 = vmatpush1.msra.mxu0 %v2099
        %2134 = vmatprep.subr.mxu0 0.0
        %2135 = vmatpush1.msra.mxu0 %v2098
        %2136 = vmatprep.subr.mxu0 0.0
        %2137 = vmatpush1.msra.mxu0 %v2097
        %2138 = vmatprep.subr.mxu0 0.0
        %2139 = vmatpush1.msra.mxu0 %v2096
        %2140 = vmatprep.subr.mxu0 0.0
        %2141 = vmatpush1.msra.mxu0 %v2095
        %2142 = vmatprep.subr.mxu0 0.0
        %2143 = vmatpush2.msra.mxu0 0.0
        %2144 = vmatprep.subr.mxu0 0.0
        %2145 = vmatpush2.msra.mxu0 0.0
        %2146 = vmatprep.subr.mxu0 0.0
        %2147 = vmatpush2.msra.mxu0 0.0
        %2148 = vmatprep.subr.mxu0 0.0
        %2149 = vmatpush2.msra.mxu0 0.0
        %2150 = vmatprep.subr.mxu0 0.0
        %2151 = vmatpush2.msra.mxu0 0.0
        %2152 = vmatprep.subr.mxu0 0.0
        %2153 = vmatpush2.msra.mxu0 0.0
        %2154 = vmatprep.subr.mxu0 0.0
        %2155 = vmatpush2.msra.mxu0 0.0
        %2156 = vmatprep.subr.mxu0 0.0
        %2157 = vmatpush2.msra.mxu0 0.0
        %2158 = vmatprep.subr.mxu0 0.0
        %2159 = vmatpush2.msra.mxu0 0.0
        %2160 = vmatprep.subr.mxu0 0.0
        %2161 = vmatpush2.msra.mxu0 0.0
        %2162 = vmatprep.subr.mxu0 0.0
        %2163 = vmatpush2.msra.mxu0 0.0
        %2164 = vmatprep.subr.mxu0 0.0
        %2165 = vmatpush2.msra.mxu0 0.0
        %2166 = vmatprep.subr.mxu0 0.0
        %2167 = vmatpush2.msra.mxu0 0.0
        %2168 = vmatprep.subr.mxu0 0.0
        %2169 = vmatpush2.msra.mxu0 0.0
        %2170 = vmatprep.subr.mxu0 0.0
        %2171 = vmatpush2.msra.mxu0 0.0
        %2172 = vmatprep.subr.mxu0 0.0
        %2173 = vmatpush2.msra.mxu0 0.0
        %2174 = vmatprep.mubr.f32.mxu0 0.0
        %2175 = vmatmul.mubr.f32.gmra.mxu0 %v2108
        %v2176 = vpop.f32.mrf.mxu0
        %v2177 = vadd.f32 0.0, %v2176
        %v2178 = vpop.f32.mrf.mxu0
        %2179 = vdwg.mxu0
        %v2180 = vsel %vm2107, %v2083, 0
        %2182 = vmatprep.subr.mxu0 0.0
        %2183 = vmatpush1.msra.mxu0 0.0
        %2184 = vmatprep.subr.mxu0 0.0
        %2185 = vmatpush1.msra.mxu0 0.0
        %2186 = vmatprep.subr.mxu0 0.0
        %2187 = vmatpush1.msra.mxu0 0.0
        %2188 = vmatprep.subr.mxu0 0.0
        %2189 = vmatpush1.msra.mxu0 0.0
        %2190 = vmatprep.subr.mxu0 0.0
        %2191 = vmatpush1.msra.mxu0 0.0
        %2192 = vmatprep.subr.mxu0 0.0
        %2193 = vmatpush1.msra.mxu0 0.0
        %2194 = vmatprep.subr.mxu0 0.0
        %2195 = vmatpush1.msra.mxu0 %v2093
        %2196 = vmatprep.subr.mxu0 0.0
        %2197 = vmatpush1.msra.mxu0 %v2092
        %2198 = vmatprep.subr.mxu0 0.0
        %2199 = vmatpush1.msra.mxu0 %v2091
        %2200 = vmatprep.subr.mxu0 0.0
        %2201 = vmatpush1.msra.mxu0 %v2090
        %2202 = vmatprep.subr.mxu0 0.0
        %2203 = vmatpush1.msra.mxu0 %v2089
        %2204 = vmatprep.subr.mxu0 0.0
        %2205 = vmatpush1.msra.mxu0 %v2088
        %2206 = vmatprep.subr.mxu0 0.0
        %2207 = vmatpush1.msra.mxu0 %v2087
        %2208 = vmatprep.subr.mxu0 0.0
        %2209 = vmatpush1.msra.mxu0 %v2086
        %2210 = vmatprep.subr.mxu0 0.0
        %2211 = vmatpush1.msra.mxu0 %v2085
        %2212 = vmatprep.subr.mxu0 0.0
        %2213 = vmatpush1.msra.mxu0 %v2084
        %2214 = vmatprep.subr.mxu0 0.0
        %2215 = vmatpush2.msra.mxu0 0.0
        %2216 = vmatprep.subr.mxu0 0.0
        %2217 = vmatpush2.msra.mxu0 0.0
        %2218 = vmatprep.subr.mxu0 0.0
        %2219 = vmatpush2.msra.mxu0 0.0
        %2220 = vmatprep.subr.mxu0 0.0
        %2221 = vmatpush2.msra.mxu0 0.0
        %2222 = vmatprep.subr.mxu0 0.0
        %2223 = vmatpush2.msra.mxu0 0.0
        %2224 = vmatprep.subr.mxu0 0.0
        %2225 = vmatpush2.msra.mxu0 0.0
        %2226 = vmatprep.subr.mxu0 0.0
        %2227 = vmatpush2.msra.mxu0 0.0
        %2228 = vmatprep.subr.mxu0 0.0
        %2229 = vmatpush2.msra.mxu0 0.0
        %2230 = vmatprep.subr.mxu0 0.0
        %2231 = vmatpush2.msra.mxu0 0.0
        %2232 = vmatprep.subr.mxu0 0.0
        %2233 = vmatpush2.msra.mxu0 0.0
        %2234 = vmatprep.subr.mxu0 0.0
        %2235 = vmatpush2.msra.mxu0 0.0
        %2236 = vmatprep.subr.mxu0 0.0
        %2237 = vmatpush2.msra.mxu0 0.0
        %2238 = vmatprep.subr.mxu0 0.0
        %2239 = vmatpush2.msra.mxu0 0.0
        %2240 = vmatprep.subr.mxu0 0.0
        %2241 = vmatpush2.msra.mxu0 0.0
        %2242 = vmatprep.subr.mxu0 0.0
        %2243 = vmatpush2.msra.mxu0 0.0
        %2244 = vmatprep.subr.mxu0 0.0
        %2245 = vmatpush2.msra.mxu0 0.0
        %2246 = vmatprep.mubr.f32.mxu0 0.0
        %2247 = vmatmul.mubr.f32.gmra.mxu0 %v2180
        %v2248 = vpop.f32.mrf.mxu0
        %v2249 = vadd.f32 %v2177, %v2248
        %v2250 = vpop.f32.mrf.mxu0
        %2251 = vdwg.mxu0
        %s2252 = scalar_lea.vmem %s9, 160
        %v2253 = vld [vmem:[%s2252] sm:$0xff]
        %v2254 = vld [vmem:[%s2252 + $0x8] sm:$0xff]
        %v2255 = vld [vmem:[%s2252 + $0x10] sm:$0xff]
        %v2256 = vld [vmem:[%s2252 + $0x18] sm:$0xff]
        %v2257 = vld [vmem:[%s2252 + $0x20] sm:$0xff]
        %v2258 = vld [vmem:[%s2252 + $0x28] sm:$0xff]
        %v2259 = vld [vmem:[%s2252 + $0x30] sm:$0xff]
        %v2260 = vld [vmem:[%s2252 + $0x38] sm:$0xff]
        %v2261 = vld [vmem:[%s2252 + $0x40] sm:$0xff]
        %v2262 = vld [vmem:[%s2252 + $0x48] sm:$0xff]
        %v2263 = vrot.slane %v2083, 2
        %v2264 = vsel %vm2107, %v2263, 0
        %2266 = vmatprep.subr.mxu0 0.0
        %2267 = vmatpush1.msra.mxu0 0.0
        %2268 = vmatprep.subr.mxu0 0.0
        %2269 = vmatpush1.msra.mxu0 0.0
        %2270 = vmatprep.subr.mxu0 0.0
        %2271 = vmatpush1.msra.mxu0 0.0
        %2272 = vmatprep.subr.mxu0 0.0
        %2273 = vmatpush1.msra.mxu0 0.0
        %2274 = vmatprep.subr.mxu0 0.0
        %2275 = vmatpush1.msra.mxu0 0.0
        %2276 = vmatprep.subr.mxu0 0.0
        %2277 = vmatpush1.msra.mxu0 0.0
        %2278 = vmatprep.subr.mxu0 0.0
        %2279 = vmatpush1.msra.mxu0 %v2262
        %2280 = vmatprep.subr.mxu0 0.0
        %2281 = vmatpush1.msra.mxu0 %v2261
        %2282 = vmatprep.subr.mxu0 0.0
        %2283 = vmatpush1.msra.mxu0 %v2260
        %2284 = vmatprep.subr.mxu0 0.0
        %2285 = vmatpush1.msra.mxu0 %v2259
        %2286 = vmatprep.subr.mxu0 0.0
        %2287 = vmatpush1.msra.mxu0 %v2258
        %2288 = vmatprep.subr.mxu0 0.0
        %2289 = vmatpush1.msra.mxu0 %v2257
        %2290 = vmatprep.subr.mxu0 0.0
        %2291 = vmatpush1.msra.mxu0 %v2256
        %2292 = vmatprep.subr.mxu0 0.0
        %2293 = vmatpush1.msra.mxu0 %v2255
        %2294 = vmatprep.subr.mxu0 0.0
        %2295 = vmatpush1.msra.mxu0 %v2254
        %2296 = vmatprep.subr.mxu0 0.0
        %2297 = vmatpush1.msra.mxu0 %v2253
        %2298 = vmatprep.subr.mxu0 0.0
        %2299 = vmatpush2.msra.mxu0 0.0
        %2300 = vmatprep.subr.mxu0 0.0
        %2301 = vmatpush2.msra.mxu0 0.0
        %2302 = vmatprep.subr.mxu0 0.0
        %2303 = vmatpush2.msra.mxu0 0.0
        %2304 = vmatprep.subr.mxu0 0.0
        %2305 = vmatpush2.msra.mxu0 0.0
        %2306 = vmatprep.subr.mxu0 0.0
        %2307 = vmatpush2.msra.mxu0 0.0
        %2308 = vmatprep.subr.mxu0 0.0
        %2309 = vmatpush2.msra.mxu0 0.0
        %2310 = vmatprep.subr.mxu0 0.0
        %2311 = vmatpush2.msra.mxu0 0.0
        %2312 = vmatprep.subr.mxu0 0.0
        %2313 = vmatpush2.msra.mxu0 0.0
        %2314 = vmatprep.subr.mxu0 0.0
        %2315 = vmatpush2.msra.mxu0 0.0
        %2316 = vmatprep.subr.mxu0 0.0
        %2317 = vmatpush2.msra.mxu0 0.0
        %2318 = vmatprep.subr.mxu0 0.0
        %2319 = vmatpush2.msra.mxu0 0.0
        %2320 = vmatprep.subr.mxu0 0.0
        %2321 = vmatpush2.msra.mxu0 0.0
        %2322 = vmatprep.subr.mxu0 0.0
        %2323 = vmatpush2.msra.mxu0 0.0
        %2324 = vmatprep.subr.mxu0 0.0
        %2325 = vmatpush2.msra.mxu0 0.0
        %2326 = vmatprep.subr.mxu0 0.0
        %2327 = vmatpush2.msra.mxu0 0.0
        %2328 = vmatprep.subr.mxu0 0.0
        %2329 = vmatpush2.msra.mxu0 0.0
        %2330 = vmatprep.mubr.f32.mxu0 0.0
        %2331 = vmatmul.mubr.f32.gmra.mxu0 %v2264
        %v2332 = vpop.f32.mrf.mxu0
        %v2333 = vadd.f32 0.0, %v2332
        %v2334 = vpop.f32.mrf.mxu0
        %2335 = vdwg.mxu0
        %v2336 = vadd.f32 %v2249, %v2333
        %s2337 = scalar_lea.vmem %s9, 240
        %v2338 = vld [vmem:[%s2337] sm:$0xff]
        %v2339 = vld [vmem:[%s2337 + $0x8] sm:$0xff]
        %v2340 = vld [vmem:[%s2337 + $0x10] sm:$0xff]
        %v2341 = vld [vmem:[%s2337 + $0x18] sm:$0xff]
        %v2342 = vld [vmem:[%s2337 + $0x20] sm:$0xff]
        %v2343 = vld [vmem:[%s2337 + $0x28] sm:$0xff]
        %v2344 = vld [vmem:[%s2337 + $0x30] sm:$0xff]
        %v2345 = vld [vmem:[%s2337 + $0x38] sm:$0xff]
        %v2346 = vld [vmem:[%s2337 + $0x40] sm:$0xff]
        %v2347 = vld [vmem:[%s2337 + $0x48] sm:$0xff]
        %v2348 = vrot.slane %v2083, 3
        %v2349 = vsel %vm2107, %v2348, 0
        %2351 = vmatprep.subr.mxu0 0.0
        %2352 = vmatpush1.msra.mxu0 0.0
        %2353 = vmatprep.subr.mxu0 0.0
        %2354 = vmatpush1.msra.mxu0 0.0
        %2355 = vmatprep.subr.mxu0 0.0
        %2356 = vmatpush1.msra.mxu0 0.0
        %2357 = vmatprep.subr.mxu0 0.0
        %2358 = vmatpush1.msra.mxu0 0.0
        %2359 = vmatprep.subr.mxu0 0.0
        %2360 = vmatpush1.msra.mxu0 0.0
        %2361 = vmatprep.subr.mxu0 0.0
        %2362 = vmatpush1.msra.mxu0 0.0
        %2363 = vmatprep.subr.mxu0 0.0
        %2364 = vmatpush1.msra.mxu0 %v2347
        %2365 = vmatprep.subr.mxu0 0.0
        %2366 = vmatpush1.msra.mxu0 %v2346
        %2367 = vmatprep.subr.mxu0 0.0
        %2368 = vmatpush1.msra.mxu0 %v2345
        %2369 = vmatprep.subr.mxu0 0.0
        %2370 = vmatpush1.msra.mxu0 %v2344
        %2371 = vmatprep.subr.mxu0 0.0
        %2372 = vmatpush1.msra.mxu0 %v2343
        %2373 = vmatprep.subr.mxu0 0.0
        %2374 = vmatpush1.msra.mxu0 %v2342
        %2375 = vmatprep.subr.mxu0 0.0
        %2376 = vmatpush1.msra.mxu0 %v2341
        %2377 = vmatprep.subr.mxu0 0.0
        %2378 = vmatpush1.msra.mxu0 %v2340
        %2379 = vmatprep.subr.mxu0 0.0
        %2380 = vmatpush1.msra.mxu0 %v2339
        %2381 = vmatprep.subr.mxu0 0.0
        %2382 = vmatpush1.msra.mxu0 %v2338
        %2383 = vmatprep.subr.mxu0 0.0
        %2384 = vmatpush2.msra.mxu0 0.0
        %2385 = vmatprep.subr.mxu0 0.0
        %2386 = vmatpush2.msra.mxu0 0.0
        %2387 = vmatprep.subr.mxu0 0.0
        %2388 = vmatpush2.msra.mxu0 0.0
        %2389 = vmatprep.subr.mxu0 0.0
        %2390 = vmatpush2.msra.mxu0 0.0
        %2391 = vmatprep.subr.mxu0 0.0
        %2392 = vmatpush2.msra.mxu0 0.0
        %2393 = vmatprep.subr.mxu0 0.0
        %2394 = vmatpush2.msra.mxu0 0.0
        %2395 = vmatprep.subr.mxu0 0.0
        %2396 = vmatpush2.msra.mxu0 0.0
        %2397 = vmatprep.subr.mxu0 0.0
        %2398 = vmatpush2.msra.mxu0 0.0
        %2399 = vmatprep.subr.mxu0 0.0
        %2400 = vmatpush2.msra.mxu0 0.0
        %2401 = vmatprep.subr.mxu0 0.0
        %2402 = vmatpush2.msra.mxu0 0.0
        %2403 = vmatprep.subr.mxu0 0.0
        %2404 = vmatpush2.msra.mxu0 0.0
        %2405 = vmatprep.subr.mxu0 0.0
        %2406 = vmatpush2.msra.mxu0 0.0
        %2407 = vmatprep.subr.mxu0 0.0
        %2408 = vmatpush2.msra.mxu0 0.0
        %2409 = vmatprep.subr.mxu0 0.0
        %2410 = vmatpush2.msra.mxu0 0.0
        %2411 = vmatprep.subr.mxu0 0.0
        %2412 = vmatpush2.msra.mxu0 0.0
        %2413 = vmatprep.subr.mxu0 0.0
        %2414 = vmatpush2.msra.mxu0 0.0
        %2415 = vmatprep.mubr.f32.mxu0 0.0
        %2416 = vmatmul.mubr.f32.gmra.mxu0 %v2349
        %v2417 = vpop.f32.mrf.mxu0
        %v2418 = vadd.f32 0.0, %v2417
        %v2419 = vpop.f32.mrf.mxu0
        %2420 = vdwg.mxu0
        %v2421 = vadd.f32 %v2336, %v2418
        %s2422 = scalar_lea.vmem %s9, 320
        %v2423 = vld [vmem:[%s2422] sm:$0xff]
        %v2424 = vld [vmem:[%s2422 + $0x8] sm:$0xff]
        %v2425 = vld [vmem:[%s2422 + $0x10] sm:$0xff]
        %v2426 = vld [vmem:[%s2422 + $0x18] sm:$0xff]
        %v2427 = vld [vmem:[%s2422 + $0x20] sm:$0xff]
        %v2428 = vld [vmem:[%s2422 + $0x28] sm:$0xff]
        %v2429 = vld [vmem:[%s2422 + $0x30] sm:$0xff]
        %v2430 = vld [vmem:[%s2422 + $0x38] sm:$0xff]
        %v2431 = vld [vmem:[%s2422 + $0x40] sm:$0xff]
        %v2432 = vld [vmem:[%s2422 + $0x48] sm:$0xff]
        %v2433 = vrot.slane %v2083, 4
        %v2434 = vsel %vm2107, %v2433, 0
        %2436 = vmatprep.subr.mxu0 0.0
        %2437 = vmatpush1.msra.mxu0 0.0
        %2438 = vmatprep.subr.mxu0 0.0
        %2439 = vmatpush1.msra.mxu0 0.0
        %2440 = vmatprep.subr.mxu0 0.0
        %2441 = vmatpush1.msra.mxu0 0.0
        %2442 = vmatprep.subr.mxu0 0.0
        %2443 = vmatpush1.msra.mxu0 0.0
        %2444 = vmatprep.subr.mxu0 0.0
        %2445 = vmatpush1.msra.mxu0 0.0
        %2446 = vmatprep.subr.mxu0 0.0
        %2447 = vmatpush1.msra.mxu0 0.0
        %2448 = vmatprep.subr.mxu0 0.0
        %2449 = vmatpush1.msra.mxu0 %v2432
        %2450 = vmatprep.subr.mxu0 0.0
        %2451 = vmatpush1.msra.mxu0 %v2431
        %2452 = vmatprep.subr.mxu0 0.0
        %2453 = vmatpush1.msra.mxu0 %v2430
        %2454 = vmatprep.subr.mxu0 0.0
        %2455 = vmatpush1.msra.mxu0 %v2429
        %2456 = vmatprep.subr.mxu0 0.0
        %2457 = vmatpush1.msra.mxu0 %v2428
        %2458 = vmatprep.subr.mxu0 0.0
        %2459 = vmatpush1.msra.mxu0 %v2427
        %2460 = vmatprep.subr.mxu0 0.0
        %2461 = vmatpush1.msra.mxu0 %v2426
        %2462 = vmatprep.subr.mxu0 0.0
        %2463 = vmatpush1.msra.mxu0 %v2425
        %2464 = vmatprep.subr.mxu0 0.0
        %2465 = vmatpush1.msra.mxu0 %v2424
        %2466 = vmatprep.subr.mxu0 0.0
        %2467 = vmatpush1.msra.mxu0 %v2423
        %2468 = vmatprep.subr.mxu0 0.0
        %2469 = vmatpush2.msra.mxu0 0.0
        %2470 = vmatprep.subr.mxu0 0.0
        %2471 = vmatpush2.msra.mxu0 0.0
        %2472 = vmatprep.subr.mxu0 0.0
        %2473 = vmatpush2.msra.mxu0 0.0
        %2474 = vmatprep.subr.mxu0 0.0
        %2475 = vmatpush2.msra.mxu0 0.0
        %2476 = vmatprep.subr.mxu0 0.0
        %2477 = vmatpush2.msra.mxu0 0.0
        %2478 = vmatprep.subr.mxu0 0.0
        %2479 = vmatpush2.msra.mxu0 0.0
        %2480 = vmatprep.subr.mxu0 0.0
        %2481 = vmatpush2.msra.mxu0 0.0
        %2482 = vmatprep.subr.mxu0 0.0
        %2483 = vmatpush2.msra.mxu0 0.0
        %2484 = vmatprep.subr.mxu0 0.0
        %2485 = vmatpush2.msra.mxu0 0.0
        %2486 = vmatprep.subr.mxu0 0.0
        %2487 = vmatpush2.msra.mxu0 0.0
        %2488 = vmatprep.subr.mxu0 0.0
        %2489 = vmatpush2.msra.mxu0 0.0
        %2490 = vmatprep.subr.mxu0 0.0
        %2491 = vmatpush2.msra.mxu0 0.0
        %2492 = vmatprep.subr.mxu0 0.0
        %2493 = vmatpush2.msra.mxu0 0.0
        %2494 = vmatprep.subr.mxu0 0.0
        %2495 = vmatpush2.msra.mxu0 0.0
        %2496 = vmatprep.subr.mxu0 0.0
        %2497 = vmatpush2.msra.mxu0 0.0
        %2498 = vmatprep.subr.mxu0 0.0
        %2499 = vmatpush2.msra.mxu0 0.0
        %2500 = vmatprep.mubr.f32.mxu0 0.0
        %2501 = vmatmul.mubr.f32.gmra.mxu0 %v2434
        %v2502 = vpop.f32.mrf.mxu0
        %v2503 = vadd.f32 0.0, %v2502
        %v2504 = vpop.f32.mrf.mxu0
        %2505 = vdwg.mxu0
        %v2506 = vadd.f32 %v2421, %v2503
        %v2507 = vld [vmem:[%s10] sm:$0x1]
        %v2508 = vadd.f32 %v2506, %v2507
        %v2509 = vtanh.pop %v2508
        %v2510 = vld [vmem:[%s11] sm:$0xff]
        %v2511 = vld [vmem:[%s11 + $0x8] sm:$0xff]
        %v2512 = vld [vmem:[%s11 + $0x10] sm:$0xff]
        %v2513 = vld [vmem:[%s11 + $0x18] sm:$0xff]
        %v2514 = vld [vmem:[%s11 + $0x20] sm:$0xff]
        %v2515 = vld [vmem:[%s11 + $0x28] sm:$0xff]
        %v2516 = vld [vmem:[%s11 + $0x30] sm:$0xff]
        %v2517 = vld [vmem:[%s11 + $0x38] sm:$0xff]
        %v2518 = vld [vmem:[%s11 + $0x40] sm:$0xff]
        %v2519 = vld [vmem:[%s11 + $0x48] sm:$0xff]
        %v2520 = vld [vmem:[%s11 + $0x50] sm:$0xff]
        %v2521 = vld [vmem:[%s11 + $0x58] sm:$0xff]
        %v2522 = vld [vmem:[%s11 + $0x60] sm:$0xff]
        %v2523 = vld [vmem:[%s11 + $0x68] sm:$0xff]
        %v2524 = vld [vmem:[%s11 + $0x70] sm:$0xff]
        %v2525 = vld [vmem:[%s12] sm:$0x1]
        %vm2526 = vcmask 982016
        %v2528 = vsel %vm2526, %v2509, 0
        %2530 = vmatprep.subr.mxu0 0.0
        %2531 = vmatpush1.msra.mxu0 0.0
        %2532 = vmatprep.subr.mxu0 0.0
        %2533 = vmatpush1.msra.mxu0 %v2524
        %2534 = vmatprep.subr.mxu0 0.0
        %2535 = vmatpush1.msra.mxu0 %v2523
        %2536 = vmatprep.subr.mxu0 0.0
        %2537 = vmatpush1.msra.mxu0 %v2522
        %2538 = vmatprep.subr.mxu0 0.0
        %2539 = vmatpush1.msra.mxu0 %v2521
        %2540 = vmatprep.subr.mxu0 0.0
        %2541 = vmatpush1.msra.mxu0 %v2520
        %2542 = vmatprep.subr.mxu0 0.0
        %2543 = vmatpush1.msra.mxu0 %v2519
        %2544 = vmatprep.subr.mxu0 0.0
        %2545 = vmatpush1.msra.mxu0 %v2518
        %2546 = vmatprep.subr.mxu0 0.0
        %2547 = vmatpush1.msra.mxu0 %v2517
        %2548 = vmatprep.subr.mxu0 0.0
        %2549 = vmatpush1.msra.mxu0 %v2516
        %2550 = vmatprep.subr.mxu0 0.0
        %2551 = vmatpush1.msra.mxu0 %v2515
        %2552 = vmatprep.subr.mxu0 0.0
        %2553 = vmatpush1.msra.mxu0 %v2514
        %2554 = vmatprep.subr.mxu0 0.0
        %2555 = vmatpush1.msra.mxu0 %v2513
        %2556 = vmatprep.subr.mxu0 0.0
        %2557 = vmatpush1.msra.mxu0 %v2512
        %2558 = vmatprep.subr.mxu0 0.0
        %2559 = vmatpush1.msra.mxu0 %v2511
        %2560 = vmatprep.subr.mxu0 0.0
        %2561 = vmatpush1.msra.mxu0 %v2510
        %2562 = vmatprep.subr.mxu0 0.0
        %2563 = vmatpush2.msra.mxu0 0.0
        %2564 = vmatprep.subr.mxu0 0.0
        %2565 = vmatpush2.msra.mxu0 0.0
        %2566 = vmatprep.subr.mxu0 0.0
        %2567 = vmatpush2.msra.mxu0 0.0
        %2568 = vmatprep.subr.mxu0 0.0
        %2569 = vmatpush2.msra.mxu0 0.0
        %2570 = vmatprep.subr.mxu0 0.0
        %2571 = vmatpush2.msra.mxu0 0.0
        %2572 = vmatprep.subr.mxu0 0.0
        %2573 = vmatpush2.msra.mxu0 0.0
        %2574 = vmatprep.subr.mxu0 0.0
        %2575 = vmatpush2.msra.mxu0 0.0
        %2576 = vmatprep.subr.mxu0 0.0
        %2577 = vmatpush2.msra.mxu0 0.0
        %2578 = vmatprep.subr.mxu0 0.0
        %2579 = vmatpush2.msra.mxu0 0.0
        %2580 = vmatprep.subr.mxu0 0.0
        %2581 = vmatpush2.msra.mxu0 0.0
        %2582 = vmatprep.subr.mxu0 0.0
        %2583 = vmatpush2.msra.mxu0 0.0
        %2584 = vmatprep.subr.mxu0 0.0
        %2585 = vmatpush2.msra.mxu0 0.0
        %2586 = vmatprep.subr.mxu0 0.0
        %2587 = vmatpush2.msra.mxu0 0.0
        %2588 = vmatprep.subr.mxu0 0.0
        %2589 = vmatpush2.msra.mxu0 0.0
        %2590 = vmatprep.subr.mxu0 0.0
        %2591 = vmatpush2.msra.mxu0 0.0
        %2592 = vmatprep.subr.mxu0 0.0
        %2593 = vmatpush2.msra.mxu0 0.0
        %2594 = vmatprep.mubr.f32.mxu0 0.0
        %2595 = vmatmul.mubr.f32.gmra.mxu0 %v2528
        %v2596 = vpop.f32.mrf.mxu0
        %v2597 = vadd.f32 %v2525, %v2596
        %v2598 = vpop.f32.mrf.mxu0
        %2599 = vdwg.mxu0
        %v2600 = vtanh.pop %v2597
        %v2601 = vld [vmem:[%s13] sm:$0xff]
        %v2602 = vld [vmem:[%s13 + $0x8] sm:$0xff]
        %v2603 = vld [vmem:[%s13 + $0x10] sm:$0xff]
        %v2604 = vld [vmem:[%s13 + $0x18] sm:$0xff]
        %v2605 = vld [vmem:[%s13 + $0x20] sm:$0xff]
        %v2606 = vld [vmem:[%s13 + $0x28] sm:$0xff]
        %v2607 = vld [vmem:[%s13 + $0x30] sm:$0xff]
        %v2608 = vld [vmem:[%s13 + $0x38] sm:$0xff]
        %v2609 = vld [vmem:[%s13 + $0x40] sm:$0xff]
        %v2610 = vld [vmem:[%s13 + $0x48] sm:$0xff]
        %v2611 = vld [vmem:[%s13 + $0x50] sm:$0xf]
        %v2612 = vld [vmem:[%s14] sm:$0x1]
        %v2614 = vsel %vm1361, %v2600, 0
        %v2617 = vsel %vm973, %v2611, 0
        %2619 = vmatprep.subr.mxu0 0.0
        %2620 = vmatpush1.msra.mxu0 0.0
        %2621 = vmatprep.subr.mxu0 0.0
        %2622 = vmatpush1.msra.mxu0 0.0
        %2623 = vmatprep.subr.mxu0 0.0
        %2624 = vmatpush1.msra.mxu0 0.0
        %2625 = vmatprep.subr.mxu0 0.0
        %2626 = vmatpush1.msra.mxu0 0.0
        %2627 = vmatprep.subr.mxu0 0.0
        %2628 = vmatpush1.msra.mxu0 0.0
        %2629 = vmatprep.subr.mxu0 0.0
        %2630 = vmatpush1.msra.mxu0 %v2617
        %2631 = vmatprep.subr.mxu0 0.0
        %2632 = vmatpush1.msra.mxu0 %v2610
        %2633 = vmatprep.subr.mxu0 0.0
        %2634 = vmatpush1.msra.mxu0 %v2609
        %2635 = vmatprep.subr.mxu0 0.0
        %2636 = vmatpush1.msra.mxu0 %v2608
        %2637 = vmatprep.subr.mxu0 0.0
        %2638 = vmatpush1.msra.mxu0 %v2607
        %2639 = vmatprep.subr.mxu0 0.0
        %2640 = vmatpush1.msra.mxu0 %v2606
        %2641 = vmatprep.subr.mxu0 0.0
        %2642 = vmatpush1.msra.mxu0 %v2605
        %2643 = vmatprep.subr.mxu0 0.0
        %2644 = vmatpush1.msra.mxu0 %v2604
        %2645 = vmatprep.subr.mxu0 0.0
        %2646 = vmatpush1.msra.mxu0 %v2603
        %2647 = vmatprep.subr.mxu0 0.0
        %2648 = vmatpush1.msra.mxu0 %v2602
        %2649 = vmatprep.subr.mxu0 0.0
        %2650 = vmatpush1.msra.mxu0 %v2601
        %2651 = vmatprep.subr.mxu0 0.0
        %2652 = vmatpush2.msra.mxu0 0.0
        %2653 = vmatprep.subr.mxu0 0.0
        %2654 = vmatpush2.msra.mxu0 0.0
        %2655 = vmatprep.subr.mxu0 0.0
        %2656 = vmatpush2.msra.mxu0 0.0
        %2657 = vmatprep.subr.mxu0 0.0
        %2658 = vmatpush2.msra.mxu0 0.0
        %2659 = vmatprep.subr.mxu0 0.0
        %2660 = vmatpush2.msra.mxu0 0.0
        %2661 = vmatprep.subr.mxu0 0.0
        %2662 = vmatpush2.msra.mxu0 0.0
        %2663 = vmatprep.subr.mxu0 0.0
        %2664 = vmatpush2.msra.mxu0 0.0
        %2665 = vmatprep.subr.mxu0 0.0
        %2666 = vmatpush2.msra.mxu0 0.0
        %2667 = vmatprep.subr.mxu0 0.0
        %2668 = vmatpush2.msra.mxu0 0.0
        %2669 = vmatprep.subr.mxu0 0.0
        %2670 = vmatpush2.msra.mxu0 0.0
        %2671 = vmatprep.subr.mxu0 0.0
        %2672 = vmatpush2.msra.mxu0 0.0
        %2673 = vmatprep.subr.mxu0 0.0
        %2674 = vmatpush2.msra.mxu0 0.0
        %2675 = vmatprep.subr.mxu0 0.0
        %2676 = vmatpush2.msra.mxu0 0.0
        %2677 = vmatprep.subr.mxu0 0.0
        %2678 = vmatpush2.msra.mxu0 0.0
        %2679 = vmatprep.subr.mxu0 0.0
        %2680 = vmatpush2.msra.mxu0 0.0
        %2681 = vmatprep.subr.mxu0 0.0
        %2682 = vmatpush2.msra.mxu0 0.0
        %2683 = vmatprep.mubr.f32.mxu0 0.0
        %2684 = vmatmul.mubr.f32.gmra.mxu0 %v2614
        %v2685 = vpop.f32.mrf.mxu0
        %v2686 = vadd.f32 %v2612, %v2685
        %v2687 = vpop.f32.mrf.mxu0
        %2688 = vdwg.mxu0
        %vm2689 = vcmask 73728
        %v2690 = vsel %vm2689, %v2686, -inf
        %2691 = vmax.xlane.f32.xlu0 %v2690
        %v2692 = vpop.xlane.xlu0 %2691
        %v2693 = vsub.f32 %v2686, %v2692
        %v2694 = vmul.f32 %v2693, 1.442695
        %v2695 = vpow.pop %v2694
        %v2696 = vsel %vm2689, %v2695, 0.0
        %2697 = vadd.xlane.f32.xlu0 %v2696
        %v2698 = vpop.xlane.xlu0 %2697
        %v2699 = vlog2.pop %v2698
        %v2700 = vmul.f32 %v2699, 0.6931472
        %v2701 = vsub.f32 %v2693, %v2700
        %2702 = vst.msk [vmem:[%s486] sm:$0x1] %vm2689, %v2701
        %s2703 = sand.u32 %s357, 1
        %s2704 = scalar_lea.sflag [#allocation3], %s2703
        %s2705 = sand.u32 %s357, 1
        %s2706 = scalar_lea.vmem [#allocation2], %s2705
        // Predicated region
        $region81: #{lenet_forward.1} parent=79 // pred_check
          %p2707 = pneg %p367
        $region82: #{lenet_forward.1} parent=79 // pred_check_branch
          %2709 = sbr.rel (%p2707) target = $region84
        $region83: #{lenet_forward.1} parent=79 // pred_region
          %s2711 = ssub.s32 16, 16
          %2712 = vsyncadd %s2704, %s2711
          %s2713 = smul.addr %s29, 16
          %s2714 = scalar_lea.hbm %s15, %s2713
          %s2716 = sshll.u32 %s2706, 4
          %s2717 = int_to_ptr.vmem [resolvable:$true] %s2716
          %2719 = dma.vmem_to_hbm [thread:$0]  %s2717, 16, %s2714, %s2704
        $region84: #{lenet_forward.1} parent=79 // pred_fallthru
          _
      $region80: #{lenet_forward.1} parent=5 // pred_fallthru
        _
      %p2720 = scmp.le.s32.totalorder 2, %s24
      // Predicated region
      $region85: #{lenet_forward.1} parent=5 // pred_check
        %p2721 = pneg %p2720
      $region86: #{lenet_forward.1} parent=5 // pred_check_branch
        %2723 = sbr.rel (%p2721) target = $region88
      $region87: #{lenet_forward.1} parent=5 // pred_region
        %s2724 = ssub.s32 %s24, 2
        // Predicated region
        $region89: #{lenet_forward.1} parent=87 // pred_check
          %p2725 = pneg %p373
        $region90: #{lenet_forward.1} parent=87 // pred_check_branch
          %2727 = sbr.rel (%p2725) target = $region92
        $region91: #{lenet_forward.1} parent=87 // pred_region
          %s2728 = sand.u32 %s358, 1
          %s2729 = scalar_lea.sflag [#allocation3], %s2728
          %s2730 = sand.u32 %s358, 1
          %s2731 = scalar_lea.vmem [#allocation2], %s2730
          %2732 = dma.done %s2729, 16
        $region92: #{lenet_forward.1} parent=87 // pred_fallthru
          _
      $region88: #{lenet_forward.1} parent=5 // pred_fallthru
        _
    $region6: #{lenet_forward.1} parent=1 // loop_footer
      %s28 = sadd.s32 1, %s24
    $region7: #{lenet_forward.1} parent=1 // loop_footer_branch
      %23 = sbr.rel target = $region3
    $region8: #{lenet_forward.1} parent=1 // loop_exit
      _
    %2733 = vsyncpa [#allocation3], 1
    %s2734 = scalar_lea.sflag [#allocation3], 1
    %2735 = vsyncpa %s2734, 1

</llo_original>
